<compile_context>
chip_gen: v7x
topology: tpu7x:2x2x1
jax: 0.10.0
libtpu: 0.0.40
codegen_flags: <defaults>
</compile_context>

<pallas_src>
import functools
import math

import jax
import jax.numpy as jnp
from jax.experimental import pallas as pl
from jax.experimental.pallas import tpu as pltpu


# ----------------------------- fused layer kernel -----------------------------

def _encoder_layer_kernel(*refs, num_heads, scale, eps, has_mask, emit_attn):
    """One full post-norm encoder layer for ONE batch element.

    Refs (batch dim squeezed by the BlockSpecs):
      x_ref (S, D); [mask_ref (S, S)];
      wqkv (D,3D) bqkv (1,3D); wo (D,D) bo (1,D); ln1g/ln1b (1,D);
      w1 (D,F) b1 (1,F); w2 (F,D) b2 (1,D); ln2g/ln2b (1,D);
      o_ref (S, D); [attn_ref (H, S, S)]  (last layer only)
    """
    it = iter(refs)
    x_ref = next(it)
    mask_ref = next(it) if has_mask else None
    (wqkv_ref, bqkv_ref, wo_ref, bo_ref, ln1g_ref, ln1b_ref,
     w1_ref, b1_ref, w2_ref, b2_ref, ln2g_ref, ln2b_ref) = (next(it) for _ in range(12))
    o_ref = next(it)
    attn_ref = next(it) if emit_attn else None

    x = x_ref[...]                                             # (S, D)
    S, D = x.shape
    Dh = D // num_heads

    # Fused QKV projection: one lane-dense (S, 3D) MXU matmul.
    qkv = jnp.dot(x, wqkv_ref[...],
                  preferred_element_type=jnp.float32) + bqkv_ref[...]

    # Multi-head attention: all heads in this single grid step.
    attn_acc = jnp.zeros((S, D), jnp.float32)
    for h in range(num_heads):                                 # static unroll (H small)
        qh = qkv[:, h * Dh:(h + 1) * Dh]
        kh = qkv[:, D + h * Dh:D + (h + 1) * Dh]
        vh = qkv[:, 2 * D + h * Dh:2 * D + (h + 1) * Dh]
        # Contract last axes directly: no k.T / XLU transpose.
        scores = jax.lax.dot_general(
            qh, kh, (((1,), (1,)), ((), ())),
            preferred_element_type=jnp.float32) * scale
        if has_mask:
            scores = scores + mask_ref[...]
        scores = scores - jnp.max(scores, axis=-1, keepdims=True)
        p = jnp.exp(scores)
        p = p * pl.reciprocal(jnp.sum(p, axis=-1, keepdims=True), approx=True)
        if emit_attn:
            attn_ref[h] = p
        ctx_h = jnp.dot(p, vh, preferred_element_type=jnp.float32)        # (S, Dh)
        # Fold the output projection per head (ctx @ Wo == sum_h ctx_h @ Wo_h).
        attn_acc = attn_acc + jnp.dot(ctx_h, wo_ref[h * Dh:(h + 1) * Dh, :],
                                      preferred_element_type=jnp.float32)
    attn_out = attn_acc + bo_ref[...]

    # Residual + LayerNorm 1 (f32 stats, biased variance == nn.LayerNorm).
    s1 = x + attn_out
    mu1 = jnp.mean(s1, axis=-1, keepdims=True)
    var1 = jnp.mean((s1 - mu1) ** 2, axis=-1, keepdims=True)
    h1 = (s1 - mu1) * jax.lax.rsqrt(var1 + eps) * ln1g_ref[...] + ln1b_ref[...]

    # Feed-forward.
    hid = jnp.dot(h1, w1_ref[...], preferred_element_type=jnp.float32) + b1_ref[...]
    hid = jnp.maximum(hid, 0.0)
    ff = jnp.dot(hid, w2_ref[...], preferred_element_type=jnp.float32) + b2_ref[...]

    # Residual + LayerNorm 2.
    s2 = h1 + ff
    mu2 = jnp.mean(s2, axis=-1, keepdims=True)
    var2 = jnp.mean((s2 - mu2) ** 2, axis=-1, keepdims=True)
    o_ref[...] = (s2 - mu2) * jax.lax.rsqrt(var2 + eps) * ln2g_ref[...] + ln2b_ref[...]


# ----------------------------- pallas_call wrapper -----------------------------

def _const_spec(arr):
    """Weight spec: full block, constant index_map -> stays VMEM-resident."""
    nd = arr.ndim
    return pl.BlockSpec(arr.shape, lambda b, _nd=nd: (0,) * _nd)


def pallas_encoder_layer(x, p, num_heads, mask_bias=None, emit_attn=False, eps=1e-5):
    B, S, D = x.shape
    Dh = D // num_heads
    scale = 1.0 / math.sqrt(Dh)

    weights = (
        p["wqkv"], p["bqkv"].reshape(1, -1),
        p["wo"], p["bo"].reshape(1, -1),
        p["ln1_g"].reshape(1, -1), p["ln1_b"].reshape(1, -1),
        p["w1"], p["b1"].reshape(1, -1),
        p["w2"], p["b2"].reshape(1, -1),
        p["ln2_g"].reshape(1, -1), p["ln2_b"].reshape(1, -1),
    )

    in_arrays = [x]
    in_specs = [pl.BlockSpec((None, S, D), lambda b: (b, 0, 0))]
    if mask_bias is not None:
        in_arrays.append(mask_bias)
        in_specs.append(pl.BlockSpec((None, S, S), lambda b: (b, 0, 0)))
    in_arrays.extend(weights)
    in_specs.extend(_const_spec(w) for w in weights)

    out_shape = [jax.ShapeDtypeStruct((B, S, D), jnp.float32)]
    out_specs = [pl.BlockSpec((None, S, D), lambda b: (b, 0, 0))]
    if emit_attn:
        out_shape.append(jax.ShapeDtypeStruct((B, num_heads, S, S), jnp.float32))
        out_specs.append(pl.BlockSpec((None, num_heads, S, S),
                                      lambda b: (b, 0, 0, 0)))

    kernel = functools.partial(
        _encoder_layer_kernel, num_heads=num_heads, scale=scale, eps=eps,
        has_mask=mask_bias is not None, emit_attn=emit_attn)

    outs = pl.pallas_call(
        kernel,
        grid=(B,),
        in_specs=in_specs,
        out_specs=tuple(out_specs) if emit_attn else out_specs[0],
        out_shape=tuple(out_shape) if emit_attn else out_shape[0],
        # Batch axis is fully independent -> "parallel" (v7x megacore splits it;
        # measured no-op on single-TC v5e/v6e).
        compiler_params=pltpu.CompilerParams(dimension_semantics=("parallel",)),
    )(*in_arrays)

    if emit_attn:
        return outs  # (encoding, attn_weights)
    return outs, None


# ----------------------------- model glue -----------------------------

def make_positional_encoding(max_len, d_model):
    pos = jnp.arange(max_len, dtype=jnp.float32)[:, None]
    div = jnp.exp(jnp.arange(0, d_model, 2, dtype=jnp.float32)
                  * (-math.log(10000.0) / d_model))
    pe = jnp.zeros((max_len, d_model), jnp.float32)
    pe = pe.at[:, 0::2].set(jnp.sin(pos * div))
    pe = pe.at[:, 1::2].set(jnp.cos(pos * div))
    return pe


def init_params(key, vocab, d_model, num_heads, num_layers, d_ff, max_len=64):
    keys = jax.random.split(key, 1 + num_layers)
    params = {
        "embedding": jax.random.normal(keys[0], (vocab, d_model), jnp.float32) * 0.02,
        "pe": make_positional_encoding(max_len, d_model),
        "num_heads": num_heads,
        "layers": [],
    }
    for li in range(num_layers):
        ks = jax.random.split(keys[1 + li], 6)

        def w(k, shape):
            return jax.random.normal(k, shape, jnp.float32) * 0.05

        wq = w(ks[0], (d_model, d_model))
        wk = w(ks[1], (d_model, d_model))
        wv = w(ks[2], (d_model, d_model))
        params["layers"].append({
            # Fused QKV weight/bias: one (D, 3D) matmul instead of three.
            "wqkv": jnp.concatenate([wq, wk, wv], axis=1),
            "bqkv": jnp.zeros((3 * d_model,), jnp.float32),
            "wo": w(ks[3], (d_model, d_model)), "bo": jnp.zeros((d_model,), jnp.float32),
            "w1": w(ks[4], (d_model, d_ff)), "b1": jnp.zeros((d_ff,), jnp.float32),
            "w2": w(ks[5], (d_ff, d_model)), "b2": jnp.zeros((d_model,), jnp.float32),
            "ln1_g": jnp.ones((d_model,), jnp.float32), "ln1_b": jnp.zeros((d_model,), jnp.float32),
            "ln2_g": jnp.ones((d_model,), jnp.float32), "ln2_b": jnp.zeros((d_model,), jnp.float32),
        })
    return params


def encoder_stack_forward(params, token_ids, mask=None):
    emb_table = params["embedding"]
    d_model = emb_table.shape[1]
    B, S = token_ids.shape

    # Embeddings (data-dependent gather stays in plain JAX) + positional encoding.
    emb = jnp.take(emb_table, token_ids, axis=0) * math.sqrt(d_model)
    x = emb + params["pe"][None, :S, :]

    if mask is not None:
        mask_bias = jnp.where(mask.reshape(B, S, S).astype(bool),
                              0.0, -1e9).astype(jnp.float32)
    else:
        mask_bias = None  # no mask operand at all (no zeros tensor, no DMA)

    num_layers = len(params["layers"])
    attn_w = None
    for li, p in enumerate(params["layers"]):
        is_last = li == num_layers - 1
        x, w = pallas_encoder_layer(x, p, params["num_heads"],
                                    mask_bias=mask_bias, emit_attn=is_last)
        if is_last:
            attn_w = w
    return x, attn_w


# ----------------------------- main -----------------------------

if __name__ == "__main__":
    key = jax.random.PRNGKey(0)
    k_param, k_tok = jax.random.split(key)

    B, S = 2, 8
    vocab, d_model, num_heads, num_layers, d_ff = 50, 32, 4, 2, 64

    params = init_params(k_param, vocab, d_model, num_heads, num_layers, d_ff)
    tokens = jax.random.randint(k_tok, (B, S), 0, vocab)

    fwd = jax.jit(lambda toks: encoder_stack_forward(params, toks, mask=None))
    encoding, attn_weights = fwd(tokens)
    jax.block_until_ready((encoding, attn_weights))

    assert encoding.shape == (B, S, d_model)
    assert attn_weights.shape == (B, num_heads, S, S)
    assert bool(jnp.all(jnp.isfinite(encoding)))
    # softmax rows ~ 1 (approx reciprocal -> loose tolerance)
    assert bool(jnp.allclose(jnp.sum(attn_weights, axis=-1), 1.0, atol=1e-2))
    print("KERNEL_OK")
</pallas_src>

<mosaic_0001>
module attributes {stable_mosaic.version = 11 : i64} {
  func.func @_encoder_layer_kernel(%arg0: i32, %arg1: memref<1x8x32xf32, #tpu.memory_space<vmem>>, %arg2: memref<32x96xf32, #tpu.memory_space<vmem>>, %arg3: memref<1x96xf32, #tpu.memory_space<vmem>>, %arg4: memref<32x32xf32, #tpu.memory_space<vmem>>, %arg5: memref<1x32xf32, #tpu.memory_space<vmem>>, %arg6: memref<1x32xf32, #tpu.memory_space<vmem>>, %arg7: memref<1x32xf32, #tpu.memory_space<vmem>>, %arg8: memref<32x64xf32, #tpu.memory_space<vmem>>, %arg9: memref<1x64xf32, #tpu.memory_space<vmem>>, %arg10: memref<64x32xf32, #tpu.memory_space<vmem>>, %arg11: memref<1x32xf32, #tpu.memory_space<vmem>>, %arg12: memref<1x32xf32, #tpu.memory_space<vmem>>, %arg13: memref<1x32xf32, #tpu.memory_space<vmem>>, %arg14: memref<1x8x32xf32, #tpu.memory_space<vmem>>, %arg15: memref<1x4x8x8xf32, #tpu.memory_space<vmem>>) attributes {dimension_semantics = [#tpu.dimension_semantics<parallel>], iteration_bounds = array<i64: 2>, scalar_prefetch = 0 : i64, scratch_operands = 0 : i64, tpu.core_type = #tpu.core_type<tc>, window_params = [{transform_indices = @transform_0, window_bounds = array<i64: 1, 8, 32>}, {pipeline_mode = #tpu.pipeline_mode<synchronous>, transform_indices = @transform_1, window_bounds = array<i64: 32, 96>}, {pipeline_mode = #tpu.pipeline_mode<synchronous>, transform_indices = @transform_2, window_bounds = array<i64: 1, 96>}, {pipeline_mode = #tpu.pipeline_mode<synchronous>, transform_indices = @transform_3, window_bounds = array<i64: 32, 32>}, {pipeline_mode = #tpu.pipeline_mode<synchronous>, transform_indices = @transform_4, window_bounds = array<i64: 1, 32>}, {pipeline_mode = #tpu.pipeline_mode<synchronous>, transform_indices = @transform_5, window_bounds = array<i64: 1, 32>}, {pipeline_mode = #tpu.pipeline_mode<synchronous>, transform_indices = @transform_6, window_bounds = array<i64: 1, 32>}, {pipeline_mode = #tpu.pipeline_mode<synchronous>, transform_indices = @transform_7, window_bounds = array<i64: 32, 64>}, {pipeline_mode = #tpu.pipeline_mode<synchronous>, transform_indices = @transform_8, window_bounds = array<i64: 1, 64>}, {pipeline_mode = #tpu.pipeline_mode<synchronous>, transform_indices = @transform_9, window_bounds = array<i64: 64, 32>}, {pipeline_mode = #tpu.pipeline_mode<synchronous>, transform_indices = @transform_10, window_bounds = array<i64: 1, 32>}, {pipeline_mode = #tpu.pipeline_mode<synchronous>, transform_indices = @transform_11, window_bounds = array<i64: 1, 32>}, {pipeline_mode = #tpu.pipeline_mode<synchronous>, transform_indices = @transform_12, window_bounds = array<i64: 1, 32>}, {transform_indices = @transform_13, window_bounds = array<i64: 1, 8, 32>}, {transform_indices = @transform_14, window_bounds = array<i64: 1, 4, 8, 8>}]} {
    %c0 = arith.constant 0 : index
    %c0_0 = arith.constant 0 : index
    %c0_1 = arith.constant 0 : index
    %0 = vector.load %arg1[%c0, %c0_0, %c0_1] : memref<1x8x32xf32, #tpu.memory_space<vmem>>, vector<1x8x32xf32>
    %1 = vector.shape_cast %0 : vector<1x8x32xf32> to vector<8x32xf32>
    %c0_2 = arith.constant 0 : index
    %c0_3 = arith.constant 0 : index
    %2 = vector.load %arg2[%c0_2, %c0_3] : memref<32x96xf32, #tpu.memory_space<vmem>>, vector<32x96xf32>
    %cst = arith.constant dense<0.000000e+00> : vector<8x96xf32>
    %3 = tpu.matmul %1, %2, %cst {dimension_numbers = #tpu.dot_dimension_numbers<[1], [0], [0], [1], [0, 0, 1, 1], [], []>} : vector<8x32xf32>, vector<32x96xf32>, vector<8x96xf32> -> vector<8x96xf32>
    %c0_4 = arith.constant 0 : index
    %c0_5 = arith.constant 0 : index
    %4 = vector.load %arg3[%c0_4, %c0_5] : memref<1x96xf32, #tpu.memory_space<vmem>>, vector<1x96xf32>
    %5 = vector.broadcast %4 : vector<1x96xf32> to vector<8x96xf32>
    %6 = arith.addf %3, %5 : vector<8x96xf32>
    %cst_6 = arith.constant 0.000000e+00 : f32
    %7 = vector.broadcast %cst_6 : f32 to vector<8x32xf32>
    %8 = vector.extract_strided_slice %6 {offsets = [0, 0], sizes = [8, 8], strides = [1, 1]} : vector<8x96xf32> to vector<8x8xf32>
    %9 = vector.extract_strided_slice %6 {offsets = [0, 32], sizes = [8, 8], strides = [1, 1]} : vector<8x96xf32> to vector<8x8xf32>
    %10 = vector.extract_strided_slice %6 {offsets = [0, 64], sizes = [8, 8], strides = [1, 1]} : vector<8x96xf32> to vector<8x8xf32>
    %cst_7 = arith.constant dense<0.000000e+00> : vector<8x8xf32>
    %11 = tpu.matmul %8, %9, %cst_7 {dimension_numbers = #tpu.dot_dimension_numbers<[1], [1], [0], [0], [0, 0, 1, 0], [], []>} : vector<8x8xf32>, vector<8x8xf32>, vector<8x8xf32> -> vector<8x8xf32>
    %cst_8 = arith.constant 0.353553385 : f32
    %12 = vector.broadcast %cst_8 : f32 to vector<8x8xf32>
    %13 = arith.mulf %11, %12 : vector<8x8xf32>
    %cst_9 = arith.constant dense<0xFF800000> : vector<8xf32>
    %14 = vector.multi_reduction <maximumf>, %13, %cst_9 [1] : vector<8x8xf32> to vector<8xf32>
    %15 = vector.shape_cast %14 : vector<8xf32> to vector<8x1xf32>
    %16 = vector.broadcast %15 : vector<8x1xf32> to vector<8x8xf32>
    %17 = arith.subf %13, %16 : vector<8x8xf32>
    %18 = math.exp %17 : vector<8x8xf32>
    %cst_10 = arith.constant dense<0.000000e+00> : vector<8xf32>
    %19 = vector.multi_reduction <add>, %18, %cst_10 [1] : vector<8x8xf32> to vector<8xf32>
    %20 = vector.shape_cast %19 : vector<8xf32> to vector<8x1xf32>
    %21 = tpu.reciprocal %20 {approx = true} : vector<8x1xf32> -> vector<8x1xf32>
    %22 = vector.broadcast %21 : vector<8x1xf32> to vector<8x8xf32>
    %23 = arith.mulf %18, %22 : vector<8x8xf32>
    %c0_11 = arith.constant 0 : index
    %c0_12 = arith.constant 0 : index
    %c0_13 = arith.constant 0 : index
    %c0_14 = arith.constant 0 : index
    %24 = vector.load %arg15[%c0_11, %c0_12, %c0_13, %c0_14] : memref<1x4x8x8xf32, #tpu.memory_space<vmem>>, vector<1x1x8x8xf32>
    %25 = vector.shape_cast %24 : vector<1x1x8x8xf32> to vector<8x8xf32>
    %26 = vector.shape_cast %23 : vector<8x8xf32> to vector<1x1x8x8xf32>
    tpu.vector_store %arg15[%c0_11, %c0_12, %c0_13, %c0_14], %26 {strides = array<i32>} : memref<1x4x8x8xf32, #tpu.memory_space<vmem>>, vector<1x1x8x8xf32>,
    %cst_15 = arith.constant dense<0.000000e+00> : vector<8x8xf32>
    %27 = tpu.matmul %23, %10, %cst_15 {dimension_numbers = #tpu.dot_dimension_numbers<[1], [0], [0], [1], [0, 0, 1, 1], [], []>} : vector<8x8xf32>, vector<8x8xf32>, vector<8x8xf32> -> vector<8x8xf32>
    %c0_16 = arith.constant 0 : index
    %c0_17 = arith.constant 0 : index
    %28 = vector.load %arg4[%c0_16, %c0_17] : memref<32x32xf32, #tpu.memory_space<vmem>>, vector<8x32xf32>
    %cst_18 = arith.constant dense<0.000000e+00> : vector<8x32xf32>
    %29 = tpu.matmul %27, %28, %cst_18 {dimension_numbers = #tpu.dot_dimension_numbers<[1], [0], [0], [1], [0, 0, 1, 1], [], []>} : vector<8x8xf32>, vector<8x32xf32>, vector<8x32xf32> -> vector<8x32xf32>
    %30 = arith.addf %7, %29 : vector<8x32xf32>
    %31 = vector.extract_strided_slice %6 {offsets = [0, 8], sizes = [8, 8], strides = [1, 1]} : vector<8x96xf32> to vector<8x8xf32>
    %32 = vector.extract_strided_slice %6 {offsets = [0, 40], sizes = [8, 8], strides = [1, 1]} : vector<8x96xf32> to vector<8x8xf32>
    %33 = vector.extract_strided_slice %6 {offsets = [0, 72], sizes = [8, 8], strides = [1, 1]} : vector<8x96xf32> to vector<8x8xf32>
    %cst_19 = arith.constant dense<0.000000e+00> : vector<8x8xf32>
    %34 = tpu.matmul %31, %32, %cst_19 {dimension_numbers = #tpu.dot_dimension_numbers<[1], [1], [0], [0], [0, 0, 1, 0], [], []>} : vector<8x8xf32>, vector<8x8xf32>, vector<8x8xf32> -> vector<8x8xf32>
    %cst_20 = arith.constant 0.353553385 : f32
    %35 = vector.broadcast %cst_20 : f32 to vector<8x8xf32>
    %36 = arith.mulf %34, %35 : vector<8x8xf32>
    %cst_21 = arith.constant dense<0xFF800000> : vector<8xf32>
    %37 = vector.multi_reduction <maximumf>, %36, %cst_21 [1] : vector<8x8xf32> to vector<8xf32>
    %38 = vector.shape_cast %37 : vector<8xf32> to vector<8x1xf32>
    %39 = vector.broadcast %38 : vector<8x1xf32> to vector<8x8xf32>
    %40 = arith.subf %36, %39 : vector<8x8xf32>
    %41 = math.exp %40 : vector<8x8xf32>
    %cst_22 = arith.constant dense<0.000000e+00> : vector<8xf32>
    %42 = vector.multi_reduction <add>, %41, %cst_22 [1] : vector<8x8xf32> to vector<8xf32>
    %43 = vector.shape_cast %42 : vector<8xf32> to vector<8x1xf32>
    %44 = tpu.reciprocal %43 {approx = true} : vector<8x1xf32> -> vector<8x1xf32>
    %45 = vector.broadcast %44 : vector<8x1xf32> to vector<8x8xf32>
    %46 = arith.mulf %41, %45 : vector<8x8xf32>
    %c0_23 = arith.constant 0 : index
    %c1 = arith.constant 1 : index
    %c0_24 = arith.constant 0 : index
    %c0_25 = arith.constant 0 : index
    %47 = vector.load %arg15[%c0_23, %c1, %c0_24, %c0_25] : memref<1x4x8x8xf32, #tpu.memory_space<vmem>>, vector<1x1x8x8xf32>
    %48 = vector.shape_cast %47 : vector<1x1x8x8xf32> to vector<8x8xf32>
    %49 = vector.shape_cast %46 : vector<8x8xf32> to vector<1x1x8x8xf32>
    tpu.vector_store %arg15[%c0_23, %c1, %c0_24, %c0_25], %49 {strides = array<i32>} : memref<1x4x8x8xf32, #tpu.memory_space<vmem>>, vector<1x1x8x8xf32>,
    %cst_26 = arith.constant dense<0.000000e+00> : vector<8x8xf32>
    %50 = tpu.matmul %46, %33, %cst_26 {dimension_numbers = #tpu.dot_dimension_numbers<[1], [0], [0], [1], [0, 0, 1, 1], [], []>} : vector<8x8xf32>, vector<8x8xf32>, vector<8x8xf32> -> vector<8x8xf32>
    %c8 = arith.constant 8 : index
    %c0_27 = arith.constant 0 : index
    %51 = vector.load %arg4[%c8, %c0_27] : memref<32x32xf32, #tpu.memory_space<vmem>>, vector<8x32xf32>
    %cst_28 = arith.constant dense<0.000000e+00> : vector<8x32xf32>
    %52 = tpu.matmul %50, %51, %cst_28 {dimension_numbers = #tpu.dot_dimension_numbers<[1], [0], [0], [1], [0, 0, 1, 1], [], []>} : vector<8x8xf32>, vector<8x32xf32>, vector<8x32xf32> -> vector<8x32xf32>
    %53 = arith.addf %30, %52 : vector<8x32xf32>
    %54 = vector.extract_strided_slice %6 {offsets = [0, 16], sizes = [8, 8], strides = [1, 1]} : vector<8x96xf32> to vector<8x8xf32>
    %55 = vector.extract_strided_slice %6 {offsets = [0, 48], sizes = [8, 8], strides = [1, 1]} : vector<8x96xf32> to vector<8x8xf32>
    %56 = vector.extract_strided_slice %6 {offsets = [0, 80], sizes = [8, 8], strides = [1, 1]} : vector<8x96xf32> to vector<8x8xf32>
    %cst_29 = arith.constant dense<0.000000e+00> : vector<8x8xf32>
    %57 = tpu.matmul %54, %55, %cst_29 {dimension_numbers = #tpu.dot_dimension_numbers<[1], [1], [0], [0], [0, 0, 1, 0], [], []>} : vector<8x8xf32>, vector<8x8xf32>, vector<8x8xf32> -> vector<8x8xf32>
    %cst_30 = arith.constant 0.353553385 : f32
    %58 = vector.broadcast %cst_30 : f32 to vector<8x8xf32>
    %59 = arith.mulf %57, %58 : vector<8x8xf32>
    %cst_31 = arith.constant dense<0xFF800000> : vector<8xf32>
    %60 = vector.multi_reduction <maximumf>, %59, %cst_31 [1] : vector<8x8xf32> to vector<8xf32>
    %61 = vector.shape_cast %60 : vector<8xf32> to vector<8x1xf32>
    %62 = vector.broadcast %61 : vector<8x1xf32> to vector<8x8xf32>
    %63 = arith.subf %59, %62 : vector<8x8xf32>
    %64 = math.exp %63 : vector<8x8xf32>
    %cst_32 = arith.constant dense<0.000000e+00> : vector<8xf32>
    %65 = vector.multi_reduction <add>, %64, %cst_32 [1] : vector<8x8xf32> to vector<8xf32>
    %66 = vector.shape_cast %65 : vector<8xf32> to vector<8x1xf32>
    %67 = tpu.reciprocal %66 {approx = true} : vector<8x1xf32> -> vector<8x1xf32>
    %68 = vector.broadcast %67 : vector<8x1xf32> to vector<8x8xf32>
    %69 = arith.mulf %64, %68 : vector<8x8xf32>
    %c0_33 = arith.constant 0 : index
    %c2 = arith.constant 2 : index
    %c0_34 = arith.constant 0 : index
    %c0_35 = arith.constant 0 : index
    %70 = vector.load %arg15[%c0_33, %c2, %c0_34, %c0_35] : memref<1x4x8x8xf32, #tpu.memory_space<vmem>>, vector<1x1x8x8xf32>
    %71 = vector.shape_cast %70 : vector<1x1x8x8xf32> to vector<8x8xf32>
    %72 = vector.shape_cast %69 : vector<8x8xf32> to vector<1x1x8x8xf32>
    tpu.vector_store %arg15[%c0_33, %c2, %c0_34, %c0_35], %72 {strides = array<i32>} : memref<1x4x8x8xf32, #tpu.memory_space<vmem>>, vector<1x1x8x8xf32>,
    %cst_36 = arith.constant dense<0.000000e+00> : vector<8x8xf32>
    %73 = tpu.matmul %69, %56, %cst_36 {dimension_numbers = #tpu.dot_dimension_numbers<[1], [0], [0], [1], [0, 0, 1, 1], [], []>} : vector<8x8xf32>, vector<8x8xf32>, vector<8x8xf32> -> vector<8x8xf32>
    %c16 = arith.constant 16 : index
    %c0_37 = arith.constant 0 : index
    %74 = vector.load %arg4[%c16, %c0_37] : memref<32x32xf32, #tpu.memory_space<vmem>>, vector<8x32xf32>
    %cst_38 = arith.constant dense<0.000000e+00> : vector<8x32xf32>
    %75 = tpu.matmul %73, %74, %cst_38 {dimension_numbers = #tpu.dot_dimension_numbers<[1], [0], [0], [1], [0, 0, 1, 1], [], []>} : vector<8x8xf32>, vector<8x32xf32>, vector<8x32xf32> -> vector<8x32xf32>
    %76 = arith.addf %53, %75 : vector<8x32xf32>
    %77 = vector.extract_strided_slice %6 {offsets = [0, 24], sizes = [8, 8], strides = [1, 1]} : vector<8x96xf32> to vector<8x8xf32>
    %78 = vector.extract_strided_slice %6 {offsets = [0, 56], sizes = [8, 8], strides = [1, 1]} : vector<8x96xf32> to vector<8x8xf32>
    %79 = vector.extract_strided_slice %6 {offsets = [0, 88], sizes = [8, 8], strides = [1, 1]} : vector<8x96xf32> to vector<8x8xf32>
    %cst_39 = arith.constant dense<0.000000e+00> : vector<8x8xf32>
    %80 = tpu.matmul %77, %78, %cst_39 {dimension_numbers = #tpu.dot_dimension_numbers<[1], [1], [0], [0], [0, 0, 1, 0], [], []>} : vector<8x8xf32>, vector<8x8xf32>, vector<8x8xf32> -> vector<8x8xf32>
    %cst_40 = arith.constant 0.353553385 : f32
    %81 = vector.broadcast %cst_40 : f32 to vector<8x8xf32>
    %82 = arith.mulf %80, %81 : vector<8x8xf32>
    %cst_41 = arith.constant dense<0xFF800000> : vector<8xf32>
    %83 = vector.multi_reduction <maximumf>, %82, %cst_41 [1] : vector<8x8xf32> to vector<8xf32>
    %84 = vector.shape_cast %83 : vector<8xf32> to vector<8x1xf32>
    %85 = vector.broadcast %84 : vector<8x1xf32> to vector<8x8xf32>
    %86 = arith.subf %82, %85 : vector<8x8xf32>
    %87 = math.exp %86 : vector<8x8xf32>
    %cst_42 = arith.constant dense<0.000000e+00> : vector<8xf32>
    %88 = vector.multi_reduction <add>, %87, %cst_42 [1] : vector<8x8xf32> to vector<8xf32>
    %89 = vector.shape_cast %88 : vector<8xf32> to vector<8x1xf32>
    %90 = tpu.reciprocal %89 {approx = true} : vector<8x1xf32> -> vector<8x1xf32>
    %91 = vector.broadcast %90 : vector<8x1xf32> to vector<8x8xf32>
    %92 = arith.mulf %87, %91 : vector<8x8xf32>
    %c0_43 = arith.constant 0 : index
    %c3 = arith.constant 3 : index
    %c0_44 = arith.constant 0 : index
    %c0_45 = arith.constant 0 : index
    %93 = vector.load %arg15[%c0_43, %c3, %c0_44, %c0_45] : memref<1x4x8x8xf32, #tpu.memory_space<vmem>>, vector<1x1x8x8xf32>
    %94 = vector.shape_cast %93 : vector<1x1x8x8xf32> to vector<8x8xf32>
    %95 = vector.shape_cast %92 : vector<8x8xf32> to vector<1x1x8x8xf32>
    tpu.vector_store %arg15[%c0_43, %c3, %c0_44, %c0_45], %95 {strides = array<i32>} : memref<1x4x8x8xf32, #tpu.memory_space<vmem>>, vector<1x1x8x8xf32>,
    %cst_46 = arith.constant dense<0.000000e+00> : vector<8x8xf32>
    %96 = tpu.matmul %92, %79, %cst_46 {dimension_numbers = #tpu.dot_dimension_numbers<[1], [0], [0], [1], [0, 0, 1, 1], [], []>} : vector<8x8xf32>, vector<8x8xf32>, vector<8x8xf32> -> vector<8x8xf32>
    %c24 = arith.constant 24 : index
    %c0_47 = arith.constant 0 : index
    %97 = vector.load %arg4[%c24, %c0_47] : memref<32x32xf32, #tpu.memory_space<vmem>>, vector<8x32xf32>
    %cst_48 = arith.constant dense<0.000000e+00> : vector<8x32xf32>
    %98 = tpu.matmul %96, %97, %cst_48 {dimension_numbers = #tpu.dot_dimension_numbers<[1], [0], [0], [1], [0, 0, 1, 1], [], []>} : vector<8x8xf32>, vector<8x32xf32>, vector<8x32xf32> -> vector<8x32xf32>
    %99 = arith.addf %76, %98 : vector<8x32xf32>
    %c0_49 = arith.constant 0 : index
    %c0_50 = arith.constant 0 : index
    %100 = vector.load %arg5[%c0_49, %c0_50] : memref<1x32xf32, #tpu.memory_space<vmem>>, vector<1x32xf32>
    %101 = vector.broadcast %100 : vector<1x32xf32> to vector<8x32xf32>
    %102 = arith.addf %99, %101 : vector<8x32xf32>
    %103 = arith.addf %1, %102 : vector<8x32xf32>
    %cst_51 = arith.constant dense<0.000000e+00> : vector<8xf32>
    %104 = vector.multi_reduction <add>, %103, %cst_51 [1] : vector<8x32xf32> to vector<8xf32>
    %105 = vector.shape_cast %104 : vector<8xf32> to vector<8x1xf32>
    %cst_52 = arith.constant 3.200000e+01 : f32
    %106 = vector.broadcast %cst_52 : f32 to vector<8x1xf32>
    %107 = arith.divf %105, %106 : vector<8x1xf32>
    %108 = vector.broadcast %107 : vector<8x1xf32> to vector<8x32xf32>
    %109 = arith.subf %103, %108 : vector<8x32xf32>
    %110 = arith.mulf %109, %109 : vector<8x32xf32>
    %cst_53 = arith.constant dense<0.000000e+00> : vector<8xf32>
    %111 = vector.multi_reduction <add>, %110, %cst_53 [1] : vector<8x32xf32> to vector<8xf32>
    %112 = vector.shape_cast %111 : vector<8xf32> to vector<8x1xf32>
    %cst_54 = arith.constant 3.200000e+01 : f32
    %113 = vector.broadcast %cst_54 : f32 to vector<8x1xf32>
    %114 = arith.divf %112, %113 : vector<8x1xf32>
    %115 = vector.broadcast %107 : vector<8x1xf32> to vector<8x32xf32>
    %116 = arith.subf %103, %115 : vector<8x32xf32>
    %cst_55 = arith.constant 9.99999974E-6 : f32
    %117 = vector.broadcast %cst_55 : f32 to vector<8x1xf32>
    %118 = arith.addf %114, %117 : vector<8x1xf32>
    %119 = math.rsqrt %118 : vector<8x1xf32>
    %120 = vector.broadcast %119 : vector<8x1xf32> to vector<8x32xf32>
    %121 = arith.mulf %116, %120 : vector<8x32xf32>
    %c0_56 = arith.constant 0 : index
    %c0_57 = arith.constant 0 : index
    %122 = vector.load %arg6[%c0_56, %c0_57] : memref<1x32xf32, #tpu.memory_space<vmem>>, vector<1x32xf32>
    %123 = vector.broadcast %122 : vector<1x32xf32> to vector<8x32xf32>
    %124 = arith.mulf %121, %123 : vector<8x32xf32>
    %c0_58 = arith.constant 0 : index
    %c0_59 = arith.constant 0 : index
    %125 = vector.load %arg7[%c0_58, %c0_59] : memref<1x32xf32, #tpu.memory_space<vmem>>, vector<1x32xf32>
    %126 = vector.broadcast %125 : vector<1x32xf32> to vector<8x32xf32>
    %127 = arith.addf %124, %126 : vector<8x32xf32>
    %c0_60 = arith.constant 0 : index
    %c0_61 = arith.constant 0 : index
    %128 = vector.load %arg8[%c0_60, %c0_61] : memref<32x64xf32, #tpu.memory_space<vmem>>, vector<32x64xf32>
    %cst_62 = arith.constant dense<0.000000e+00> : vector<8x64xf32>
    %129 = tpu.matmul %127, %128, %cst_62 {dimension_numbers = #tpu.dot_dimension_numbers<[1], [0], [0], [1], [0, 0, 1, 1], [], []>} : vector<8x32xf32>, vector<32x64xf32>, vector<8x64xf32> -> vector<8x64xf32>
    %c0_63 = arith.constant 0 : index
    %c0_64 = arith.constant 0 : index
    %130 = vector.load %arg9[%c0_63, %c0_64] : memref<1x64xf32, #tpu.memory_space<vmem>>, vector<1x64xf32>
    %131 = vector.broadcast %130 : vector<1x64xf32> to vector<8x64xf32>
    %132 = arith.addf %129, %131 : vector<8x64xf32>
    %cst_65 = arith.constant 0.000000e+00 : f32
    %133 = vector.broadcast %cst_65 : f32 to vector<8x64xf32>
    %134 = arith.maximumf %132, %133 : vector<8x64xf32>
    %c0_66 = arith.constant 0 : index
    %c0_67 = arith.constant 0 : index
    %135 = vector.load %arg10[%c0_66, %c0_67] : memref<64x32xf32, #tpu.memory_space<vmem>>, vector<64x32xf32>
    %cst_68 = arith.constant dense<0.000000e+00> : vector<8x32xf32>
    %136 = tpu.matmul %134, %135, %cst_68 {dimension_numbers = #tpu.dot_dimension_numbers<[1], [0], [0], [1], [0, 0, 1, 1], [], []>} : vector<8x64xf32>, vector<64x32xf32>, vector<8x32xf32> -> vector<8x32xf32>
    %c0_69 = arith.constant 0 : index
    %c0_70 = arith.constant 0 : index
    %137 = vector.load %arg11[%c0_69, %c0_70] : memref<1x32xf32, #tpu.memory_space<vmem>>, vector<1x32xf32>
    %138 = vector.broadcast %137 : vector<1x32xf32> to vector<8x32xf32>
    %139 = arith.addf %136, %138 : vector<8x32xf32>
    %140 = arith.addf %127, %139 : vector<8x32xf32>
    %cst_71 = arith.constant dense<0.000000e+00> : vector<8xf32>
    %141 = vector.multi_reduction <add>, %140, %cst_71 [1] : vector<8x32xf32> to vector<8xf32>
    %142 = vector.shape_cast %141 : vector<8xf32> to vector<8x1xf32>
    %cst_72 = arith.constant 3.200000e+01 : f32
    %143 = vector.broadcast %cst_72 : f32 to vector<8x1xf32>
    %144 = arith.divf %142, %143 : vector<8x1xf32>
    %145 = vector.broadcast %144 : vector<8x1xf32> to vector<8x32xf32>
    %146 = arith.subf %140, %145 : vector<8x32xf32>
    %147 = arith.mulf %146, %146 : vector<8x32xf32>
    %cst_73 = arith.constant dense<0.000000e+00> : vector<8xf32>
    %148 = vector.multi_reduction <add>, %147, %cst_73 [1] : vector<8x32xf32> to vector<8xf32>
    %149 = vector.shape_cast %148 : vector<8xf32> to vector<8x1xf32>
    %cst_74 = arith.constant 3.200000e+01 : f32
    %150 = vector.broadcast %cst_74 : f32 to vector<8x1xf32>
    %151 = arith.divf %149, %150 : vector<8x1xf32>
    %152 = vector.broadcast %144 : vector<8x1xf32> to vector<8x32xf32>
    %153 = arith.subf %140, %152 : vector<8x32xf32>
    %cst_75 = arith.constant 9.99999974E-6 : f32
    %154 = vector.broadcast %cst_75 : f32 to vector<8x1xf32>
    %155 = arith.addf %151, %154 : vector<8x1xf32>
    %156 = math.rsqrt %155 : vector<8x1xf32>
    %157 = vector.broadcast %156 : vector<8x1xf32> to vector<8x32xf32>
    %158 = arith.mulf %153, %157 : vector<8x32xf32>
    %c0_76 = arith.constant 0 : index
    %c0_77 = arith.constant 0 : index
    %159 = vector.load %arg12[%c0_76, %c0_77] : memref<1x32xf32, #tpu.memory_space<vmem>>, vector<1x32xf32>
    %160 = vector.broadcast %159 : vector<1x32xf32> to vector<8x32xf32>
    %161 = arith.mulf %158, %160 : vector<8x32xf32>
    %c0_78 = arith.constant 0 : index
    %c0_79 = arith.constant 0 : index
    %162 = vector.load %arg13[%c0_78, %c0_79] : memref<1x32xf32, #tpu.memory_space<vmem>>, vector<1x32xf32>
    %163 = vector.broadcast %162 : vector<1x32xf32> to vector<8x32xf32>
    %164 = arith.addf %161, %163 : vector<8x32xf32>
    %c0_80 = arith.constant 0 : index
    %c0_81 = arith.constant 0 : index
    %c0_82 = arith.constant 0 : index
    %165 = vector.load %arg14[%c0_80, %c0_81, %c0_82] : memref<1x8x32xf32, #tpu.memory_space<vmem>>, vector<1x8x32xf32>
    %166 = vector.shape_cast %165 : vector<1x8x32xf32> to vector<8x32xf32>
    %167 = vector.shape_cast %164 : vector<8x32xf32> to vector<1x8x32xf32>
    tpu.vector_store %arg14[%c0_80, %c0_81, %c0_82], %167 {strides = array<i32>} : memref<1x8x32xf32, #tpu.memory_space<vmem>>, vector<1x8x32xf32>,
    return
  }
  func.func @transform_0(%arg0: i32) -> (i32, i32, i32) {
    %c0_i32 = arith.constant 0 : i32
    %c0_i32_0 = arith.constant 0 : i32
    %c0_i32_1 = arith.constant 0 : i32
    return %arg0, %c0_i32, %c0_i32_0 : i32, i32, i32
  }
  func.func @transform_1(%arg0: i32) -> (i32, i32) {
    %c0_i32 = arith.constant 0 : i32
    %c0_i32_0 = arith.constant 0 : i32
    %c0_i32_1 = arith.constant 0 : i32
    return %c0_i32, %c0_i32_0 : i32, i32
  }
  func.func @transform_2(%arg0: i32) -> (i32, i32) {
    %c0_i32 = arith.constant 0 : i32
    %c0_i32_0 = arith.constant 0 : i32
    %c0_i32_1 = arith.constant 0 : i32
    return %c0_i32, %c0_i32_0 : i32, i32
  }
  func.func @transform_3(%arg0: i32) -> (i32, i32) {
    %c0_i32 = arith.constant 0 : i32
    %c0_i32_0 = arith.constant 0 : i32
    %c0_i32_1 = arith.constant 0 : i32
    return %c0_i32, %c0_i32_0 : i32, i32
  }
  func.func @transform_4(%arg0: i32) -> (i32, i32) {
    %c0_i32 = arith.constant 0 : i32
    %c0_i32_0 = arith.constant 0 : i32
    %c0_i32_1 = arith.constant 0 : i32
    return %c0_i32, %c0_i32_0 : i32, i32
  }
  func.func @transform_5(%arg0: i32) -> (i32, i32) {
    %c0_i32 = arith.constant 0 : i32
    %c0_i32_0 = arith.constant 0 : i32
    %c0_i32_1 = arith.constant 0 : i32
    return %c0_i32, %c0_i32_0 : i32, i32
  }
  func.func @transform_6(%arg0: i32) -> (i32, i32) {
    %c0_i32 = arith.constant 0 : i32
    %c0_i32_0 = arith.constant 0 : i32
    %c0_i32_1 = arith.constant 0 : i32
    return %c0_i32, %c0_i32_0 : i32, i32
  }
  func.func @transform_7(%arg0: i32) -> (i32, i32) {
    %c0_i32 = arith.constant 0 : i32
    %c0_i32_0 = arith.constant 0 : i32
    %c0_i32_1 = arith.constant 0 : i32
    return %c0_i32, %c0_i32_0 : i32, i32
  }
  func.func @transform_8(%arg0: i32) -> (i32, i32) {
    %c0_i32 = arith.constant 0 : i32
    %c0_i32_0 = arith.constant 0 : i32
    %c0_i32_1 = arith.constant 0 : i32
    return %c0_i32, %c0_i32_0 : i32, i32
  }
  func.func @transform_9(%arg0: i32) -> (i32, i32) {
    %c0_i32 = arith.constant 0 : i32
    %c0_i32_0 = arith.constant 0 : i32
    %c0_i32_1 = arith.constant 0 : i32
    return %c0_i32, %c0_i32_0 : i32, i32
  }
  func.func @transform_10(%arg0: i32) -> (i32, i32) {
    %c0_i32 = arith.constant 0 : i32
    %c0_i32_0 = arith.constant 0 : i32
    %c0_i32_1 = arith.constant 0 : i32
    return %c0_i32, %c0_i32_0 : i32, i32
  }
  func.func @transform_11(%arg0: i32) -> (i32, i32) {
    %c0_i32 = arith.constant 0 : i32
    %c0_i32_0 = arith.constant 0 : i32
    %c0_i32_1 = arith.constant 0 : i32
    return %c0_i32, %c0_i32_0 : i32, i32
  }
  func.func @transform_12(%arg0: i32) -> (i32, i32) {
    %c0_i32 = arith.constant 0 : i32
    %c0_i32_0 = arith.constant 0 : i32
    %c0_i32_1 = arith.constant 0 : i32
    return %c0_i32, %c0_i32_0 : i32, i32
  }
  func.func @transform_13(%arg0: i32) -> (i32, i32, i32) {
    %c0_i32 = arith.constant 0 : i32
    %c0_i32_0 = arith.constant 0 : i32
    %c0_i32_1 = arith.constant 0 : i32
    return %arg0, %c0_i32, %c0_i32_0 : i32, i32, i32
  }
  func.func @transform_14(%arg0: i32) -> (i32, i32, i32, i32) {
    %c0_i32 = arith.constant 0 : i32
    %c0_i32_0 = arith.constant 0 : i32
    %c0_i32_1 = arith.constant 0 : i32
    %c0_i32_2 = arith.constant 0 : i32
    return %arg0, %c0_i32, %c0_i32_0, %c0_i32_1 : i32, i32, i32, i32
  }
}

module attributes {stable_mosaic.version = 11 : i64} {
  func.func @_encoder_layer_kernel(%arg0: i32, %arg1: memref<1x8x32xf32, #tpu.memory_space<vmem>>, %arg2: memref<32x96xf32, #tpu.memory_space<vmem>>, %arg3: memref<1x96xf32, #tpu.memory_space<vmem>>, %arg4: memref<32x32xf32, #tpu.memory_space<vmem>>, %arg5: memref<1x32xf32, #tpu.memory_space<vmem>>, %arg6: memref<1x32xf32, #tpu.memory_space<vmem>>, %arg7: memref<1x32xf32, #tpu.memory_space<vmem>>, %arg8: memref<32x64xf32, #tpu.memory_space<vmem>>, %arg9: memref<1x64xf32, #tpu.memory_space<vmem>>, %arg10: memref<64x32xf32, #tpu.memory_space<vmem>>, %arg11: memref<1x32xf32, #tpu.memory_space<vmem>>, %arg12: memref<1x32xf32, #tpu.memory_space<vmem>>, %arg13: memref<1x32xf32, #tpu.memory_space<vmem>>, %arg14: memref<1x8x32xf32, #tpu.memory_space<vmem>>) attributes {dimension_semantics = [#tpu.dimension_semantics<parallel>], iteration_bounds = array<i64: 2>, scalar_prefetch = 0 : i64, scratch_operands = 0 : i64, tpu.core_type = #tpu.core_type<tc>, window_params = [{transform_indices = @transform_0, window_bounds = array<i64: 1, 8, 32>}, {pipeline_mode = #tpu.pipeline_mode<synchronous>, transform_indices = @transform_1, window_bounds = array<i64: 32, 96>}, {pipeline_mode = #tpu.pipeline_mode<synchronous>, transform_indices = @transform_2, window_bounds = array<i64: 1, 96>}, {pipeline_mode = #tpu.pipeline_mode<synchronous>, transform_indices = @transform_3, window_bounds = array<i64: 32, 32>}, {pipeline_mode = #tpu.pipeline_mode<synchronous>, transform_indices = @transform_4, window_bounds = array<i64: 1, 32>}, {pipeline_mode = #tpu.pipeline_mode<synchronous>, transform_indices = @transform_5, window_bounds = array<i64: 1, 32>}, {pipeline_mode = #tpu.pipeline_mode<synchronous>, transform_indices = @transform_6, window_bounds = array<i64: 1, 32>}, {pipeline_mode = #tpu.pipeline_mode<synchronous>, transform_indices = @transform_7, window_bounds = array<i64: 32, 64>}, {pipeline_mode = #tpu.pipeline_mode<synchronous>, transform_indices = @transform_8, window_bounds = array<i64: 1, 64>}, {pipeline_mode = #tpu.pipeline_mode<synchronous>, transform_indices = @transform_9, window_bounds = array<i64: 64, 32>}, {pipeline_mode = #tpu.pipeline_mode<synchronous>, transform_indices = @transform_10, window_bounds = array<i64: 1, 32>}, {pipeline_mode = #tpu.pipeline_mode<synchronous>, transform_indices = @transform_11, window_bounds = array<i64: 1, 32>}, {pipeline_mode = #tpu.pipeline_mode<synchronous>, transform_indices = @transform_12, window_bounds = array<i64: 1, 32>}, {transform_indices = @transform_13, window_bounds = array<i64: 1, 8, 32>}]} {
    %c0 = arith.constant 0 : index
    %c0_0 = arith.constant 0 : index
    %c0_1 = arith.constant 0 : index
    %0 = vector.load %arg1[%c0, %c0_0, %c0_1] : memref<1x8x32xf32, #tpu.memory_space<vmem>>, vector<1x8x32xf32>
    %1 = vector.shape_cast %0 : vector<1x8x32xf32> to vector<8x32xf32>
    %c0_2 = arith.constant 0 : index
    %c0_3 = arith.constant 0 : index
    %2 = vector.load %arg2[%c0_2, %c0_3] : memref<32x96xf32, #tpu.memory_space<vmem>>, vector<32x96xf32>
    %cst = arith.constant dense<0.000000e+00> : vector<8x96xf32>
    %3 = tpu.matmul %1, %2, %cst {dimension_numbers = #tpu.dot_dimension_numbers<[1], [0], [0], [1], [0, 0, 1, 1], [], []>} : vector<8x32xf32>, vector<32x96xf32>, vector<8x96xf32> -> vector<8x96xf32>
    %c0_4 = arith.constant 0 : index
    %c0_5 = arith.constant 0 : index
    %4 = vector.load %arg3[%c0_4, %c0_5] : memref<1x96xf32, #tpu.memory_space<vmem>>, vector<1x96xf32>
    %5 = vector.broadcast %4 : vector<1x96xf32> to vector<8x96xf32>
    %6 = arith.addf %3, %5 : vector<8x96xf32>
    %cst_6 = arith.constant 0.000000e+00 : f32
    %7 = vector.broadcast %cst_6 : f32 to vector<8x32xf32>
    %8 = vector.extract_strided_slice %6 {offsets = [0, 0], sizes = [8, 8], strides = [1, 1]} : vector<8x96xf32> to vector<8x8xf32>
    %9 = vector.extract_strided_slice %6 {offsets = [0, 32], sizes = [8, 8], strides = [1, 1]} : vector<8x96xf32> to vector<8x8xf32>
    %10 = vector.extract_strided_slice %6 {offsets = [0, 64], sizes = [8, 8], strides = [1, 1]} : vector<8x96xf32> to vector<8x8xf32>
    %cst_7 = arith.constant dense<0.000000e+00> : vector<8x8xf32>
    %11 = tpu.matmul %8, %9, %cst_7 {dimension_numbers = #tpu.dot_dimension_numbers<[1], [1], [0], [0], [0, 0, 1, 0], [], []>} : vector<8x8xf32>, vector<8x8xf32>, vector<8x8xf32> -> vector<8x8xf32>
    %cst_8 = arith.constant 0.353553385 : f32
    %12 = vector.broadcast %cst_8 : f32 to vector<8x8xf32>
    %13 = arith.mulf %11, %12 : vector<8x8xf32>
    %cst_9 = arith.constant dense<0xFF800000> : vector<8xf32>
    %14 = vector.multi_reduction <maximumf>, %13, %cst_9 [1] : vector<8x8xf32> to vector<8xf32>
    %15 = vector.shape_cast %14 : vector<8xf32> to vector<8x1xf32>
    %16 = vector.broadcast %15 : vector<8x1xf32> to vector<8x8xf32>
    %17 = arith.subf %13, %16 : vector<8x8xf32>
    %18 = math.exp %17 : vector<8x8xf32>
    %cst_10 = arith.constant dense<0.000000e+00> : vector<8xf32>
    %19 = vector.multi_reduction <add>, %18, %cst_10 [1] : vector<8x8xf32> to vector<8xf32>
    %20 = vector.shape_cast %19 : vector<8xf32> to vector<8x1xf32>
    %21 = tpu.reciprocal %20 {approx = true} : vector<8x1xf32> -> vector<8x1xf32>
    %22 = vector.broadcast %21 : vector<8x1xf32> to vector<8x8xf32>
    %23 = arith.mulf %18, %22 : vector<8x8xf32>
    %cst_11 = arith.constant dense<0.000000e+00> : vector<8x8xf32>
    %24 = tpu.matmul %23, %10, %cst_11 {dimension_numbers = #tpu.dot_dimension_numbers<[1], [0], [0], [1], [0, 0, 1, 1], [], []>} : vector<8x8xf32>, vector<8x8xf32>, vector<8x8xf32> -> vector<8x8xf32>
    %c0_12 = arith.constant 0 : index
    %c0_13 = arith.constant 0 : index
    %25 = vector.load %arg4[%c0_12, %c0_13] : memref<32x32xf32, #tpu.memory_space<vmem>>, vector<8x32xf32>
    %cst_14 = arith.constant dense<0.000000e+00> : vector<8x32xf32>
    %26 = tpu.matmul %24, %25, %cst_14 {dimension_numbers = #tpu.dot_dimension_numbers<[1], [0], [0], [1], [0, 0, 1, 1], [], []>} : vector<8x8xf32>, vector<8x32xf32>, vector<8x32xf32> -> vector<8x32xf32>
    %27 = arith.addf %7, %26 : vector<8x32xf32>
    %28 = vector.extract_strided_slice %6 {offsets = [0, 8], sizes = [8, 8], strides = [1, 1]} : vector<8x96xf32> to vector<8x8xf32>
    %29 = vector.extract_strided_slice %6 {offsets = [0, 40], sizes = [8, 8], strides = [1, 1]} : vector<8x96xf32> to vector<8x8xf32>
    %30 = vector.extract_strided_slice %6 {offsets = [0, 72], sizes = [8, 8], strides = [1, 1]} : vector<8x96xf32> to vector<8x8xf32>
    %cst_15 = arith.constant dense<0.000000e+00> : vector<8x8xf32>
    %31 = tpu.matmul %28, %29, %cst_15 {dimension_numbers = #tpu.dot_dimension_numbers<[1], [1], [0], [0], [0, 0, 1, 0], [], []>} : vector<8x8xf32>, vector<8x8xf32>, vector<8x8xf32> -> vector<8x8xf32>
    %cst_16 = arith.constant 0.353553385 : f32
    %32 = vector.broadcast %cst_16 : f32 to vector<8x8xf32>
    %33 = arith.mulf %31, %32 : vector<8x8xf32>
    %cst_17 = arith.constant dense<0xFF800000> : vector<8xf32>
    %34 = vector.multi_reduction <maximumf>, %33, %cst_17 [1] : vector<8x8xf32> to vector<8xf32>
    %35 = vector.shape_cast %34 : vector<8xf32> to vector<8x1xf32>
    %36 = vector.broadcast %35 : vector<8x1xf32> to vector<8x8xf32>
    %37 = arith.subf %33, %36 : vector<8x8xf32>
    %38 = math.exp %37 : vector<8x8xf32>
    %cst_18 = arith.constant dense<0.000000e+00> : vector<8xf32>
    %39 = vector.multi_reduction <add>, %38, %cst_18 [1] : vector<8x8xf32> to vector<8xf32>
    %40 = vector.shape_cast %39 : vector<8xf32> to vector<8x1xf32>
    %41 = tpu.reciprocal %40 {approx = true} : vector<8x1xf32> -> vector<8x1xf32>
    %42 = vector.broadcast %41 : vector<8x1xf32> to vector<8x8xf32>
    %43 = arith.mulf %38, %42 : vector<8x8xf32>
    %cst_19 = arith.constant dense<0.000000e+00> : vector<8x8xf32>
    %44 = tpu.matmul %43, %30, %cst_19 {dimension_numbers = #tpu.dot_dimension_numbers<[1], [0], [0], [1], [0, 0, 1, 1], [], []>} : vector<8x8xf32>, vector<8x8xf32>, vector<8x8xf32> -> vector<8x8xf32>
    %c8 = arith.constant 8 : index
    %c0_20 = arith.constant 0 : index
    %45 = vector.load %arg4[%c8, %c0_20] : memref<32x32xf32, #tpu.memory_space<vmem>>, vector<8x32xf32>
    %cst_21 = arith.constant dense<0.000000e+00> : vector<8x32xf32>
    %46 = tpu.matmul %44, %45, %cst_21 {dimension_numbers = #tpu.dot_dimension_numbers<[1], [0], [0], [1], [0, 0, 1, 1], [], []>} : vector<8x8xf32>, vector<8x32xf32>, vector<8x32xf32> -> vector<8x32xf32>
    %47 = arith.addf %27, %46 : vector<8x32xf32>
    %48 = vector.extract_strided_slice %6 {offsets = [0, 16], sizes = [8, 8], strides = [1, 1]} : vector<8x96xf32> to vector<8x8xf32>
    %49 = vector.extract_strided_slice %6 {offsets = [0, 48], sizes = [8, 8], strides = [1, 1]} : vector<8x96xf32> to vector<8x8xf32>
    %50 = vector.extract_strided_slice %6 {offsets = [0, 80], sizes = [8, 8], strides = [1, 1]} : vector<8x96xf32> to vector<8x8xf32>
    %cst_22 = arith.constant dense<0.000000e+00> : vector<8x8xf32>
    %51 = tpu.matmul %48, %49, %cst_22 {dimension_numbers = #tpu.dot_dimension_numbers<[1], [1], [0], [0], [0, 0, 1, 0], [], []>} : vector<8x8xf32>, vector<8x8xf32>, vector<8x8xf32> -> vector<8x8xf32>
    %cst_23 = arith.constant 0.353553385 : f32
    %52 = vector.broadcast %cst_23 : f32 to vector<8x8xf32>
    %53 = arith.mulf %51, %52 : vector<8x8xf32>
    %cst_24 = arith.constant dense<0xFF800000> : vector<8xf32>
    %54 = vector.multi_reduction <maximumf>, %53, %cst_24 [1] : vector<8x8xf32> to vector<8xf32>
    %55 = vector.shape_cast %54 : vector<8xf32> to vector<8x1xf32>
    %56 = vector.broadcast %55 : vector<8x1xf32> to vector<8x8xf32>
    %57 = arith.subf %53, %56 : vector<8x8xf32>
    %58 = math.exp %57 : vector<8x8xf32>
    %cst_25 = arith.constant dense<0.000000e+00> : vector<8xf32>
    %59 = vector.multi_reduction <add>, %58, %cst_25 [1] : vector<8x8xf32> to vector<8xf32>
    %60 = vector.shape_cast %59 : vector<8xf32> to vector<8x1xf32>
    %61 = tpu.reciprocal %60 {approx = true} : vector<8x1xf32> -> vector<8x1xf32>
    %62 = vector.broadcast %61 : vector<8x1xf32> to vector<8x8xf32>
    %63 = arith.mulf %58, %62 : vector<8x8xf32>
    %cst_26 = arith.constant dense<0.000000e+00> : vector<8x8xf32>
    %64 = tpu.matmul %63, %50, %cst_26 {dimension_numbers = #tpu.dot_dimension_numbers<[1], [0], [0], [1], [0, 0, 1, 1], [], []>} : vector<8x8xf32>, vector<8x8xf32>, vector<8x8xf32> -> vector<8x8xf32>
    %c16 = arith.constant 16 : index
    %c0_27 = arith.constant 0 : index
    %65 = vector.load %arg4[%c16, %c0_27] : memref<32x32xf32, #tpu.memory_space<vmem>>, vector<8x32xf32>
    %cst_28 = arith.constant dense<0.000000e+00> : vector<8x32xf32>
    %66 = tpu.matmul %64, %65, %cst_28 {dimension_numbers = #tpu.dot_dimension_numbers<[1], [0], [0], [1], [0, 0, 1, 1], [], []>} : vector<8x8xf32>, vector<8x32xf32>, vector<8x32xf32> -> vector<8x32xf32>
    %67 = arith.addf %47, %66 : vector<8x32xf32>
    %68 = vector.extract_strided_slice %6 {offsets = [0, 24], sizes = [8, 8], strides = [1, 1]} : vector<8x96xf32> to vector<8x8xf32>
    %69 = vector.extract_strided_slice %6 {offsets = [0, 56], sizes = [8, 8], strides = [1, 1]} : vector<8x96xf32> to vector<8x8xf32>
    %70 = vector.extract_strided_slice %6 {offsets = [0, 88], sizes = [8, 8], strides = [1, 1]} : vector<8x96xf32> to vector<8x8xf32>
    %cst_29 = arith.constant dense<0.000000e+00> : vector<8x8xf32>
    %71 = tpu.matmul %68, %69, %cst_29 {dimension_numbers = #tpu.dot_dimension_numbers<[1], [1], [0], [0], [0, 0, 1, 0], [], []>} : vector<8x8xf32>, vector<8x8xf32>, vector<8x8xf32> -> vector<8x8xf32>
    %cst_30 = arith.constant 0.353553385 : f32
    %72 = vector.broadcast %cst_30 : f32 to vector<8x8xf32>
    %73 = arith.mulf %71, %72 : vector<8x8xf32>
    %cst_31 = arith.constant dense<0xFF800000> : vector<8xf32>
    %74 = vector.multi_reduction <maximumf>, %73, %cst_31 [1] : vector<8x8xf32> to vector<8xf32>
    %75 = vector.shape_cast %74 : vector<8xf32> to vector<8x1xf32>
    %76 = vector.broadcast %75 : vector<8x1xf32> to vector<8x8xf32>
    %77 = arith.subf %73, %76 : vector<8x8xf32>
    %78 = math.exp %77 : vector<8x8xf32>
    %cst_32 = arith.constant dense<0.000000e+00> : vector<8xf32>
    %79 = vector.multi_reduction <add>, %78, %cst_32 [1] : vector<8x8xf32> to vector<8xf32>
    %80 = vector.shape_cast %79 : vector<8xf32> to vector<8x1xf32>
    %81 = tpu.reciprocal %80 {approx = true} : vector<8x1xf32> -> vector<8x1xf32>
    %82 = vector.broadcast %81 : vector<8x1xf32> to vector<8x8xf32>
    %83 = arith.mulf %78, %82 : vector<8x8xf32>
    %cst_33 = arith.constant dense<0.000000e+00> : vector<8x8xf32>
    %84 = tpu.matmul %83, %70, %cst_33 {dimension_numbers = #tpu.dot_dimension_numbers<[1], [0], [0], [1], [0, 0, 1, 1], [], []>} : vector<8x8xf32>, vector<8x8xf32>, vector<8x8xf32> -> vector<8x8xf32>
    %c24 = arith.constant 24 : index
    %c0_34 = arith.constant 0 : index
    %85 = vector.load %arg4[%c24, %c0_34] : memref<32x32xf32, #tpu.memory_space<vmem>>, vector<8x32xf32>
    %cst_35 = arith.constant dense<0.000000e+00> : vector<8x32xf32>
    %86 = tpu.matmul %84, %85, %cst_35 {dimension_numbers = #tpu.dot_dimension_numbers<[1], [0], [0], [1], [0, 0, 1, 1], [], []>} : vector<8x8xf32>, vector<8x32xf32>, vector<8x32xf32> -> vector<8x32xf32>
    %87 = arith.addf %67, %86 : vector<8x32xf32>
    %c0_36 = arith.constant 0 : index
    %c0_37 = arith.constant 0 : index
    %88 = vector.load %arg5[%c0_36, %c0_37] : memref<1x32xf32, #tpu.memory_space<vmem>>, vector<1x32xf32>
    %89 = vector.broadcast %88 : vector<1x32xf32> to vector<8x32xf32>
    %90 = arith.addf %87, %89 : vector<8x32xf32>
    %91 = arith.addf %1, %90 : vector<8x32xf32>
    %cst_38 = arith.constant dense<0.000000e+00> : vector<8xf32>
    %92 = vector.multi_reduction <add>, %91, %cst_38 [1] : vector<8x32xf32> to vector<8xf32>
    %93 = vector.shape_cast %92 : vector<8xf32> to vector<8x1xf32>
    %cst_39 = arith.constant 3.200000e+01 : f32
    %94 = vector.broadcast %cst_39 : f32 to vector<8x1xf32>
    %95 = arith.divf %93, %94 : vector<8x1xf32>
    %96 = vector.broadcast %95 : vector<8x1xf32> to vector<8x32xf32>
    %97 = arith.subf %91, %96 : vector<8x32xf32>
    %98 = arith.mulf %97, %97 : vector<8x32xf32>
    %cst_40 = arith.constant dense<0.000000e+00> : vector<8xf32>
    %99 = vector.multi_reduction <add>, %98, %cst_40 [1] : vector<8x32xf32> to vector<8xf32>
    %100 = vector.shape_cast %99 : vector<8xf32> to vector<8x1xf32>
    %cst_41 = arith.constant 3.200000e+01 : f32
    %101 = vector.broadcast %cst_41 : f32 to vector<8x1xf32>
    %102 = arith.divf %100, %101 : vector<8x1xf32>
    %103 = vector.broadcast %95 : vector<8x1xf32> to vector<8x32xf32>
    %104 = arith.subf %91, %103 : vector<8x32xf32>
    %cst_42 = arith.constant 9.99999974E-6 : f32
    %105 = vector.broadcast %cst_42 : f32 to vector<8x1xf32>
    %106 = arith.addf %102, %105 : vector<8x1xf32>
    %107 = math.rsqrt %106 : vector<8x1xf32>
    %108 = vector.broadcast %107 : vector<8x1xf32> to vector<8x32xf32>
    %109 = arith.mulf %104, %108 : vector<8x32xf32>
    %c0_43 = arith.constant 0 : index
    %c0_44 = arith.constant 0 : index
    %110 = vector.load %arg6[%c0_43, %c0_44] : memref<1x32xf32, #tpu.memory_space<vmem>>, vector<1x32xf32>
    %111 = vector.broadcast %110 : vector<1x32xf32> to vector<8x32xf32>
    %112 = arith.mulf %109, %111 : vector<8x32xf32>
    %c0_45 = arith.constant 0 : index
    %c0_46 = arith.constant 0 : index
    %113 = vector.load %arg7[%c0_45, %c0_46] : memref<1x32xf32, #tpu.memory_space<vmem>>, vector<1x32xf32>
    %114 = vector.broadcast %113 : vector<1x32xf32> to vector<8x32xf32>
    %115 = arith.addf %112, %114 : vector<8x32xf32>
    %c0_47 = arith.constant 0 : index
    %c0_48 = arith.constant 0 : index
    %116 = vector.load %arg8[%c0_47, %c0_48] : memref<32x64xf32, #tpu.memory_space<vmem>>, vector<32x64xf32>
    %cst_49 = arith.constant dense<0.000000e+00> : vector<8x64xf32>
    %117 = tpu.matmul %115, %116, %cst_49 {dimension_numbers = #tpu.dot_dimension_numbers<[1], [0], [0], [1], [0, 0, 1, 1], [], []>} : vector<8x32xf32>, vector<32x64xf32>, vector<8x64xf32> -> vector<8x64xf32>
    %c0_50 = arith.constant 0 : index
    %c0_51 = arith.constant 0 : index
    %118 = vector.load %arg9[%c0_50, %c0_51] : memref<1x64xf32, #tpu.memory_space<vmem>>, vector<1x64xf32>
    %119 = vector.broadcast %118 : vector<1x64xf32> to vector<8x64xf32>
    %120 = arith.addf %117, %119 : vector<8x64xf32>
    %cst_52 = arith.constant 0.000000e+00 : f32
    %121 = vector.broadcast %cst_52 : f32 to vector<8x64xf32>
    %122 = arith.maximumf %120, %121 : vector<8x64xf32>
    %c0_53 = arith.constant 0 : index
    %c0_54 = arith.constant 0 : index
    %123 = vector.load %arg10[%c0_53, %c0_54] : memref<64x32xf32, #tpu.memory_space<vmem>>, vector<64x32xf32>
    %cst_55 = arith.constant dense<0.000000e+00> : vector<8x32xf32>
    %124 = tpu.matmul %122, %123, %cst_55 {dimension_numbers = #tpu.dot_dimension_numbers<[1], [0], [0], [1], [0, 0, 1, 1], [], []>} : vector<8x64xf32>, vector<64x32xf32>, vector<8x32xf32> -> vector<8x32xf32>
    %c0_56 = arith.constant 0 : index
    %c0_57 = arith.constant 0 : index
    %125 = vector.load %arg11[%c0_56, %c0_57] : memref<1x32xf32, #tpu.memory_space<vmem>>, vector<1x32xf32>
    %126 = vector.broadcast %125 : vector<1x32xf32> to vector<8x32xf32>
    %127 = arith.addf %124, %126 : vector<8x32xf32>
    %128 = arith.addf %115, %127 : vector<8x32xf32>
    %cst_58 = arith.constant dense<0.000000e+00> : vector<8xf32>
    %129 = vector.multi_reduction <add>, %128, %cst_58 [1] : vector<8x32xf32> to vector<8xf32>
    %130 = vector.shape_cast %129 : vector<8xf32> to vector<8x1xf32>
    %cst_59 = arith.constant 3.200000e+01 : f32
    %131 = vector.broadcast %cst_59 : f32 to vector<8x1xf32>
    %132 = arith.divf %130, %131 : vector<8x1xf32>
    %133 = vector.broadcast %132 : vector<8x1xf32> to vector<8x32xf32>
    %134 = arith.subf %128, %133 : vector<8x32xf32>
    %135 = arith.mulf %134, %134 : vector<8x32xf32>
    %cst_60 = arith.constant dense<0.000000e+00> : vector<8xf32>
    %136 = vector.multi_reduction <add>, %135, %cst_60 [1] : vector<8x32xf32> to vector<8xf32>
    %137 = vector.shape_cast %136 : vector<8xf32> to vector<8x1xf32>
    %cst_61 = arith.constant 3.200000e+01 : f32
    %138 = vector.broadcast %cst_61 : f32 to vector<8x1xf32>
    %139 = arith.divf %137, %138 : vector<8x1xf32>
    %140 = vector.broadcast %132 : vector<8x1xf32> to vector<8x32xf32>
    %141 = arith.subf %128, %140 : vector<8x32xf32>
    %cst_62 = arith.constant 9.99999974E-6 : f32
    %142 = vector.broadcast %cst_62 : f32 to vector<8x1xf32>
    %143 = arith.addf %139, %142 : vector<8x1xf32>
    %144 = math.rsqrt %143 : vector<8x1xf32>
    %145 = vector.broadcast %144 : vector<8x1xf32> to vector<8x32xf32>
    %146 = arith.mulf %141, %145 : vector<8x32xf32>
    %c0_63 = arith.constant 0 : index
    %c0_64 = arith.constant 0 : index
    %147 = vector.load %arg12[%c0_63, %c0_64] : memref<1x32xf32, #tpu.memory_space<vmem>>, vector<1x32xf32>
    %148 = vector.broadcast %147 : vector<1x32xf32> to vector<8x32xf32>
    %149 = arith.mulf %146, %148 : vector<8x32xf32>
    %c0_65 = arith.constant 0 : index
    %c0_66 = arith.constant 0 : index
    %150 = vector.load %arg13[%c0_65, %c0_66] : memref<1x32xf32, #tpu.memory_space<vmem>>, vector<1x32xf32>
    %151 = vector.broadcast %150 : vector<1x32xf32> to vector<8x32xf32>
    %152 = arith.addf %149, %151 : vector<8x32xf32>
    %c0_67 = arith.constant 0 : index
    %c0_68 = arith.constant 0 : index
    %c0_69 = arith.constant 0 : index
    %153 = vector.load %arg14[%c0_67, %c0_68, %c0_69] : memref<1x8x32xf32, #tpu.memory_space<vmem>>, vector<1x8x32xf32>
    %154 = vector.shape_cast %153 : vector<1x8x32xf32> to vector<8x32xf32>
    %155 = vector.shape_cast %152 : vector<8x32xf32> to vector<1x8x32xf32>
    tpu.vector_store %arg14[%c0_67, %c0_68, %c0_69], %155 {strides = array<i32>} : memref<1x8x32xf32, #tpu.memory_space<vmem>>, vector<1x8x32xf32>,
    return
  }
  func.func @transform_0(%arg0: i32) -> (i32, i32, i32) {
    %c0_i32 = arith.constant 0 : i32
    %c0_i32_0 = arith.constant 0 : i32
    %c0_i32_1 = arith.constant 0 : i32
    return %arg0, %c0_i32, %c0_i32_0 : i32, i32, i32
  }
  func.func @transform_1(%arg0: i32) -> (i32, i32) {
    %c0_i32 = arith.constant 0 : i32
    %c0_i32_0 = arith.constant 0 : i32
    %c0_i32_1 = arith.constant 0 : i32
    return %c0_i32, %c0_i32_0 : i32, i32
  }
  func.func @transform_2(%arg0: i32) -> (i32, i32) {
    %c0_i32 = arith.constant 0 : i32
    %c0_i32_0 = arith.constant 0 : i32
    %c0_i32_1 = arith.constant 0 : i32
    return %c0_i32, %c0_i32_0 : i32, i32
  }
  func.func @transform_3(%arg0: i32) -> (i32, i32) {
    %c0_i32 = arith.constant 0 : i32
    %c0_i32_0 = arith.constant 0 : i32
    %c0_i32_1 = arith.constant 0 : i32
    return %c0_i32, %c0_i32_0 : i32, i32
  }
  func.func @transform_4(%arg0: i32) -> (i32, i32) {
    %c0_i32 = arith.constant 0 : i32
    %c0_i32_0 = arith.constant 0 : i32
    %c0_i32_1 = arith.constant 0 : i32
    return %c0_i32, %c0_i32_0 : i32, i32
  }
  func.func @transform_5(%arg0: i32) -> (i32, i32) {
    %c0_i32 = arith.constant 0 : i32
    %c0_i32_0 = arith.constant 0 : i32
    %c0_i32_1 = arith.constant 0 : i32
    return %c0_i32, %c0_i32_0 : i32, i32
  }
  func.func @transform_6(%arg0: i32) -> (i32, i32) {
    %c0_i32 = arith.constant 0 : i32
    %c0_i32_0 = arith.constant 0 : i32
    %c0_i32_1 = arith.constant 0 : i32
    return %c0_i32, %c0_i32_0 : i32, i32
  }
  func.func @transform_7(%arg0: i32) -> (i32, i32) {
    %c0_i32 = arith.constant 0 : i32
    %c0_i32_0 = arith.constant 0 : i32
    %c0_i32_1 = arith.constant 0 : i32
    return %c0_i32, %c0_i32_0 : i32, i32
  }
  func.func @transform_8(%arg0: i32) -> (i32, i32) {
    %c0_i32 = arith.constant 0 : i32
    %c0_i32_0 = arith.constant 0 : i32
    %c0_i32_1 = arith.constant 0 : i32
    return %c0_i32, %c0_i32_0 : i32, i32
  }
  func.func @transform_9(%arg0: i32) -> (i32, i32) {
    %c0_i32 = arith.constant 0 : i32
    %c0_i32_0 = arith.constant 0 : i32
    %c0_i32_1 = arith.constant 0 : i32
    return %c0_i32, %c0_i32_0 : i32, i32
  }
  func.func @transform_10(%arg0: i32) -> (i32, i32) {
    %c0_i32 = arith.constant 0 : i32
    %c0_i32_0 = arith.constant 0 : i32
    %c0_i32_1 = arith.constant 0 : i32
    return %c0_i32, %c0_i32_0 : i32, i32
  }
  func.func @transform_11(%arg0: i32) -> (i32, i32) {
    %c0_i32 = arith.constant 0 : i32
    %c0_i32_0 = arith.constant 0 : i32
    %c0_i32_1 = arith.constant 0 : i32
    return %c0_i32, %c0_i32_0 : i32, i32
  }
  func.func @transform_12(%arg0: i32) -> (i32, i32) {
    %c0_i32 = arith.constant 0 : i32
    %c0_i32_0 = arith.constant 0 : i32
    %c0_i32_1 = arith.constant 0 : i32
    return %c0_i32, %c0_i32_0 : i32, i32
  }
  func.func @transform_13(%arg0: i32) -> (i32, i32, i32) {
    %c0_i32 = arith.constant 0 : i32
    %c0_i32_0 = arith.constant 0 : i32
    %c0_i32_1 = arith.constant 0 : i32
    return %arg0, %c0_i32, %c0_i32_0 : i32, i32, i32
  }
}

</mosaic_0001>

<llo_original>
// kernel: _lambda_.3
$region0: #{_lambda_.3}
  #allocation0 [shape = 'u32[]', space=smem, size = 0x4, offset = 0x4, fixed_abs, tag = 'smem constant byte address 0x4 - core index']
  #allocation1 [shape = 'u32[144,128]{1,0:T(1,128)}', space=vmem, size = 0x12000, scoped, tag = 'internal scratch']
  %s0 = inlined_call_operand.vmem [shape: f32[2,8,32], index: 0, kind: input, shape index: {}]
  %s1 = inlined_call_operand.vmem [shape: f32[32,96], index: 1, kind: input, shape index: {}]
  %s2 = inlined_call_operand.vmem [shape: f32[1,96], index: 2, kind: input, shape index: {}]
  %s3 = inlined_call_operand.vmem [shape: f32[32,32], index: 3, kind: input, shape index: {}]
  %s4 = inlined_call_operand.vmem [shape: f32[1,32], index: 4, kind: input, shape index: {}, may-alias: {4,6,10,12}]
  %s5 = inlined_call_operand.vmem [shape: f32[1,32], index: 5, kind: input, shape index: {}, may-alias: {5,11}]
  %s6 = inlined_call_operand.vmem [shape: f32[1,32], index: 6, kind: input, shape index: {}, may-alias: {4,6,10,12}]
  %s7 = inlined_call_operand.vmem [shape: f32[32,64], index: 7, kind: input, shape index: {}]
  %s8 = inlined_call_operand.vmem [shape: f32[1,64], index: 8, kind: input, shape index: {}]
  %s9 = inlined_call_operand.vmem [shape: f32[64,32], index: 9, kind: input, shape index: {}]
  %s10 = inlined_call_operand.vmem [shape: f32[1,32], index: 10, kind: input, shape index: {}, may-alias: {4,6,10,12}]
  %s11 = inlined_call_operand.vmem [shape: f32[1,32], index: 11, kind: input, shape index: {}, may-alias: {5,11}]
  %s12 = inlined_call_operand.vmem [shape: f32[1,32], index: 12, kind: input, shape index: {}, may-alias: {4,6,10,12}]
  %s13 = inlined_call_operand.hbm [shape: f32[2,8,32], index: 13, kind: output, shape index: {0}]
  %s14 = inlined_call_operand.hbm [shape: f32[2,4,8,8], index: 14, kind: output, shape index: {1}]
  %15 = xla_tuple %s13, %s14
  %s16 = sld [smem:[#allocation0]]
  $region93: #{_lambda_.3} parent=0
    _
  %s18 = ssub.s32 1, %s16
  %s19 = scalar_select 0, %s18, %s16
  $region1: #{_lambda_.3} parent=0
    #allocation2 [shape = 'u8[8192]{0}', space=vmem, size = 0x2000, scoped, tag = 'output window, operand 0']
    #allocation3 [shape = 's32[2]{0}', space=sflag, size = 0x8, scoped, tag = 'scoped memory for _lambda_.3']
    #allocation4 [shape = 'u8[32768]{0}', space=vmem, size = 0x8000, scoped, tag = 'output window, operand 1']
    #allocation5 [shape = 's32[2]{0}', space=sflag, size = 0x8, scoped, tag = 'scoped memory for _lambda_.3']
    %20 = vsyncpa [#allocation3], 0
    %s21 = scalar_lea.sflag [#allocation3], 1
    %22 = vsyncpa %s21, 0
    %23 = vsyncpa [#allocation5], 0
    %s24 = scalar_lea.sflag [#allocation5], 1
    %25 = vsyncpa %s24, 0
    loop: start=0, step=1, limit=4
    $region2: #{_lambda_.3} parent=1 // loop_pre_header
      _
    $region3: #{_lambda_.3} parent=1 // loop_header
      %s27 = sphi 0, %s31
      %p28 = scmp.ge.s32.totalorder %s27, 4
      %s37 = sphi 0, %s39
      %s40 = sphi 0, %s37
      %s41 = sphi 0, %s40
      %s57 = sphi 0, %s41
      %s61 = sphi 0, %s61
      %s63 = sphi 0, %s61
      %s64 = sphi 0, %s63
      %s78 = sphi 0, %s64
      %s82 = sphi 0, %s82
      %s84 = sphi 0, %s82
      %s85 = sphi 0, %s84
      %s99 = sphi 0, %s85
      %s103 = sphi 0, %s103
      %s105 = sphi 0, %s103
      %s106 = sphi 0, %s105
      %s120 = sphi 0, %s106
      %s124 = sphi 0, %s124
      %s126 = sphi 0, %s124
      %s127 = sphi 0, %s126
      %s141 = sphi 0, %s127
      %s145 = sphi 0, %s145
      %s147 = sphi 0, %s145
      %s148 = sphi 0, %s147
      %s162 = sphi 0, %s148
      %s166 = sphi 0, %s166
      %s168 = sphi 0, %s166
      %s169 = sphi 0, %s168
      %s183 = sphi 0, %s169
      %s187 = sphi 0, %s187
      %s189 = sphi 0, %s187
      %s190 = sphi 0, %s189
      %s204 = sphi 0, %s190
      %s208 = sphi 0, %s208
      %s210 = sphi 0, %s208
      %s211 = sphi 0, %s210
      %s225 = sphi 0, %s211
      %s229 = sphi 0, %s229
      %s231 = sphi 0, %s229
      %s232 = sphi 0, %s231
      %s246 = sphi 0, %s232
      %s250 = sphi 0, %s250
      %s252 = sphi 0, %s250
      %s253 = sphi 0, %s252
      %s267 = sphi 0, %s253
      %s271 = sphi 0, %s271
      %s273 = sphi 0, %s271
      %s274 = sphi 0, %s273
      %s288 = sphi 0, %s274
      %s292 = sphi 0, %s292
      %s294 = sphi 0, %s292
      %s295 = sphi 0, %s294
      %s309 = sphi 0, %s295
      %s315 = sphi 0, %s317
      %s318 = sphi 0, %s315
      %s319 = sphi 0, %s318
      %s335 = sphi 0, %s319
      %s341 = sphi 0, %s343
      %s344 = sphi 0, %s341
      %s345 = sphi 0, %s344
      %s361 = sphi 0, %s345
    $region4: #{_lambda_.3} parent=1 // loop_header_branch
      %30 = sbr.rel (%p28) target = $region8
    $region5: #{_lambda_.3} parent=1 // loop_body
      %s32 = ssub.s32 %s27, 1
      %s33 = ssub.s32 %s27, 2
      %s34 = sadd.s32 %s27, 1
      %s35 = ssub.s32 %s27, %s34
      %p36 = scmp.eq.s32.totalorder %s35, 0
      %s38 = sadd.s32 %s37, 1
      %s39 = scalar_select %p36, %s37, %s38
      %p42 = pneg %p36
      %p43 = scmp.eq.s32.totalorder %s27, 1
      %p44 = por %p42, %p43
      %p45 = scmp.ne.s32.totalorder %s37, %s40
      %p46 = scmp.eq.s32.totalorder %s27, 0
      %p47 = por %p45, %p46
      %p48 = scmp.ne.s32.totalorder %s37, %s40
      %p49 = scmp.eq.s32.totalorder %s32, 1
      %p50 = por %p48, %p49
      %p51 = scmp.ne.s32.totalorder %s40, %s41
      %p52 = scmp.eq.s32.totalorder %s32, 0
      %p53 = por %p51, %p52
      %p54 = scmp.ne.s32.totalorder %s40, %s41
      %p55 = scmp.eq.s32.totalorder %s33, 1
      %p56 = por %p54, %p55
      %p58 = scmp.ne.s32.totalorder %s41, %s57
      %p59 = scmp.eq.s32.totalorder %s33, 0
      %p60 = por %p58, %p59
      %s62 = sadd.s32 %s61, 1
      %p65 = scmp.eq.s32.totalorder %s27, 1
      %p66 = scmp.ne.s32.totalorder %s61, %s63
      %p67 = scmp.eq.s32.totalorder %s27, 0
      %p68 = por %p66, %p67
      %p69 = scmp.ne.s32.totalorder %s61, %s63
      %p70 = scmp.eq.s32.totalorder %s32, 1
      %p71 = por %p69, %p70
      %p72 = scmp.ne.s32.totalorder %s63, %s64
      %p73 = scmp.eq.s32.totalorder %s32, 0
      %p74 = por %p72, %p73
      %p75 = scmp.ne.s32.totalorder %s63, %s64
      %p76 = scmp.eq.s32.totalorder %s33, 1
      %p77 = por %p75, %p76
      %p79 = scmp.ne.s32.totalorder %s64, %s78
      %p80 = scmp.eq.s32.totalorder %s33, 0
      %p81 = por %p79, %p80
      %s83 = sadd.s32 %s82, 1
      %p86 = scmp.eq.s32.totalorder %s27, 1
      %p87 = scmp.ne.s32.totalorder %s82, %s84
      %p88 = scmp.eq.s32.totalorder %s27, 0
      %p89 = por %p87, %p88
      %p90 = scmp.ne.s32.totalorder %s82, %s84
      %p91 = scmp.eq.s32.totalorder %s32, 1
      %p92 = por %p90, %p91
      %p93 = scmp.ne.s32.totalorder %s84, %s85
      %p94 = scmp.eq.s32.totalorder %s32, 0
      %p95 = por %p93, %p94
      %p96 = scmp.ne.s32.totalorder %s84, %s85
      %p97 = scmp.eq.s32.totalorder %s33, 1
      %p98 = por %p96, %p97
      %p100 = scmp.ne.s32.totalorder %s85, %s99
      %p101 = scmp.eq.s32.totalorder %s33, 0
      %p102 = por %p100, %p101
      %s104 = sadd.s32 %s103, 1
      %p107 = scmp.eq.s32.totalorder %s27, 1
      %p108 = scmp.ne.s32.totalorder %s103, %s105
      %p109 = scmp.eq.s32.totalorder %s27, 0
      %p110 = por %p108, %p109
      %p111 = scmp.ne.s32.totalorder %s103, %s105
      %p112 = scmp.eq.s32.totalorder %s32, 1
      %p113 = por %p111, %p112
      %p114 = scmp.ne.s32.totalorder %s105, %s106
      %p115 = scmp.eq.s32.totalorder %s32, 0
      %p116 = por %p114, %p115
      %p117 = scmp.ne.s32.totalorder %s105, %s106
      %p118 = scmp.eq.s32.totalorder %s33, 1
      %p119 = por %p117, %p118
      %p121 = scmp.ne.s32.totalorder %s106, %s120
      %p122 = scmp.eq.s32.totalorder %s33, 0
      %p123 = por %p121, %p122
      %s125 = sadd.s32 %s124, 1
      %p128 = scmp.eq.s32.totalorder %s27, 1
      %p129 = scmp.ne.s32.totalorder %s124, %s126
      %p130 = scmp.eq.s32.totalorder %s27, 0
      %p131 = por %p129, %p130
      %p132 = scmp.ne.s32.totalorder %s124, %s126
      %p133 = scmp.eq.s32.totalorder %s32, 1
      %p134 = por %p132, %p133
      %p135 = scmp.ne.s32.totalorder %s126, %s127
      %p136 = scmp.eq.s32.totalorder %s32, 0
      %p137 = por %p135, %p136
      %p138 = scmp.ne.s32.totalorder %s126, %s127
      %p139 = scmp.eq.s32.totalorder %s33, 1
      %p140 = por %p138, %p139
      %p142 = scmp.ne.s32.totalorder %s127, %s141
      %p143 = scmp.eq.s32.totalorder %s33, 0
      %p144 = por %p142, %p143
      %s146 = sadd.s32 %s145, 1
      %p149 = scmp.eq.s32.totalorder %s27, 1
      %p150 = scmp.ne.s32.totalorder %s145, %s147
      %p151 = scmp.eq.s32.totalorder %s27, 0
      %p152 = por %p150, %p151
      %p153 = scmp.ne.s32.totalorder %s145, %s147
      %p154 = scmp.eq.s32.totalorder %s32, 1
      %p155 = por %p153, %p154
      %p156 = scmp.ne.s32.totalorder %s147, %s148
      %p157 = scmp.eq.s32.totalorder %s32, 0
      %p158 = por %p156, %p157
      %p159 = scmp.ne.s32.totalorder %s147, %s148
      %p160 = scmp.eq.s32.totalorder %s33, 1
      %p161 = por %p159, %p160
      %p163 = scmp.ne.s32.totalorder %s148, %s162
      %p164 = scmp.eq.s32.totalorder %s33, 0
      %p165 = por %p163, %p164
      %s167 = sadd.s32 %s166, 1
      %p170 = scmp.eq.s32.totalorder %s27, 1
      %p171 = scmp.ne.s32.totalorder %s166, %s168
      %p172 = scmp.eq.s32.totalorder %s27, 0
      %p173 = por %p171, %p172
      %p174 = scmp.ne.s32.totalorder %s166, %s168
      %p175 = scmp.eq.s32.totalorder %s32, 1
      %p176 = por %p174, %p175
      %p177 = scmp.ne.s32.totalorder %s168, %s169
      %p178 = scmp.eq.s32.totalorder %s32, 0
      %p179 = por %p177, %p178
      %p180 = scmp.ne.s32.totalorder %s168, %s169
      %p181 = scmp.eq.s32.totalorder %s33, 1
      %p182 = por %p180, %p181
      %p184 = scmp.ne.s32.totalorder %s169, %s183
      %p185 = scmp.eq.s32.totalorder %s33, 0
      %p186 = por %p184, %p185
      %s188 = sadd.s32 %s187, 1
      %p191 = scmp.eq.s32.totalorder %s27, 1
      %p192 = scmp.ne.s32.totalorder %s187, %s189
      %p193 = scmp.eq.s32.totalorder %s27, 0
      %p194 = por %p192, %p193
      %p195 = scmp.ne.s32.totalorder %s187, %s189
      %p196 = scmp.eq.s32.totalorder %s32, 1
      %p197 = por %p195, %p196
      %p198 = scmp.ne.s32.totalorder %s189, %s190
      %p199 = scmp.eq.s32.totalorder %s32, 0
      %p200 = por %p198, %p199
      %p201 = scmp.ne.s32.totalorder %s189, %s190
      %p202 = scmp.eq.s32.totalorder %s33, 1
      %p203 = por %p201, %p202
      %p205 = scmp.ne.s32.totalorder %s190, %s204
      %p206 = scmp.eq.s32.totalorder %s33, 0
      %p207 = por %p205, %p206
      %s209 = sadd.s32 %s208, 1
      %p212 = scmp.eq.s32.totalorder %s27, 1
      %p213 = scmp.ne.s32.totalorder %s208, %s210
      %p214 = scmp.eq.s32.totalorder %s27, 0
      %p215 = por %p213, %p214
      %p216 = scmp.ne.s32.totalorder %s208, %s210
      %p217 = scmp.eq.s32.totalorder %s32, 1
      %p218 = por %p216, %p217
      %p219 = scmp.ne.s32.totalorder %s210, %s211
      %p220 = scmp.eq.s32.totalorder %s32, 0
      %p221 = por %p219, %p220
      %p222 = scmp.ne.s32.totalorder %s210, %s211
      %p223 = scmp.eq.s32.totalorder %s33, 1
      %p224 = por %p222, %p223
      %p226 = scmp.ne.s32.totalorder %s211, %s225
      %p227 = scmp.eq.s32.totalorder %s33, 0
      %p228 = por %p226, %p227
      %s230 = sadd.s32 %s229, 1
      %p233 = scmp.eq.s32.totalorder %s27, 1
      %p234 = scmp.ne.s32.totalorder %s229, %s231
      %p235 = scmp.eq.s32.totalorder %s27, 0
      %p236 = por %p234, %p235
      %p237 = scmp.ne.s32.totalorder %s229, %s231
      %p238 = scmp.eq.s32.totalorder %s32, 1
      %p239 = por %p237, %p238
      %p240 = scmp.ne.s32.totalorder %s231, %s232
      %p241 = scmp.eq.s32.totalorder %s32, 0
      %p242 = por %p240, %p241
      %p243 = scmp.ne.s32.totalorder %s231, %s232
      %p244 = scmp.eq.s32.totalorder %s33, 1
      %p245 = por %p243, %p244
      %p247 = scmp.ne.s32.totalorder %s232, %s246
      %p248 = scmp.eq.s32.totalorder %s33, 0
      %p249 = por %p247, %p248
      %s251 = sadd.s32 %s250, 1
      %p254 = scmp.eq.s32.totalorder %s27, 1
      %p255 = scmp.ne.s32.totalorder %s250, %s252
      %p256 = scmp.eq.s32.totalorder %s27, 0
      %p257 = por %p255, %p256
      %p258 = scmp.ne.s32.totalorder %s250, %s252
      %p259 = scmp.eq.s32.totalorder %s32, 1
      %p260 = por %p258, %p259
      %p261 = scmp.ne.s32.totalorder %s252, %s253
      %p262 = scmp.eq.s32.totalorder %s32, 0
      %p263 = por %p261, %p262
      %p264 = scmp.ne.s32.totalorder %s252, %s253
      %p265 = scmp.eq.s32.totalorder %s33, 1
      %p266 = por %p264, %p265
      %p268 = scmp.ne.s32.totalorder %s253, %s267
      %p269 = scmp.eq.s32.totalorder %s33, 0
      %p270 = por %p268, %p269
      %s272 = sadd.s32 %s271, 1
      %p275 = scmp.eq.s32.totalorder %s27, 1
      %p276 = scmp.ne.s32.totalorder %s271, %s273
      %p277 = scmp.eq.s32.totalorder %s27, 0
      %p278 = por %p276, %p277
      %p279 = scmp.ne.s32.totalorder %s271, %s273
      %p280 = scmp.eq.s32.totalorder %s32, 1
      %p281 = por %p279, %p280
      %p282 = scmp.ne.s32.totalorder %s273, %s274
      %p283 = scmp.eq.s32.totalorder %s32, 0
      %p284 = por %p282, %p283
      %p285 = scmp.ne.s32.totalorder %s273, %s274
      %p286 = scmp.eq.s32.totalorder %s33, 1
      %p287 = por %p285, %p286
      %p289 = scmp.ne.s32.totalorder %s274, %s288
      %p290 = scmp.eq.s32.totalorder %s33, 0
      %p291 = por %p289, %p290
      %s293 = sadd.s32 %s292, 1
      %p296 = scmp.eq.s32.totalorder %s27, 1
      %p297 = scmp.ne.s32.totalorder %s292, %s294
      %p298 = scmp.eq.s32.totalorder %s27, 0
      %p299 = por %p297, %p298
      %p300 = scmp.ne.s32.totalorder %s292, %s294
      %p301 = scmp.eq.s32.totalorder %s32, 1
      %p302 = por %p300, %p301
      %p303 = scmp.ne.s32.totalorder %s294, %s295
      %p304 = scmp.eq.s32.totalorder %s32, 0
      %p305 = por %p303, %p304
      %p306 = scmp.ne.s32.totalorder %s294, %s295
      %p307 = scmp.eq.s32.totalorder %s33, 1
      %p308 = por %p306, %p307
      %p310 = scmp.ne.s32.totalorder %s295, %s309
      %p311 = scmp.eq.s32.totalorder %s33, 0
      %p312 = por %p310, %p311
      %s313 = ssub.s32 %s27, %s34
      %p314 = scmp.eq.s32.totalorder %s313, 0
      %s316 = sadd.s32 %s315, 1
      %s317 = scalar_select %p314, %s315, %s316
      %p320 = pneg %p314
      %p321 = scmp.eq.s32.totalorder %s27, 1
      %p322 = por %p320, %p321
      %p323 = scmp.ne.s32.totalorder %s315, %s318
      %p324 = scmp.eq.s32.totalorder %s27, 0
      %p325 = por %p323, %p324
      %p326 = scmp.ne.s32.totalorder %s315, %s318
      %p327 = scmp.eq.s32.totalorder %s32, 1
      %p328 = por %p326, %p327
      %p329 = scmp.ne.s32.totalorder %s318, %s319
      %p330 = scmp.eq.s32.totalorder %s32, 0
      %p331 = por %p329, %p330
      %p332 = scmp.ne.s32.totalorder %s318, %s319
      %p333 = scmp.eq.s32.totalorder %s33, 1
      %p334 = por %p332, %p333
      %p336 = scmp.ne.s32.totalorder %s319, %s335
      %p337 = scmp.eq.s32.totalorder %s33, 0
      %p338 = por %p336, %p337
      %s339 = ssub.s32 %s27, %s34
      %p340 = scmp.eq.s32.totalorder %s339, 0
      %s342 = sadd.s32 %s341, 1
      %s343 = scalar_select %p340, %s341, %s342
      %p346 = pneg %p340
      %p347 = scmp.eq.s32.totalorder %s27, 1
      %p348 = por %p346, %p347
      %p349 = scmp.ne.s32.totalorder %s341, %s344
      %p350 = scmp.eq.s32.totalorder %s27, 0
      %p351 = por %p349, %p350
      %p352 = scmp.ne.s32.totalorder %s341, %s344
      %p353 = scmp.eq.s32.totalorder %s32, 1
      %p354 = por %p352, %p353
      %p355 = scmp.ne.s32.totalorder %s344, %s345
      %p356 = scmp.eq.s32.totalorder %s32, 0
      %p357 = por %p355, %p356
      %p358 = scmp.ne.s32.totalorder %s344, %s345
      %p359 = scmp.eq.s32.totalorder %s33, 1
      %p360 = por %p358, %p359
      %p362 = scmp.ne.s32.totalorder %s345, %s361
      %p363 = scmp.eq.s32.totalorder %s33, 0
      %p364 = por %p362, %p363
      %p365 = scmp.le.s32.totalorder 1, %s27
      %p366 = scmp.lt.s32.totalorder %s27, 3
      %p367 = pnand %p365, %p366
      %p368 = pneg %p367
      // Predicated region
      $region9: #{_lambda_.3} parent=5 // pred_check
        _
      $region10: #{_lambda_.3} parent=5 // pred_check_branch
        %370 = sbr.rel (%p367) target = $region12
      $region11: #{_lambda_.3} parent=5 // pred_region
        %s371 = ssub.s32 %s27, 1
        // Predicated region
        $region13: #{_lambda_.3} parent=11 // pred_check
          %p372 = pneg %p74
        $region14: #{_lambda_.3} parent=11 // pred_check_branch
          %374 = sbr.rel (%p372) target = $region16
        $region15: #{_lambda_.3} parent=11 // pred_region
          _
        $region16: #{_lambda_.3} parent=11 // pred_fallthru
          _
        // Predicated region
        $region17: #{_lambda_.3} parent=11 // pred_check
          %p375 = pneg %p95
        $region18: #{_lambda_.3} parent=11 // pred_check_branch
          %377 = sbr.rel (%p375) target = $region20
        $region19: #{_lambda_.3} parent=11 // pred_region
          _
        $region20: #{_lambda_.3} parent=11 // pred_fallthru
          _
        // Predicated region
        $region21: #{_lambda_.3} parent=11 // pred_check
          %p378 = pneg %p116
        $region22: #{_lambda_.3} parent=11 // pred_check_branch
          %380 = sbr.rel (%p378) target = $region24
        $region23: #{_lambda_.3} parent=11 // pred_region
          _
        $region24: #{_lambda_.3} parent=11 // pred_fallthru
          _
        // Predicated region
        $region25: #{_lambda_.3} parent=11 // pred_check
          %p381 = pneg %p137
        $region26: #{_lambda_.3} parent=11 // pred_check_branch
          %383 = sbr.rel (%p381) target = $region28
        $region27: #{_lambda_.3} parent=11 // pred_region
          _
        $region28: #{_lambda_.3} parent=11 // pred_fallthru
          _
        // Predicated region
        $region29: #{_lambda_.3} parent=11 // pred_check
          %p384 = pneg %p158
        $region30: #{_lambda_.3} parent=11 // pred_check_branch
          %386 = sbr.rel (%p384) target = $region32
        $region31: #{_lambda_.3} parent=11 // pred_region
          _
        $region32: #{_lambda_.3} parent=11 // pred_fallthru
          _
        // Predicated region
        $region33: #{_lambda_.3} parent=11 // pred_check
          %p387 = pneg %p179
        $region34: #{_lambda_.3} parent=11 // pred_check_branch
          %389 = sbr.rel (%p387) target = $region36
        $region35: #{_lambda_.3} parent=11 // pred_region
          _
        $region36: #{_lambda_.3} parent=11 // pred_fallthru
          _
        // Predicated region
        $region37: #{_lambda_.3} parent=11 // pred_check
          %p390 = pneg %p200
        $region38: #{_lambda_.3} parent=11 // pred_check_branch
          %392 = sbr.rel (%p390) target = $region40
        $region39: #{_lambda_.3} parent=11 // pred_region
          _
        $region40: #{_lambda_.3} parent=11 // pred_fallthru
          _
        // Predicated region
        $region41: #{_lambda_.3} parent=11 // pred_check
          %p393 = pneg %p221
        $region42: #{_lambda_.3} parent=11 // pred_check_branch
          %395 = sbr.rel (%p393) target = $region44
        $region43: #{_lambda_.3} parent=11 // pred_region
          _
        $region44: #{_lambda_.3} parent=11 // pred_fallthru
          _
        // Predicated region
        $region45: #{_lambda_.3} parent=11 // pred_check
          %p396 = pneg %p242
        $region46: #{_lambda_.3} parent=11 // pred_check_branch
          %398 = sbr.rel (%p396) target = $region48
        $region47: #{_lambda_.3} parent=11 // pred_region
          _
        $region48: #{_lambda_.3} parent=11 // pred_fallthru
          _
        // Predicated region
        $region49: #{_lambda_.3} parent=11 // pred_check
          %p399 = pneg %p263
        $region50: #{_lambda_.3} parent=11 // pred_check_branch
          %401 = sbr.rel (%p399) target = $region52
        $region51: #{_lambda_.3} parent=11 // pred_region
          _
        $region52: #{_lambda_.3} parent=11 // pred_fallthru
          _
        // Predicated region
        $region53: #{_lambda_.3} parent=11 // pred_check
          %p402 = pneg %p284
        $region54: #{_lambda_.3} parent=11 // pred_check_branch
          %404 = sbr.rel (%p402) target = $region56
        $region55: #{_lambda_.3} parent=11 // pred_region
          _
        $region56: #{_lambda_.3} parent=11 // pred_fallthru
          _
        // Predicated region
        $region57: #{_lambda_.3} parent=11 // pred_check
          %p405 = pneg %p305
        $region58: #{_lambda_.3} parent=11 // pred_check_branch
          %407 = sbr.rel (%p405) target = $region60
        $region59: #{_lambda_.3} parent=11 // pred_region
          _
        $region60: #{_lambda_.3} parent=11 // pred_fallthru
          _
      $region12: #{_lambda_.3} parent=5 // pred_fallthru
        _
      %p408 = scmp.lt.s32.totalorder %s27, 2
      // Predicated region
      $region61: #{_lambda_.3} parent=5 // pred_check
        %p409 = pneg %p408
      $region62: #{_lambda_.3} parent=5 // pred_check_branch
        %411 = sbr.rel (%p409) target = $region64
      $region63: #{_lambda_.3} parent=5 // pred_region
        // Predicated region
        $region65: #{_lambda_.3} parent=63 // pred_check
          %p412 = pneg %p47
        $region66: #{_lambda_.3} parent=63 // pred_check_branch
          %414 = sbr.rel (%p412) target = $region68
        $region67: #{_lambda_.3} parent=63 // pred_region
          %p415 = scmp.lt.s32.totalorder %s27, 1
          %s416 = scalar_select %p415, %s27, 1
          %s417 = smul.addr %s416, 8
          %s418 = scalar_lea.vmem %s0, %s417
        $region68: #{_lambda_.3} parent=63 // pred_fallthru
          _
      $region64: #{_lambda_.3} parent=5 // pred_fallthru
        _
      %p419 = scmp.le.s32.totalorder 1, %s27
      %p420 = scmp.lt.s32.totalorder %s27, 3
      %p421 = pnand %p419, %p420
      %p422 = pneg %p421
      // Predicated region
      $region69: #{_lambda_.3} parent=5 // pred_check
        _
      $region70: #{_lambda_.3} parent=5 // pred_check_branch
        %424 = sbr.rel (%p421) target = $region72
      $region71: #{_lambda_.3} parent=5 // pred_region
        %s425 = ssub.s32 %s27, 1
        %p426 = scmp.lt.s32.totalorder %s32, 1
        %s427 = scalar_select %p426, %s32, 1
        %s428 = smul.addr %s427, 8
        %s429 = scalar_lea.vmem %s0, %s428
        %p430 = pneg %p53
        %p431 = pneg %p50
        %p432 = pneg %p74
        %p433 = pneg %p71
        %p434 = pneg %p95
        %p435 = pneg %p92
        %p436 = pneg %p116
        %p437 = pneg %p113
        %p438 = pneg %p137
        %p439 = pneg %p134
        %p440 = pneg %p158
        %p441 = pneg %p155
        %p442 = pneg %p179
        %p443 = pneg %p176
        %p444 = pneg %p200
        %p445 = pneg %p197
        %p446 = pneg %p221
        %p447 = pneg %p218
        %p448 = pneg %p242
        %p449 = pneg %p239
        %p450 = pneg %p263
        %p451 = pneg %p260
        %p452 = pneg %p284
        %p453 = pneg %p281
        %p454 = pneg %p305
        %p455 = pneg %p302
        %p456 = pneg %p331
        %p457 = pneg %p328
        %s458 = sand.u32 %s318, 1
        %s459 = scalar_lea.sflag [#allocation3], %s458
        %s460 = sand.u32 %s318, 1
        %s461 = smul.addr %s460, 8
        %s462 = scalar_lea.vmem [#allocation2], %s461
        %p463 = pneg %p357
        %p464 = pneg %p354
        %s465 = sand.u32 %s344, 1
        %s466 = scalar_lea.sflag [#allocation5], %s465
        %s467 = sand.u32 %s344, 1
        %s468 = smul.addr %s467, 32
        %s469 = scalar_lea.vmem [#allocation4], %s468
        %p470 = scmp.lt.s32.totalorder %s32, 1
        %s471 = scalar_select %p470, %s32, 1
        %s472 = smul.addr %s471, 8
        %s473 = scalar_lea.vmem %s0, %s472
        %v474 = vld [vmem:[%s473] sm:$0xff]
        %v475 = vld [vmem:[%s1] sm:$0xff]
        %v476 = vld [vmem:[%s1 + $0x8] sm:$0xff]
        %v477 = vld [vmem:[%s1 + $0x10] sm:$0xff]
        %v478 = vld [vmem:[%s1 + $0x18] sm:$0xff]
        %v479 = vld [vmem:[%s2] sm:$0x1]
        %v481 = vlaneseq
        %v482 = vshrl.u32 %v481, 7
        %v483 = vsub.s32 0, %v482
        %v484 = vrot.slane %v479, %v483
        %vm486 = vcmask 261120
        %v488 = vsel %vm486, %v474, 0
        %490 = vmatprep.subr.mxu0 0.0
        %491 = vmatpush1.msra.mxu0 %v475
        %492 = vmatprep.subr.mxu0 0.0
        %493 = vmatpush1.msra.mxu0 %v476
        %494 = vmatprep.subr.mxu0 0.0
        %495 = vmatpush1.msra.mxu0 %v477
        %496 = vmatprep.subr.mxu0 0.0
        %497 = vmatpush1.msra.mxu0 %v478
        %498 = vmatprep.subr.mxu0 0.0
        %499 = vmatpush1.msra.mxu0 0.0
        %500 = vmatprep.subr.mxu0 0.0
        %501 = vmatpush1.msra.mxu0 0.0
        %502 = vmatprep.subr.mxu0 0.0
        %503 = vmatpush1.msra.mxu0 0.0
        %504 = vmatprep.subr.mxu0 0.0
        %505 = vmatpush1.msra.mxu0 0.0
        %506 = vmatprep.subr.mxu0 0.0
        %507 = vmatpush1.msra.mxu0 0.0
        %508 = vmatprep.subr.mxu0 0.0
        %509 = vmatpush1.msra.mxu0 0.0
        %510 = vmatprep.subr.mxu0 0.0
        %511 = vmatpush1.msra.mxu0 0.0
        %512 = vmatprep.subr.mxu0 0.0
        %513 = vmatpush1.msra.mxu0 0.0
        %514 = vmatprep.subr.mxu0 0.0
        %515 = vmatpush1.msra.mxu0 0.0
        %516 = vmatprep.subr.mxu0 0.0
        %517 = vmatpush1.msra.mxu0 0.0
        %518 = vmatprep.subr.mxu0 0.0
        %519 = vmatpush1.msra.mxu0 0.0
        %520 = vmatprep.subr.mxu0 0.0
        %521 = vmatpush1.msra.mxu0 0.0
        %522 = vmatprep.subr.mxu0 0.0
        %523 = vmatpush1.msra.mxu0 0.0
        %524 = vmatprep.subr.mxu0 0.0
        %525 = vmatpush1.msra.mxu0 0.0
        %526 = vmatprep.subr.mxu0 0.0
        %527 = vmatpush1.msra.mxu0 0.0
        %528 = vmatprep.subr.mxu0 0.0
        %529 = vmatpush1.msra.mxu0 0.0
        %530 = vmatprep.subr.mxu0 0.0
        %531 = vmatpush1.msra.mxu0 0.0
        %532 = vmatprep.subr.mxu0 0.0
        %533 = vmatpush1.msra.mxu0 0.0
        %534 = vmatprep.subr.mxu0 0.0
        %535 = vmatpush1.msra.mxu0 0.0
        %536 = vmatprep.subr.mxu0 0.0
        %537 = vmatpush1.msra.mxu0 0.0
        %538 = vmatprep.subr.mxu0 0.0
        %539 = vmatpush1.msra.mxu0 0.0
        %540 = vmatprep.subr.mxu0 0.0
        %541 = vmatpush1.msra.mxu0 0.0
        %542 = vmatprep.subr.mxu0 0.0
        %543 = vmatpush1.msra.mxu0 0.0
        %544 = vmatprep.subr.mxu0 0.0
        %545 = vmatpush1.msra.mxu0 0.0
        %546 = vmatprep.subr.mxu0 0.0
        %547 = vmatpush1.msra.mxu0 0.0
        %548 = vmatprep.subr.mxu0 0.0
        %549 = vmatpush1.msra.mxu0 0.0
        %550 = vmatprep.subr.mxu0 0.0
        %551 = vmatpush1.msra.mxu0 0.0
        %552 = vmatprep.subr.mxu0 0.0
        %553 = vmatpush1.msra.mxu0 0.0
        %554 = vmatprep.mubr.f32.mxu0 0.0
        %555 = vmatmul.mubr.f32.gmra.mrb[0].mxu0 %v488
        %v556 = vpop.f32.mrb[0].mxu0
        %v557 = vadd.f32 %v484, %v556
        %v558 = vpop.f32.mrb[0].mxu0
        %559 = vdwg.mxu0
        %561 = vrot.lane.b32.xlu0 %v557, 96
        %v562 = vpop.permute.xlu0 %561
        %vm563 = vcmask 64512
        %v564 = vsel %vm563, %v557, 0
        %v566 = vsel %vm563, %v562, 0
        %568 = vmatprep.subr.mxu0 0.0
        %569 = vmatpush1.xpose.msra.mxu0 %v566
        %570 = vmatprep.subr.mxu0 0.0
        %571 = vmatpush1.xpose.msra.mxu0 0.0
        %572 = vmatprep.subr.mxu0 0.0
        %573 = vmatpush1.xpose.msra.mxu0 0.0
        %574 = vmatprep.subr.mxu0 0.0
        %575 = vmatpush1.xpose.msra.mxu0 0.0
        %576 = vmatprep.subr.mxu0 0.0
        %577 = vmatpush1.xpose.msra.mxu0 0.0
        %578 = vmatprep.subr.mxu0 0.0
        %579 = vmatpush1.xpose.msra.mxu0 0.0
        %580 = vmatprep.subr.mxu0 0.0
        %581 = vmatpush1.xpose.msra.mxu0 0.0
        %582 = vmatprep.subr.mxu0 0.0
        %583 = vmatpush1.xpose.msra.mxu0 0.0
        %584 = vmatprep.subr.mxu0 0.0
        %585 = vmatpush1.xpose.msra.mxu0 0.0
        %586 = vmatprep.subr.mxu0 0.0
        %587 = vmatpush1.xpose.msra.mxu0 0.0
        %588 = vmatprep.subr.mxu0 0.0
        %589 = vmatpush1.xpose.msra.mxu0 0.0
        %590 = vmatprep.subr.mxu0 0.0
        %591 = vmatpush1.xpose.msra.mxu0 0.0
        %592 = vmatprep.subr.mxu0 0.0
        %593 = vmatpush1.xpose.msra.mxu0 0.0
        %594 = vmatprep.subr.mxu0 0.0
        %595 = vmatpush1.xpose.msra.mxu0 0.0
        %596 = vmatprep.subr.mxu0 0.0
        %597 = vmatpush1.xpose.msra.mxu0 0.0
        %598 = vmatprep.subr.mxu0 0.0
        %599 = vmatpush1.xpose.msra.mxu0 0.0
        %600 = vmatprep.subr.mxu0 0.0
        %601 = vmatpush1.xpose.msra.mxu0 0.0
        %602 = vmatprep.subr.mxu0 0.0
        %603 = vmatpush1.xpose.msra.mxu0 0.0
        %604 = vmatprep.subr.mxu0 0.0
        %605 = vmatpush1.xpose.msra.mxu0 0.0
        %606 = vmatprep.subr.mxu0 0.0
        %607 = vmatpush1.xpose.msra.mxu0 0.0
        %608 = vmatprep.subr.mxu0 0.0
        %609 = vmatpush1.xpose.msra.mxu0 0.0
        %610 = vmatprep.subr.mxu0 0.0
        %611 = vmatpush1.xpose.msra.mxu0 0.0
        %612 = vmatprep.subr.mxu0 0.0
        %613 = vmatpush1.xpose.msra.mxu0 0.0
        %614 = vmatprep.subr.mxu0 0.0
        %615 = vmatpush1.xpose.msra.mxu0 0.0
        %616 = vmatprep.subr.mxu0 0.0
        %617 = vmatpush1.xpose.msra.mxu0 0.0
        %618 = vmatprep.subr.mxu0 0.0
        %619 = vmatpush1.xpose.msra.mxu0 0.0
        %620 = vmatprep.subr.mxu0 0.0
        %621 = vmatpush1.xpose.msra.mxu0 0.0
        %622 = vmatprep.subr.mxu0 0.0
        %623 = vmatpush1.xpose.msra.mxu0 0.0
        %624 = vmatprep.subr.mxu0 0.0
        %625 = vmatpush1.xpose.msra.mxu0 0.0
        %626 = vmatprep.subr.mxu0 0.0
        %627 = vmatpush1.xpose.msra.mxu0 0.0
        %628 = vmatprep.subr.mxu0 0.0
        %629 = vmatpush1.xpose.msra.mxu0 0.0
        %630 = vmatprep.subr.mxu0 0.0
        %631 = vmatpush1.xpose.msra.mxu0 0.0
        %632 = vmatprep.mubr.f32.mxu0 0.0
        %633 = vmatmul.mubr.f32.gmra.mrb[0].mxu0 %v564
        %v634 = vpop.f32.mrb[0].mxu0
        %v635 = vadd.f32 0.0, %v634
        %v636 = vpop.f32.mrb[0].mxu0
        %637 = vdwg.mxu0
        %v638 = vmul.f32 %v635, 0.35355338
        %v639 = vsel %vm563, %v638, -inf
        %640 = vmax.xlane.f32.xlu0 %v639
        %v641 = vpop.xlane.xlu0 %640
        %v642 = vsub.f32 %v638, %v641
        %v643 = vmul.f32 %v642, 1.442695
        %v644 = vpow.pop %v643
        %v645 = vsel %vm563, %v644, 0.0
        %646 = vadd.xlane.f32.xlu0 %v645
        %v647 = vpop.xlane.xlu0 %646
        %v648 = vrcp.pop %v647
        %v649 = vmul.f32 %v644, %v648
        %650 = vst.msk [vmem:[%s469] sm:$0xff] %vm563, %v649
        %651 = vrot.lane.b32.xlu0 %v557, 64
        %v652 = vpop.permute.xlu0 %651
        %v655 = vsel %vm563, %v649, 0
        %657 = vmatprep.subr.mxu0 0.0
        %658 = vmatpush1.msra.mxu0 %v652
        %659 = vmatprep.subr.mxu0 0.0
        %660 = vmatpush1.msra.mxu0 0.0
        %661 = vmatprep.subr.mxu0 0.0
        %662 = vmatpush1.msra.mxu0 0.0
        %663 = vmatprep.subr.mxu0 0.0
        %664 = vmatpush1.msra.mxu0 0.0
        %665 = vmatprep.subr.mxu0 0.0
        %666 = vmatpush1.msra.mxu0 0.0
        %667 = vmatprep.subr.mxu0 0.0
        %668 = vmatpush1.msra.mxu0 0.0
        %669 = vmatprep.subr.mxu0 0.0
        %670 = vmatpush1.msra.mxu0 0.0
        %671 = vmatprep.subr.mxu0 0.0
        %672 = vmatpush1.msra.mxu0 0.0
        %673 = vmatprep.subr.mxu0 0.0
        %674 = vmatpush1.msra.mxu0 0.0
        %675 = vmatprep.subr.mxu0 0.0
        %676 = vmatpush1.msra.mxu0 0.0
        %677 = vmatprep.subr.mxu0 0.0
        %678 = vmatpush1.msra.mxu0 0.0
        %679 = vmatprep.subr.mxu0 0.0
        %680 = vmatpush1.msra.mxu0 0.0
        %681 = vmatprep.subr.mxu0 0.0
        %682 = vmatpush1.msra.mxu0 0.0
        %683 = vmatprep.subr.mxu0 0.0
        %684 = vmatpush1.msra.mxu0 0.0
        %685 = vmatprep.subr.mxu0 0.0
        %686 = vmatpush1.msra.mxu0 0.0
        %687 = vmatprep.subr.mxu0 0.0
        %688 = vmatpush1.msra.mxu0 0.0
        %689 = vmatprep.subr.mxu0 0.0
        %690 = vmatpush1.msra.mxu0 0.0
        %691 = vmatprep.subr.mxu0 0.0
        %692 = vmatpush1.msra.mxu0 0.0
        %693 = vmatprep.subr.mxu0 0.0
        %694 = vmatpush1.msra.mxu0 0.0
        %695 = vmatprep.subr.mxu0 0.0
        %696 = vmatpush1.msra.mxu0 0.0
        %697 = vmatprep.subr.mxu0 0.0
        %698 = vmatpush1.msra.mxu0 0.0
        %699 = vmatprep.subr.mxu0 0.0
        %700 = vmatpush1.msra.mxu0 0.0
        %701 = vmatprep.subr.mxu0 0.0
        %702 = vmatpush1.msra.mxu0 0.0
        %703 = vmatprep.subr.mxu0 0.0
        %704 = vmatpush1.msra.mxu0 0.0
        %705 = vmatprep.subr.mxu0 0.0
        %706 = vmatpush1.msra.mxu0 0.0
        %707 = vmatprep.subr.mxu0 0.0
        %708 = vmatpush1.msra.mxu0 0.0
        %709 = vmatprep.subr.mxu0 0.0
        %710 = vmatpush1.msra.mxu0 0.0
        %711 = vmatprep.subr.mxu0 0.0
        %712 = vmatpush1.msra.mxu0 0.0
        %713 = vmatprep.subr.mxu0 0.0
        %714 = vmatpush1.msra.mxu0 0.0
        %715 = vmatprep.subr.mxu0 0.0
        %716 = vmatpush1.msra.mxu0 0.0
        %717 = vmatprep.subr.mxu0 0.0
        %718 = vmatpush1.msra.mxu0 0.0
        %719 = vmatprep.subr.mxu0 0.0
        %720 = vmatpush1.msra.mxu0 0.0
        %721 = vmatprep.mubr.f32.mxu0 0.0
        %722 = vmatmul.mubr.f32.gmra.mrb[0].mxu0 %v655
        %v723 = vpop.f32.mrb[0].mxu0
        %v724 = vadd.f32 0.0, %v723
        %v725 = vpop.f32.mrb[0].mxu0
        %726 = vdwg.mxu0
        %v727 = vld [vmem:[%s3] sm:$0xff]
        %728 = vrot.lane.b32.xlu0 %v557, 120
        %v729 = vpop.permute.xlu0 %728
        %730 = vrot.lane.b32.xlu0 %v557, 88
        %v731 = vpop.permute.xlu0 %730
        %v732 = vsel %vm563, %v729, 0
        %v734 = vsel %vm563, %v731, 0
        %736 = vmatprep.subr.mxu0 0.0
        %737 = vmatpush1.xpose.msra.mxu0 %v734
        %738 = vmatprep.subr.mxu0 0.0
        %739 = vmatpush1.xpose.msra.mxu0 0.0
        %740 = vmatprep.subr.mxu0 0.0
        %741 = vmatpush1.xpose.msra.mxu0 0.0
        %742 = vmatprep.subr.mxu0 0.0
        %743 = vmatpush1.xpose.msra.mxu0 0.0
        %744 = vmatprep.subr.mxu0 0.0
        %745 = vmatpush1.xpose.msra.mxu0 0.0
        %746 = vmatprep.subr.mxu0 0.0
        %747 = vmatpush1.xpose.msra.mxu0 0.0
        %748 = vmatprep.subr.mxu0 0.0
        %749 = vmatpush1.xpose.msra.mxu0 0.0
        %750 = vmatprep.subr.mxu0 0.0
        %751 = vmatpush1.xpose.msra.mxu0 0.0
        %752 = vmatprep.subr.mxu0 0.0
        %753 = vmatpush1.xpose.msra.mxu0 0.0
        %754 = vmatprep.subr.mxu0 0.0
        %755 = vmatpush1.xpose.msra.mxu0 0.0
        %756 = vmatprep.subr.mxu0 0.0
        %757 = vmatpush1.xpose.msra.mxu0 0.0
        %758 = vmatprep.subr.mxu0 0.0
        %759 = vmatpush1.xpose.msra.mxu0 0.0
        %760 = vmatprep.subr.mxu0 0.0
        %761 = vmatpush1.xpose.msra.mxu0 0.0
        %762 = vmatprep.subr.mxu0 0.0
        %763 = vmatpush1.xpose.msra.mxu0 0.0
        %764 = vmatprep.subr.mxu0 0.0
        %765 = vmatpush1.xpose.msra.mxu0 0.0
        %766 = vmatprep.subr.mxu0 0.0
        %767 = vmatpush1.xpose.msra.mxu0 0.0
        %768 = vmatprep.subr.mxu0 0.0
        %769 = vmatpush1.xpose.msra.mxu0 0.0
        %770 = vmatprep.subr.mxu0 0.0
        %771 = vmatpush1.xpose.msra.mxu0 0.0
        %772 = vmatprep.subr.mxu0 0.0
        %773 = vmatpush1.xpose.msra.mxu0 0.0
        %774 = vmatprep.subr.mxu0 0.0
        %775 = vmatpush1.xpose.msra.mxu0 0.0
        %776 = vmatprep.subr.mxu0 0.0
        %777 = vmatpush1.xpose.msra.mxu0 0.0
        %778 = vmatprep.subr.mxu0 0.0
        %779 = vmatpush1.xpose.msra.mxu0 0.0
        %780 = vmatprep.subr.mxu0 0.0
        %781 = vmatpush1.xpose.msra.mxu0 0.0
        %782 = vmatprep.subr.mxu0 0.0
        %783 = vmatpush1.xpose.msra.mxu0 0.0
        %784 = vmatprep.subr.mxu0 0.0
        %785 = vmatpush1.xpose.msra.mxu0 0.0
        %786 = vmatprep.subr.mxu0 0.0
        %787 = vmatpush1.xpose.msra.mxu0 0.0
        %788 = vmatprep.subr.mxu0 0.0
        %789 = vmatpush1.xpose.msra.mxu0 0.0
        %790 = vmatprep.subr.mxu0 0.0
        %791 = vmatpush1.xpose.msra.mxu0 0.0
        %792 = vmatprep.subr.mxu0 0.0
        %793 = vmatpush1.xpose.msra.mxu0 0.0
        %794 = vmatprep.subr.mxu0 0.0
        %795 = vmatpush1.xpose.msra.mxu0 0.0
        %796 = vmatprep.subr.mxu0 0.0
        %797 = vmatpush1.xpose.msra.mxu0 0.0
        %798 = vmatprep.subr.mxu0 0.0
        %799 = vmatpush1.xpose.msra.mxu0 0.0
        %800 = vmatprep.mubr.f32.mxu0 0.0
        %801 = vmatmul.mubr.f32.gmra.mrb[0].mxu0 %v732
        %v802 = vpop.f32.mrb[0].mxu0
        %v803 = vadd.f32 0.0, %v802
        %v804 = vpop.f32.mrb[0].mxu0
        %805 = vdwg.mxu0
        %v806 = vmul.f32 %v803, 0.35355338
        %v807 = vsel %vm563, %v806, -inf
        %808 = vmax.xlane.f32.xlu0 %v807
        %v809 = vpop.xlane.xlu0 %808
        %v810 = vsub.f32 %v806, %v809
        %v811 = vmul.f32 %v810, 1.442695
        %v812 = vpow.pop %v811
        %v813 = vsel %vm563, %v812, 0.0
        %814 = vadd.xlane.f32.xlu0 %v813
        %v815 = vpop.xlane.xlu0 %814
        %v816 = vrcp.pop %v815
        %v817 = vmul.f32 %v812, %v816
        %s818 = scalar_lea.vmem %s469, 8 [#allocation4]
        %819 = vst.msk [vmem:[%s818] sm:$0xff] %vm563, %v817
        %820 = vrot.lane.b32.xlu0 %v557, 56
        %v821 = vpop.permute.xlu0 %820
        %v824 = vsel %vm563, %v817, 0
        %826 = vmatprep.subr.mxu0 0.0
        %827 = vmatpush1.msra.mxu0 %v821
        %828 = vmatprep.subr.mxu0 0.0
        %829 = vmatpush1.msra.mxu0 0.0
        %830 = vmatprep.subr.mxu0 0.0
        %831 = vmatpush1.msra.mxu0 0.0
        %832 = vmatprep.subr.mxu0 0.0
        %833 = vmatpush1.msra.mxu0 0.0
        %834 = vmatprep.subr.mxu0 0.0
        %835 = vmatpush1.msra.mxu0 0.0
        %836 = vmatprep.subr.mxu0 0.0
        %837 = vmatpush1.msra.mxu0 0.0
        %838 = vmatprep.subr.mxu0 0.0
        %839 = vmatpush1.msra.mxu0 0.0
        %840 = vmatprep.subr.mxu0 0.0
        %841 = vmatpush1.msra.mxu0 0.0
        %842 = vmatprep.subr.mxu0 0.0
        %843 = vmatpush1.msra.mxu0 0.0
        %844 = vmatprep.subr.mxu0 0.0
        %845 = vmatpush1.msra.mxu0 0.0
        %846 = vmatprep.subr.mxu0 0.0
        %847 = vmatpush1.msra.mxu0 0.0
        %848 = vmatprep.subr.mxu0 0.0
        %849 = vmatpush1.msra.mxu0 0.0
        %850 = vmatprep.subr.mxu0 0.0
        %851 = vmatpush1.msra.mxu0 0.0
        %852 = vmatprep.subr.mxu0 0.0
        %853 = vmatpush1.msra.mxu0 0.0
        %854 = vmatprep.subr.mxu0 0.0
        %855 = vmatpush1.msra.mxu0 0.0
        %856 = vmatprep.subr.mxu0 0.0
        %857 = vmatpush1.msra.mxu0 0.0
        %858 = vmatprep.subr.mxu0 0.0
        %859 = vmatpush1.msra.mxu0 0.0
        %860 = vmatprep.subr.mxu0 0.0
        %861 = vmatpush1.msra.mxu0 0.0
        %862 = vmatprep.subr.mxu0 0.0
        %863 = vmatpush1.msra.mxu0 0.0
        %864 = vmatprep.subr.mxu0 0.0
        %865 = vmatpush1.msra.mxu0 0.0
        %866 = vmatprep.subr.mxu0 0.0
        %867 = vmatpush1.msra.mxu0 0.0
        %868 = vmatprep.subr.mxu0 0.0
        %869 = vmatpush1.msra.mxu0 0.0
        %870 = vmatprep.subr.mxu0 0.0
        %871 = vmatpush1.msra.mxu0 0.0
        %872 = vmatprep.subr.mxu0 0.0
        %873 = vmatpush1.msra.mxu0 0.0
        %874 = vmatprep.subr.mxu0 0.0
        %875 = vmatpush1.msra.mxu0 0.0
        %876 = vmatprep.subr.mxu0 0.0
        %877 = vmatpush1.msra.mxu0 0.0
        %878 = vmatprep.subr.mxu0 0.0
        %879 = vmatpush1.msra.mxu0 0.0
        %880 = vmatprep.subr.mxu0 0.0
        %881 = vmatpush1.msra.mxu0 0.0
        %882 = vmatprep.subr.mxu0 0.0
        %883 = vmatpush1.msra.mxu0 0.0
        %884 = vmatprep.subr.mxu0 0.0
        %885 = vmatpush1.msra.mxu0 0.0
        %886 = vmatprep.subr.mxu0 0.0
        %887 = vmatpush1.msra.mxu0 0.0
        %888 = vmatprep.subr.mxu0 0.0
        %889 = vmatpush1.msra.mxu0 0.0
        %890 = vmatprep.mubr.f32.mxu0 0.0
        %891 = vmatmul.mubr.f32.gmra.mrb[0].mxu0 %v824
        %v892 = vpop.f32.mrb[0].mxu0
        %v893 = vadd.f32 0.0, %v892
        %v894 = vpop.f32.mrb[0].mxu0
        %895 = vdwg.mxu0
        %v896 = vld [vmem:[%s3 + $0x8] sm:$0xff]
        %v898 = vsel %vm563, %v893, 0
        %900 = vmatprep.subr.mxu0 0.0
        %901 = vmatpush1.msra.mxu0 %v896
        %902 = vmatprep.subr.mxu0 0.0
        %903 = vmatpush1.msra.mxu0 0.0
        %904 = vmatprep.subr.mxu0 0.0
        %905 = vmatpush1.msra.mxu0 0.0
        %906 = vmatprep.subr.mxu0 0.0
        %907 = vmatpush1.msra.mxu0 0.0
        %908 = vmatprep.subr.mxu0 0.0
        %909 = vmatpush1.msra.mxu0 0.0
        %910 = vmatprep.subr.mxu0 0.0
        %911 = vmatpush1.msra.mxu0 0.0
        %912 = vmatprep.subr.mxu0 0.0
        %913 = vmatpush1.msra.mxu0 0.0
        %914 = vmatprep.subr.mxu0 0.0
        %915 = vmatpush1.msra.mxu0 0.0
        %916 = vmatprep.subr.mxu0 0.0
        %917 = vmatpush1.msra.mxu0 0.0
        %918 = vmatprep.subr.mxu0 0.0
        %919 = vmatpush1.msra.mxu0 0.0
        %920 = vmatprep.subr.mxu0 0.0
        %921 = vmatpush1.msra.mxu0 0.0
        %922 = vmatprep.subr.mxu0 0.0
        %923 = vmatpush1.msra.mxu0 0.0
        %924 = vmatprep.subr.mxu0 0.0
        %925 = vmatpush1.msra.mxu0 0.0
        %926 = vmatprep.subr.mxu0 0.0
        %927 = vmatpush1.msra.mxu0 0.0
        %928 = vmatprep.subr.mxu0 0.0
        %929 = vmatpush1.msra.mxu0 0.0
        %930 = vmatprep.subr.mxu0 0.0
        %931 = vmatpush1.msra.mxu0 0.0
        %932 = vmatprep.subr.mxu0 0.0
        %933 = vmatpush1.msra.mxu0 0.0
        %934 = vmatprep.subr.mxu0 0.0
        %935 = vmatpush1.msra.mxu0 0.0
        %936 = vmatprep.subr.mxu0 0.0
        %937 = vmatpush1.msra.mxu0 0.0
        %938 = vmatprep.subr.mxu0 0.0
        %939 = vmatpush1.msra.mxu0 0.0
        %940 = vmatprep.subr.mxu0 0.0
        %941 = vmatpush1.msra.mxu0 0.0
        %942 = vmatprep.subr.mxu0 0.0
        %943 = vmatpush1.msra.mxu0 0.0
        %944 = vmatprep.subr.mxu0 0.0
        %945 = vmatpush1.msra.mxu0 0.0
        %946 = vmatprep.subr.mxu0 0.0
        %947 = vmatpush1.msra.mxu0 0.0
        %948 = vmatprep.subr.mxu0 0.0
        %949 = vmatpush1.msra.mxu0 0.0
        %950 = vmatprep.subr.mxu0 0.0
        %951 = vmatpush1.msra.mxu0 0.0
        %952 = vmatprep.subr.mxu0 0.0
        %953 = vmatpush1.msra.mxu0 0.0
        %954 = vmatprep.subr.mxu0 0.0
        %955 = vmatpush1.msra.mxu0 0.0
        %956 = vmatprep.subr.mxu0 0.0
        %957 = vmatpush1.msra.mxu0 0.0
        %958 = vmatprep.subr.mxu0 0.0
        %959 = vmatpush1.msra.mxu0 0.0
        %960 = vmatprep.subr.mxu0 0.0
        %961 = vmatpush1.msra.mxu0 0.0
        %962 = vmatprep.subr.mxu0 0.0
        %963 = vmatpush1.msra.mxu0 0.0
        %964 = vmatprep.mubr.f32.mxu0 0.0
        %965 = vmatmul.mubr.f32.gmra.mrb[0].mxu0 %v898
        %v966 = vpop.f32.mrb[0].mxu0
        %v967 = vadd.f32 0.0, %v966
        %v968 = vpop.f32.mrb[0].mxu0
        %969 = vdwg.mxu0
        %v971 = vsel %vm563, %v724, 0
        %973 = vmatprep.subr.mxu0 0.0
        %974 = vmatpush1.msra.mxu0 %v727
        %975 = vmatprep.subr.mxu0 0.0
        %976 = vmatpush1.msra.mxu0 0.0
        %977 = vmatprep.subr.mxu0 0.0
        %978 = vmatpush1.msra.mxu0 0.0
        %979 = vmatprep.subr.mxu0 0.0
        %980 = vmatpush1.msra.mxu0 0.0
        %981 = vmatprep.subr.mxu0 0.0
        %982 = vmatpush1.msra.mxu0 0.0
        %983 = vmatprep.subr.mxu0 0.0
        %984 = vmatpush1.msra.mxu0 0.0
        %985 = vmatprep.subr.mxu0 0.0
        %986 = vmatpush1.msra.mxu0 0.0
        %987 = vmatprep.subr.mxu0 0.0
        %988 = vmatpush1.msra.mxu0 0.0
        %989 = vmatprep.subr.mxu0 0.0
        %990 = vmatpush1.msra.mxu0 0.0
        %991 = vmatprep.subr.mxu0 0.0
        %992 = vmatpush1.msra.mxu0 0.0
        %993 = vmatprep.subr.mxu0 0.0
        %994 = vmatpush1.msra.mxu0 0.0
        %995 = vmatprep.subr.mxu0 0.0
        %996 = vmatpush1.msra.mxu0 0.0
        %997 = vmatprep.subr.mxu0 0.0
        %998 = vmatpush1.msra.mxu0 0.0
        %999 = vmatprep.subr.mxu0 0.0
        %1000 = vmatpush1.msra.mxu0 0.0
        %1001 = vmatprep.subr.mxu0 0.0
        %1002 = vmatpush1.msra.mxu0 0.0
        %1003 = vmatprep.subr.mxu0 0.0
        %1004 = vmatpush1.msra.mxu0 0.0
        %1005 = vmatprep.subr.mxu0 0.0
        %1006 = vmatpush1.msra.mxu0 0.0
        %1007 = vmatprep.subr.mxu0 0.0
        %1008 = vmatpush1.msra.mxu0 0.0
        %1009 = vmatprep.subr.mxu0 0.0
        %1010 = vmatpush1.msra.mxu0 0.0
        %1011 = vmatprep.subr.mxu0 0.0
        %1012 = vmatpush1.msra.mxu0 0.0
        %1013 = vmatprep.subr.mxu0 0.0
        %1014 = vmatpush1.msra.mxu0 0.0
        %1015 = vmatprep.subr.mxu0 0.0
        %1016 = vmatpush1.msra.mxu0 0.0
        %1017 = vmatprep.subr.mxu0 0.0
        %1018 = vmatpush1.msra.mxu0 0.0
        %1019 = vmatprep.subr.mxu0 0.0
        %1020 = vmatpush1.msra.mxu0 0.0
        %1021 = vmatprep.subr.mxu0 0.0
        %1022 = vmatpush1.msra.mxu0 0.0
        %1023 = vmatprep.subr.mxu0 0.0
        %1024 = vmatpush1.msra.mxu0 0.0
        %1025 = vmatprep.subr.mxu0 0.0
        %1026 = vmatpush1.msra.mxu0 0.0
        %1027 = vmatprep.subr.mxu0 0.0
        %1028 = vmatpush1.msra.mxu0 0.0
        %1029 = vmatprep.subr.mxu0 0.0
        %1030 = vmatpush1.msra.mxu0 0.0
        %1031 = vmatprep.subr.mxu0 0.0
        %1032 = vmatpush1.msra.mxu0 0.0
        %1033 = vmatprep.subr.mxu0 0.0
        %1034 = vmatpush1.msra.mxu0 0.0
        %1035 = vmatprep.subr.mxu0 0.0
        %1036 = vmatpush1.msra.mxu0 0.0
        %1037 = vmatprep.mubr.f32.mxu0 0.0
        %1038 = vmatmul.mubr.f32.gmra.mrb[0].mxu0 %v971
        %v1039 = vpop.f32.mrb[0].mxu0
        %v1040 = vadd.f32 %v967, %v1039
        %v1041 = vpop.f32.mrb[0].mxu0
        %1042 = vdwg.mxu0
        %1043 = vrot.lane.b32.xlu0 %v557, 112
        %v1044 = vpop.permute.xlu0 %1043
        %1045 = vrot.lane.b32.xlu0 %v557, 80
        %v1046 = vpop.permute.xlu0 %1045
        %v1047 = vsel %vm563, %v1044, 0
        %v1049 = vsel %vm563, %v1046, 0
        %1051 = vmatprep.subr.mxu0 0.0
        %1052 = vmatpush1.xpose.msra.mxu0 %v1049
        %1053 = vmatprep.subr.mxu0 0.0
        %1054 = vmatpush1.xpose.msra.mxu0 0.0
        %1055 = vmatprep.subr.mxu0 0.0
        %1056 = vmatpush1.xpose.msra.mxu0 0.0
        %1057 = vmatprep.subr.mxu0 0.0
        %1058 = vmatpush1.xpose.msra.mxu0 0.0
        %1059 = vmatprep.subr.mxu0 0.0
        %1060 = vmatpush1.xpose.msra.mxu0 0.0
        %1061 = vmatprep.subr.mxu0 0.0
        %1062 = vmatpush1.xpose.msra.mxu0 0.0
        %1063 = vmatprep.subr.mxu0 0.0
        %1064 = vmatpush1.xpose.msra.mxu0 0.0
        %1065 = vmatprep.subr.mxu0 0.0
        %1066 = vmatpush1.xpose.msra.mxu0 0.0
        %1067 = vmatprep.subr.mxu0 0.0
        %1068 = vmatpush1.xpose.msra.mxu0 0.0
        %1069 = vmatprep.subr.mxu0 0.0
        %1070 = vmatpush1.xpose.msra.mxu0 0.0
        %1071 = vmatprep.subr.mxu0 0.0
        %1072 = vmatpush1.xpose.msra.mxu0 0.0
        %1073 = vmatprep.subr.mxu0 0.0
        %1074 = vmatpush1.xpose.msra.mxu0 0.0
        %1075 = vmatprep.subr.mxu0 0.0
        %1076 = vmatpush1.xpose.msra.mxu0 0.0
        %1077 = vmatprep.subr.mxu0 0.0
        %1078 = vmatpush1.xpose.msra.mxu0 0.0
        %1079 = vmatprep.subr.mxu0 0.0
        %1080 = vmatpush1.xpose.msra.mxu0 0.0
        %1081 = vmatprep.subr.mxu0 0.0
        %1082 = vmatpush1.xpose.msra.mxu0 0.0
        %1083 = vmatprep.subr.mxu0 0.0
        %1084 = vmatpush1.xpose.msra.mxu0 0.0
        %1085 = vmatprep.subr.mxu0 0.0
        %1086 = vmatpush1.xpose.msra.mxu0 0.0
        %1087 = vmatprep.subr.mxu0 0.0
        %1088 = vmatpush1.xpose.msra.mxu0 0.0
        %1089 = vmatprep.subr.mxu0 0.0
        %1090 = vmatpush1.xpose.msra.mxu0 0.0
        %1091 = vmatprep.subr.mxu0 0.0
        %1092 = vmatpush1.xpose.msra.mxu0 0.0
        %1093 = vmatprep.subr.mxu0 0.0
        %1094 = vmatpush1.xpose.msra.mxu0 0.0
        %1095 = vmatprep.subr.mxu0 0.0
        %1096 = vmatpush1.xpose.msra.mxu0 0.0
        %1097 = vmatprep.subr.mxu0 0.0
        %1098 = vmatpush1.xpose.msra.mxu0 0.0
        %1099 = vmatprep.subr.mxu0 0.0
        %1100 = vmatpush1.xpose.msra.mxu0 0.0
        %1101 = vmatprep.subr.mxu0 0.0
        %1102 = vmatpush1.xpose.msra.mxu0 0.0
        %1103 = vmatprep.subr.mxu0 0.0
        %1104 = vmatpush1.xpose.msra.mxu0 0.0
        %1105 = vmatprep.subr.mxu0 0.0
        %1106 = vmatpush1.xpose.msra.mxu0 0.0
        %1107 = vmatprep.subr.mxu0 0.0
        %1108 = vmatpush1.xpose.msra.mxu0 0.0
        %1109 = vmatprep.subr.mxu0 0.0
        %1110 = vmatpush1.xpose.msra.mxu0 0.0
        %1111 = vmatprep.subr.mxu0 0.0
        %1112 = vmatpush1.xpose.msra.mxu0 0.0
        %1113 = vmatprep.subr.mxu0 0.0
        %1114 = vmatpush1.xpose.msra.mxu0 0.0
        %1115 = vmatprep.mubr.f32.mxu0 0.0
        %1116 = vmatmul.mubr.f32.gmra.mrb[0].mxu0 %v1047
        %v1117 = vpop.f32.mrb[0].mxu0
        %v1118 = vadd.f32 0.0, %v1117
        %v1119 = vpop.f32.mrb[0].mxu0
        %1120 = vdwg.mxu0
        %v1121 = vmul.f32 %v1118, 0.35355338
        %v1122 = vsel %vm563, %v1121, -inf
        %1123 = vmax.xlane.f32.xlu0 %v1122
        %v1124 = vpop.xlane.xlu0 %1123
        %v1125 = vsub.f32 %v1121, %v1124
        %v1126 = vmul.f32 %v1125, 1.442695
        %v1127 = vpow.pop %v1126
        %v1128 = vsel %vm563, %v1127, 0.0
        %1129 = vadd.xlane.f32.xlu0 %v1128
        %v1130 = vpop.xlane.xlu0 %1129
        %v1131 = vrcp.pop %v1130
        %v1132 = vmul.f32 %v1127, %v1131
        %s1133 = scalar_lea.vmem %s469, 16 [#allocation4]
        %1134 = vst.msk [vmem:[%s1133] sm:$0xff] %vm563, %v1132
        %1135 = vrot.lane.b32.xlu0 %v557, 48
        %v1136 = vpop.permute.xlu0 %1135
        %v1139 = vsel %vm563, %v1132, 0
        %1141 = vmatprep.subr.mxu0 0.0
        %1142 = vmatpush1.msra.mxu0 %v1136
        %1143 = vmatprep.subr.mxu0 0.0
        %1144 = vmatpush1.msra.mxu0 0.0
        %1145 = vmatprep.subr.mxu0 0.0
        %1146 = vmatpush1.msra.mxu0 0.0
        %1147 = vmatprep.subr.mxu0 0.0
        %1148 = vmatpush1.msra.mxu0 0.0
        %1149 = vmatprep.subr.mxu0 0.0
        %1150 = vmatpush1.msra.mxu0 0.0
        %1151 = vmatprep.subr.mxu0 0.0
        %1152 = vmatpush1.msra.mxu0 0.0
        %1153 = vmatprep.subr.mxu0 0.0
        %1154 = vmatpush1.msra.mxu0 0.0
        %1155 = vmatprep.subr.mxu0 0.0
        %1156 = vmatpush1.msra.mxu0 0.0
        %1157 = vmatprep.subr.mxu0 0.0
        %1158 = vmatpush1.msra.mxu0 0.0
        %1159 = vmatprep.subr.mxu0 0.0
        %1160 = vmatpush1.msra.mxu0 0.0
        %1161 = vmatprep.subr.mxu0 0.0
        %1162 = vmatpush1.msra.mxu0 0.0
        %1163 = vmatprep.subr.mxu0 0.0
        %1164 = vmatpush1.msra.mxu0 0.0
        %1165 = vmatprep.subr.mxu0 0.0
        %1166 = vmatpush1.msra.mxu0 0.0
        %1167 = vmatprep.subr.mxu0 0.0
        %1168 = vmatpush1.msra.mxu0 0.0
        %1169 = vmatprep.subr.mxu0 0.0
        %1170 = vmatpush1.msra.mxu0 0.0
        %1171 = vmatprep.subr.mxu0 0.0
        %1172 = vmatpush1.msra.mxu0 0.0
        %1173 = vmatprep.subr.mxu0 0.0
        %1174 = vmatpush1.msra.mxu0 0.0
        %1175 = vmatprep.subr.mxu0 0.0
        %1176 = vmatpush1.msra.mxu0 0.0
        %1177 = vmatprep.subr.mxu0 0.0
        %1178 = vmatpush1.msra.mxu0 0.0
        %1179 = vmatprep.subr.mxu0 0.0
        %1180 = vmatpush1.msra.mxu0 0.0
        %1181 = vmatprep.subr.mxu0 0.0
        %1182 = vmatpush1.msra.mxu0 0.0
        %1183 = vmatprep.subr.mxu0 0.0
        %1184 = vmatpush1.msra.mxu0 0.0
        %1185 = vmatprep.subr.mxu0 0.0
        %1186 = vmatpush1.msra.mxu0 0.0
        %1187 = vmatprep.subr.mxu0 0.0
        %1188 = vmatpush1.msra.mxu0 0.0
        %1189 = vmatprep.subr.mxu0 0.0
        %1190 = vmatpush1.msra.mxu0 0.0
        %1191 = vmatprep.subr.mxu0 0.0
        %1192 = vmatpush1.msra.mxu0 0.0
        %1193 = vmatprep.subr.mxu0 0.0
        %1194 = vmatpush1.msra.mxu0 0.0
        %1195 = vmatprep.subr.mxu0 0.0
        %1196 = vmatpush1.msra.mxu0 0.0
        %1197 = vmatprep.subr.mxu0 0.0
        %1198 = vmatpush1.msra.mxu0 0.0
        %1199 = vmatprep.subr.mxu0 0.0
        %1200 = vmatpush1.msra.mxu0 0.0
        %1201 = vmatprep.subr.mxu0 0.0
        %1202 = vmatpush1.msra.mxu0 0.0
        %1203 = vmatprep.subr.mxu0 0.0
        %1204 = vmatpush1.msra.mxu0 0.0
        %1205 = vmatprep.mubr.f32.mxu0 0.0
        %1206 = vmatmul.mubr.f32.gmra.mrb[0].mxu0 %v1139
        %v1207 = vpop.f32.mrb[0].mxu0
        %v1208 = vadd.f32 0.0, %v1207
        %v1209 = vpop.f32.mrb[0].mxu0
        %1210 = vdwg.mxu0
        %v1211 = vld [vmem:[%s3 + $0x10] sm:$0xff]
        %v1213 = vsel %vm563, %v1208, 0
        %1215 = vmatprep.subr.mxu0 0.0
        %1216 = vmatpush1.msra.mxu0 %v1211
        %1217 = vmatprep.subr.mxu0 0.0
        %1218 = vmatpush1.msra.mxu0 0.0
        %1219 = vmatprep.subr.mxu0 0.0
        %1220 = vmatpush1.msra.mxu0 0.0
        %1221 = vmatprep.subr.mxu0 0.0
        %1222 = vmatpush1.msra.mxu0 0.0
        %1223 = vmatprep.subr.mxu0 0.0
        %1224 = vmatpush1.msra.mxu0 0.0
        %1225 = vmatprep.subr.mxu0 0.0
        %1226 = vmatpush1.msra.mxu0 0.0
        %1227 = vmatprep.subr.mxu0 0.0
        %1228 = vmatpush1.msra.mxu0 0.0
        %1229 = vmatprep.subr.mxu0 0.0
        %1230 = vmatpush1.msra.mxu0 0.0
        %1231 = vmatprep.subr.mxu0 0.0
        %1232 = vmatpush1.msra.mxu0 0.0
        %1233 = vmatprep.subr.mxu0 0.0
        %1234 = vmatpush1.msra.mxu0 0.0
        %1235 = vmatprep.subr.mxu0 0.0
        %1236 = vmatpush1.msra.mxu0 0.0
        %1237 = vmatprep.subr.mxu0 0.0
        %1238 = vmatpush1.msra.mxu0 0.0
        %1239 = vmatprep.subr.mxu0 0.0
        %1240 = vmatpush1.msra.mxu0 0.0
        %1241 = vmatprep.subr.mxu0 0.0
        %1242 = vmatpush1.msra.mxu0 0.0
        %1243 = vmatprep.subr.mxu0 0.0
        %1244 = vmatpush1.msra.mxu0 0.0
        %1245 = vmatprep.subr.mxu0 0.0
        %1246 = vmatpush1.msra.mxu0 0.0
        %1247 = vmatprep.subr.mxu0 0.0
        %1248 = vmatpush1.msra.mxu0 0.0
        %1249 = vmatprep.subr.mxu0 0.0
        %1250 = vmatpush1.msra.mxu0 0.0
        %1251 = vmatprep.subr.mxu0 0.0
        %1252 = vmatpush1.msra.mxu0 0.0
        %1253 = vmatprep.subr.mxu0 0.0
        %1254 = vmatpush1.msra.mxu0 0.0
        %1255 = vmatprep.subr.mxu0 0.0
        %1256 = vmatpush1.msra.mxu0 0.0
        %1257 = vmatprep.subr.mxu0 0.0
        %1258 = vmatpush1.msra.mxu0 0.0
        %1259 = vmatprep.subr.mxu0 0.0
        %1260 = vmatpush1.msra.mxu0 0.0
        %1261 = vmatprep.subr.mxu0 0.0
        %1262 = vmatpush1.msra.mxu0 0.0
        %1263 = vmatprep.subr.mxu0 0.0
        %1264 = vmatpush1.msra.mxu0 0.0
        %1265 = vmatprep.subr.mxu0 0.0
        %1266 = vmatpush1.msra.mxu0 0.0
        %1267 = vmatprep.subr.mxu0 0.0
        %1268 = vmatpush1.msra.mxu0 0.0
        %1269 = vmatprep.subr.mxu0 0.0
        %1270 = vmatpush1.msra.mxu0 0.0
        %1271 = vmatprep.subr.mxu0 0.0
        %1272 = vmatpush1.msra.mxu0 0.0
        %1273 = vmatprep.subr.mxu0 0.0
        %1274 = vmatpush1.msra.mxu0 0.0
        %1275 = vmatprep.subr.mxu0 0.0
        %1276 = vmatpush1.msra.mxu0 0.0
        %1277 = vmatprep.subr.mxu0 0.0
        %1278 = vmatpush1.msra.mxu0 0.0
        %1279 = vmatprep.mubr.f32.mxu0 0.0
        %1280 = vmatmul.mubr.f32.gmra.mrb[0].mxu0 %v1213
        %v1281 = vpop.f32.mrb[0].mxu0
        %v1282 = vadd.f32 0.0, %v1281
        %v1283 = vpop.f32.mrb[0].mxu0
        %1284 = vdwg.mxu0
        %v1285 = vadd.f32 %v1040, %v1282
        %1286 = vrot.lane.b32.xlu0 %v557, 104
        %v1287 = vpop.permute.xlu0 %1286
        %1288 = vrot.lane.b32.xlu0 %v557, 72
        %v1289 = vpop.permute.xlu0 %1288
        %v1290 = vsel %vm563, %v1287, 0
        %v1292 = vsel %vm563, %v1289, 0
        %1294 = vmatprep.subr.mxu0 0.0
        %1295 = vmatpush1.xpose.msra.mxu0 %v1292
        %1296 = vmatprep.subr.mxu0 0.0
        %1297 = vmatpush1.xpose.msra.mxu0 0.0
        %1298 = vmatprep.subr.mxu0 0.0
        %1299 = vmatpush1.xpose.msra.mxu0 0.0
        %1300 = vmatprep.subr.mxu0 0.0
        %1301 = vmatpush1.xpose.msra.mxu0 0.0
        %1302 = vmatprep.subr.mxu0 0.0
        %1303 = vmatpush1.xpose.msra.mxu0 0.0
        %1304 = vmatprep.subr.mxu0 0.0
        %1305 = vmatpush1.xpose.msra.mxu0 0.0
        %1306 = vmatprep.subr.mxu0 0.0
        %1307 = vmatpush1.xpose.msra.mxu0 0.0
        %1308 = vmatprep.subr.mxu0 0.0
        %1309 = vmatpush1.xpose.msra.mxu0 0.0
        %1310 = vmatprep.subr.mxu0 0.0
        %1311 = vmatpush1.xpose.msra.mxu0 0.0
        %1312 = vmatprep.subr.mxu0 0.0
        %1313 = vmatpush1.xpose.msra.mxu0 0.0
        %1314 = vmatprep.subr.mxu0 0.0
        %1315 = vmatpush1.xpose.msra.mxu0 0.0
        %1316 = vmatprep.subr.mxu0 0.0
        %1317 = vmatpush1.xpose.msra.mxu0 0.0
        %1318 = vmatprep.subr.mxu0 0.0
        %1319 = vmatpush1.xpose.msra.mxu0 0.0
        %1320 = vmatprep.subr.mxu0 0.0
        %1321 = vmatpush1.xpose.msra.mxu0 0.0
        %1322 = vmatprep.subr.mxu0 0.0
        %1323 = vmatpush1.xpose.msra.mxu0 0.0
        %1324 = vmatprep.subr.mxu0 0.0
        %1325 = vmatpush1.xpose.msra.mxu0 0.0
        %1326 = vmatprep.subr.mxu0 0.0
        %1327 = vmatpush1.xpose.msra.mxu0 0.0
        %1328 = vmatprep.subr.mxu0 0.0
        %1329 = vmatpush1.xpose.msra.mxu0 0.0
        %1330 = vmatprep.subr.mxu0 0.0
        %1331 = vmatpush1.xpose.msra.mxu0 0.0
        %1332 = vmatprep.subr.mxu0 0.0
        %1333 = vmatpush1.xpose.msra.mxu0 0.0
        %1334 = vmatprep.subr.mxu0 0.0
        %1335 = vmatpush1.xpose.msra.mxu0 0.0
        %1336 = vmatprep.subr.mxu0 0.0
        %1337 = vmatpush1.xpose.msra.mxu0 0.0
        %1338 = vmatprep.subr.mxu0 0.0
        %1339 = vmatpush1.xpose.msra.mxu0 0.0
        %1340 = vmatprep.subr.mxu0 0.0
        %1341 = vmatpush1.xpose.msra.mxu0 0.0
        %1342 = vmatprep.subr.mxu0 0.0
        %1343 = vmatpush1.xpose.msra.mxu0 0.0
        %1344 = vmatprep.subr.mxu0 0.0
        %1345 = vmatpush1.xpose.msra.mxu0 0.0
        %1346 = vmatprep.subr.mxu0 0.0
        %1347 = vmatpush1.xpose.msra.mxu0 0.0
        %1348 = vmatprep.subr.mxu0 0.0
        %1349 = vmatpush1.xpose.msra.mxu0 0.0
        %1350 = vmatprep.subr.mxu0 0.0
        %1351 = vmatpush1.xpose.msra.mxu0 0.0
        %1352 = vmatprep.subr.mxu0 0.0
        %1353 = vmatpush1.xpose.msra.mxu0 0.0
        %1354 = vmatprep.subr.mxu0 0.0
        %1355 = vmatpush1.xpose.msra.mxu0 0.0
        %1356 = vmatprep.subr.mxu0 0.0
        %1357 = vmatpush1.xpose.msra.mxu0 0.0
        %1358 = vmatprep.mubr.f32.mxu0 0.0
        %1359 = vmatmul.mubr.f32.gmra.mrb[0].mxu0 %v1290
        %v1360 = vpop.f32.mrb[0].mxu0
        %v1361 = vadd.f32 0.0, %v1360
        %v1362 = vpop.f32.mrb[0].mxu0
        %1363 = vdwg.mxu0
        %v1364 = vmul.f32 %v1361, 0.35355338
        %v1365 = vsel %vm563, %v1364, -inf
        %1366 = vmax.xlane.f32.xlu0 %v1365
        %v1367 = vpop.xlane.xlu0 %1366
        %v1368 = vsub.f32 %v1364, %v1367
        %v1369 = vmul.f32 %v1368, 1.442695
        %v1370 = vpow.pop %v1369
        %v1371 = vsel %vm563, %v1370, 0.0
        %1372 = vadd.xlane.f32.xlu0 %v1371
        %v1373 = vpop.xlane.xlu0 %1372
        %v1374 = vrcp.pop %v1373
        %v1375 = vmul.f32 %v1370, %v1374
        %s1376 = scalar_lea.vmem %s469, 24 [#allocation4]
        %1377 = vst.msk [vmem:[%s1376] sm:$0xff] %vm563, %v1375
        %1378 = vrot.lane.b32.xlu0 %v557, 40
        %v1379 = vpop.permute.xlu0 %1378
        %v1382 = vsel %vm563, %v1375, 0
        %1384 = vmatprep.subr.mxu0 0.0
        %1385 = vmatpush1.msra.mxu0 %v1379
        %1386 = vmatprep.subr.mxu0 0.0
        %1387 = vmatpush1.msra.mxu0 0.0
        %1388 = vmatprep.subr.mxu0 0.0
        %1389 = vmatpush1.msra.mxu0 0.0
        %1390 = vmatprep.subr.mxu0 0.0
        %1391 = vmatpush1.msra.mxu0 0.0
        %1392 = vmatprep.subr.mxu0 0.0
        %1393 = vmatpush1.msra.mxu0 0.0
        %1394 = vmatprep.subr.mxu0 0.0
        %1395 = vmatpush1.msra.mxu0 0.0
        %1396 = vmatprep.subr.mxu0 0.0
        %1397 = vmatpush1.msra.mxu0 0.0
        %1398 = vmatprep.subr.mxu0 0.0
        %1399 = vmatpush1.msra.mxu0 0.0
        %1400 = vmatprep.subr.mxu0 0.0
        %1401 = vmatpush1.msra.mxu0 0.0
        %1402 = vmatprep.subr.mxu0 0.0
        %1403 = vmatpush1.msra.mxu0 0.0
        %1404 = vmatprep.subr.mxu0 0.0
        %1405 = vmatpush1.msra.mxu0 0.0
        %1406 = vmatprep.subr.mxu0 0.0
        %1407 = vmatpush1.msra.mxu0 0.0
        %1408 = vmatprep.subr.mxu0 0.0
        %1409 = vmatpush1.msra.mxu0 0.0
        %1410 = vmatprep.subr.mxu0 0.0
        %1411 = vmatpush1.msra.mxu0 0.0
        %1412 = vmatprep.subr.mxu0 0.0
        %1413 = vmatpush1.msra.mxu0 0.0
        %1414 = vmatprep.subr.mxu0 0.0
        %1415 = vmatpush1.msra.mxu0 0.0
        %1416 = vmatprep.subr.mxu0 0.0
        %1417 = vmatpush1.msra.mxu0 0.0
        %1418 = vmatprep.subr.mxu0 0.0
        %1419 = vmatpush1.msra.mxu0 0.0
        %1420 = vmatprep.subr.mxu0 0.0
        %1421 = vmatpush1.msra.mxu0 0.0
        %1422 = vmatprep.subr.mxu0 0.0
        %1423 = vmatpush1.msra.mxu0 0.0
        %1424 = vmatprep.subr.mxu0 0.0
        %1425 = vmatpush1.msra.mxu0 0.0
        %1426 = vmatprep.subr.mxu0 0.0
        %1427 = vmatpush1.msra.mxu0 0.0
        %1428 = vmatprep.subr.mxu0 0.0
        %1429 = vmatpush1.msra.mxu0 0.0
        %1430 = vmatprep.subr.mxu0 0.0
        %1431 = vmatpush1.msra.mxu0 0.0
        %1432 = vmatprep.subr.mxu0 0.0
        %1433 = vmatpush1.msra.mxu0 0.0
        %1434 = vmatprep.subr.mxu0 0.0
        %1435 = vmatpush1.msra.mxu0 0.0
        %1436 = vmatprep.subr.mxu0 0.0
        %1437 = vmatpush1.msra.mxu0 0.0
        %1438 = vmatprep.subr.mxu0 0.0
        %1439 = vmatpush1.msra.mxu0 0.0
        %1440 = vmatprep.subr.mxu0 0.0
        %1441 = vmatpush1.msra.mxu0 0.0
        %1442 = vmatprep.subr.mxu0 0.0
        %1443 = vmatpush1.msra.mxu0 0.0
        %1444 = vmatprep.subr.mxu0 0.0
        %1445 = vmatpush1.msra.mxu0 0.0
        %1446 = vmatprep.subr.mxu0 0.0
        %1447 = vmatpush1.msra.mxu0 0.0
        %1448 = vmatprep.mubr.f32.mxu0 0.0
        %1449 = vmatmul.mubr.f32.gmra.mrb[0].mxu0 %v1382
        %v1450 = vpop.f32.mrb[0].mxu0
        %v1451 = vadd.f32 0.0, %v1450
        %v1452 = vpop.f32.mrb[0].mxu0
        %1453 = vdwg.mxu0
        %v1454 = vld [vmem:[%s3 + $0x18] sm:$0xff]
        %v1456 = vsel %vm563, %v1451, 0
        %1458 = vmatprep.subr.mxu0 0.0
        %1459 = vmatpush1.msra.mxu0 %v1454
        %1460 = vmatprep.subr.mxu0 0.0
        %1461 = vmatpush1.msra.mxu0 0.0
        %1462 = vmatprep.subr.mxu0 0.0
        %1463 = vmatpush1.msra.mxu0 0.0
        %1464 = vmatprep.subr.mxu0 0.0
        %1465 = vmatpush1.msra.mxu0 0.0
        %1466 = vmatprep.subr.mxu0 0.0
        %1467 = vmatpush1.msra.mxu0 0.0
        %1468 = vmatprep.subr.mxu0 0.0
        %1469 = vmatpush1.msra.mxu0 0.0
        %1470 = vmatprep.subr.mxu0 0.0
        %1471 = vmatpush1.msra.mxu0 0.0
        %1472 = vmatprep.subr.mxu0 0.0
        %1473 = vmatpush1.msra.mxu0 0.0
        %1474 = vmatprep.subr.mxu0 0.0
        %1475 = vmatpush1.msra.mxu0 0.0
        %1476 = vmatprep.subr.mxu0 0.0
        %1477 = vmatpush1.msra.mxu0 0.0
        %1478 = vmatprep.subr.mxu0 0.0
        %1479 = vmatpush1.msra.mxu0 0.0
        %1480 = vmatprep.subr.mxu0 0.0
        %1481 = vmatpush1.msra.mxu0 0.0
        %1482 = vmatprep.subr.mxu0 0.0
        %1483 = vmatpush1.msra.mxu0 0.0
        %1484 = vmatprep.subr.mxu0 0.0
        %1485 = vmatpush1.msra.mxu0 0.0
        %1486 = vmatprep.subr.mxu0 0.0
        %1487 = vmatpush1.msra.mxu0 0.0
        %1488 = vmatprep.subr.mxu0 0.0
        %1489 = vmatpush1.msra.mxu0 0.0
        %1490 = vmatprep.subr.mxu0 0.0
        %1491 = vmatpush1.msra.mxu0 0.0
        %1492 = vmatprep.subr.mxu0 0.0
        %1493 = vmatpush1.msra.mxu0 0.0
        %1494 = vmatprep.subr.mxu0 0.0
        %1495 = vmatpush1.msra.mxu0 0.0
        %1496 = vmatprep.subr.mxu0 0.0
        %1497 = vmatpush1.msra.mxu0 0.0
        %1498 = vmatprep.subr.mxu0 0.0
        %1499 = vmatpush1.msra.mxu0 0.0
        %1500 = vmatprep.subr.mxu0 0.0
        %1501 = vmatpush1.msra.mxu0 0.0
        %1502 = vmatprep.subr.mxu0 0.0
        %1503 = vmatpush1.msra.mxu0 0.0
        %1504 = vmatprep.subr.mxu0 0.0
        %1505 = vmatpush1.msra.mxu0 0.0
        %1506 = vmatprep.subr.mxu0 0.0
        %1507 = vmatpush1.msra.mxu0 0.0
        %1508 = vmatprep.subr.mxu0 0.0
        %1509 = vmatpush1.msra.mxu0 0.0
        %1510 = vmatprep.subr.mxu0 0.0
        %1511 = vmatpush1.msra.mxu0 0.0
        %1512 = vmatprep.subr.mxu0 0.0
        %1513 = vmatpush1.msra.mxu0 0.0
        %1514 = vmatprep.subr.mxu0 0.0
        %1515 = vmatpush1.msra.mxu0 0.0
        %1516 = vmatprep.subr.mxu0 0.0
        %1517 = vmatpush1.msra.mxu0 0.0
        %1518 = vmatprep.subr.mxu0 0.0
        %1519 = vmatpush1.msra.mxu0 0.0
        %1520 = vmatprep.subr.mxu0 0.0
        %1521 = vmatpush1.msra.mxu0 0.0
        %1522 = vmatprep.mubr.f32.mxu0 0.0
        %1523 = vmatmul.mubr.f32.gmra.mrb[0].mxu0 %v1456
        %v1524 = vpop.f32.mrb[0].mxu0
        %v1525 = vadd.f32 0.0, %v1524
        %v1526 = vpop.f32.mrb[0].mxu0
        %1527 = vdwg.mxu0
        %v1528 = vadd.f32 %v1285, %v1525
        %v1529 = vld [vmem:[%s4] sm:$0x1]
        %v1531 = vlaneseq
        %v1532 = vshrl.u32 %v1531, 7
        %v1533 = vsub.s32 0, %v1532
        %v1534 = vrot.slane %v1529, %v1533
        %v1536 = vadd.f32 %v1528, %v1534
        %v1537 = vadd.f32 %v474, %v1536
        %v1538 = vsel %vm486, %v1537, 0.0
        %1539 = vadd.xlane.f32.xlu0 %v1538
        %v1540 = vpop.xlane.xlu0 %1539
        %v1541 = vrcp.pop 32.0
        %v1542 = vmul.f32 %v1540, %v1541
        %v1543 = vsub.f32 %v1537, %v1542
        %v1544 = vmul.f32 %v1543, %v1543
        %v1545 = vsel %vm486, %v1544, 0.0
        %1546 = vadd.xlane.f32.xlu0 %v1545
        %v1547 = vpop.xlane.xlu0 %1546
        %v1548 = vmul.f32 %v1547, %v1541
        %v1549 = vadd.f32 %v1548, 1e-05
        %v1550 = vrsqrt.pop %v1549
        %v1551 = vmul.f32 %v1543, %v1550
        %v1552 = vld [vmem:[%s5] sm:$0x1]
        %v1554 = vlaneseq
        %v1555 = vshrl.u32 %v1554, 7
        %v1556 = vsub.s32 0, %v1555
        %v1557 = vrot.slane %v1552, %v1556
        %v1559 = vmul.f32 %v1551, %v1557
        %v1560 = vld [vmem:[%s6] sm:$0x1]
        %v1562 = vlaneseq
        %v1563 = vshrl.u32 %v1562, 7
        %v1564 = vsub.s32 0, %v1563
        %v1565 = vrot.slane %v1560, %v1564
        %v1567 = vadd.f32 %v1559, %v1565
        %v1568 = vld [vmem:[%s7] sm:$0xff]
        %v1569 = vld [vmem:[%s7 + $0x8] sm:$0xff]
        %v1570 = vld [vmem:[%s7 + $0x10] sm:$0xff]
        %v1571 = vld [vmem:[%s7 + $0x18] sm:$0xff]
        %v1572 = vld [vmem:[%s8] sm:$0x1]
        %v1574 = vlaneseq
        %v1575 = vshrl.u32 %v1574, 7
        %v1576 = vsub.s32 0, %v1575
        %v1577 = vrot.slane %v1572, %v1576
        %v1580 = vsel %vm486, %v1567, 0
        %1582 = vmatprep.subr.mxu0 0.0
        %1583 = vmatpush1.msra.mxu0 %v1568
        %1584 = vmatprep.subr.mxu0 0.0
        %1585 = vmatpush1.msra.mxu0 %v1569
        %1586 = vmatprep.subr.mxu0 0.0
        %1587 = vmatpush1.msra.mxu0 %v1570
        %1588 = vmatprep.subr.mxu0 0.0
        %1589 = vmatpush1.msra.mxu0 %v1571
        %1590 = vmatprep.subr.mxu0 0.0
        %1591 = vmatpush1.msra.mxu0 0.0
        %1592 = vmatprep.subr.mxu0 0.0
        %1593 = vmatpush1.msra.mxu0 0.0
        %1594 = vmatprep.subr.mxu0 0.0
        %1595 = vmatpush1.msra.mxu0 0.0
        %1596 = vmatprep.subr.mxu0 0.0
        %1597 = vmatpush1.msra.mxu0 0.0
        %1598 = vmatprep.subr.mxu0 0.0
        %1599 = vmatpush1.msra.mxu0 0.0
        %1600 = vmatprep.subr.mxu0 0.0
        %1601 = vmatpush1.msra.mxu0 0.0
        %1602 = vmatprep.subr.mxu0 0.0
        %1603 = vmatpush1.msra.mxu0 0.0
        %1604 = vmatprep.subr.mxu0 0.0
        %1605 = vmatpush1.msra.mxu0 0.0
        %1606 = vmatprep.subr.mxu0 0.0
        %1607 = vmatpush1.msra.mxu0 0.0
        %1608 = vmatprep.subr.mxu0 0.0
        %1609 = vmatpush1.msra.mxu0 0.0
        %1610 = vmatprep.subr.mxu0 0.0
        %1611 = vmatpush1.msra.mxu0 0.0
        %1612 = vmatprep.subr.mxu0 0.0
        %1613 = vmatpush1.msra.mxu0 0.0
        %1614 = vmatprep.subr.mxu0 0.0
        %1615 = vmatpush1.msra.mxu0 0.0
        %1616 = vmatprep.subr.mxu0 0.0
        %1617 = vmatpush1.msra.mxu0 0.0
        %1618 = vmatprep.subr.mxu0 0.0
        %1619 = vmatpush1.msra.mxu0 0.0
        %1620 = vmatprep.subr.mxu0 0.0
        %1621 = vmatpush1.msra.mxu0 0.0
        %1622 = vmatprep.subr.mxu0 0.0
        %1623 = vmatpush1.msra.mxu0 0.0
        %1624 = vmatprep.subr.mxu0 0.0
        %1625 = vmatpush1.msra.mxu0 0.0
        %1626 = vmatprep.subr.mxu0 0.0
        %1627 = vmatpush1.msra.mxu0 0.0
        %1628 = vmatprep.subr.mxu0 0.0
        %1629 = vmatpush1.msra.mxu0 0.0
        %1630 = vmatprep.subr.mxu0 0.0
        %1631 = vmatpush1.msra.mxu0 0.0
        %1632 = vmatprep.subr.mxu0 0.0
        %1633 = vmatpush1.msra.mxu0 0.0
        %1634 = vmatprep.subr.mxu0 0.0
        %1635 = vmatpush1.msra.mxu0 0.0
        %1636 = vmatprep.subr.mxu0 0.0
        %1637 = vmatpush1.msra.mxu0 0.0
        %1638 = vmatprep.subr.mxu0 0.0
        %1639 = vmatpush1.msra.mxu0 0.0
        %1640 = vmatprep.subr.mxu0 0.0
        %1641 = vmatpush1.msra.mxu0 0.0
        %1642 = vmatprep.subr.mxu0 0.0
        %1643 = vmatpush1.msra.mxu0 0.0
        %1644 = vmatprep.subr.mxu0 0.0
        %1645 = vmatpush1.msra.mxu0 0.0
        %1646 = vmatprep.mubr.f32.mxu0 0.0
        %1647 = vmatmul.mubr.f32.gmra.mrb[0].mxu0 %v1580
        %v1648 = vpop.f32.mrb[0].mxu0
        %v1649 = vadd.f32 %v1577, %v1648
        %v1650 = vpop.f32.mrb[0].mxu0
        %1651 = vdwg.mxu0
        %v1652 = vmax.f32 %v1649, 0.0
        %v1653 = vld [vmem:[%s9] sm:$0xff]
        %v1654 = vld [vmem:[%s9 + $0x8] sm:$0xff]
        %v1655 = vld [vmem:[%s9 + $0x10] sm:$0xff]
        %v1656 = vld [vmem:[%s9 + $0x18] sm:$0xff]
        %v1657 = vld [vmem:[%s9 + $0x20] sm:$0xff]
        %v1658 = vld [vmem:[%s9 + $0x28] sm:$0xff]
        %v1659 = vld [vmem:[%s9 + $0x30] sm:$0xff]
        %v1660 = vld [vmem:[%s9 + $0x38] sm:$0xff]
        %v1661 = vld [vmem:[%s10] sm:$0x1]
        %v1663 = vlaneseq
        %v1664 = vshrl.u32 %v1663, 7
        %v1665 = vsub.s32 0, %v1664
        %v1666 = vrot.slane %v1661, %v1665
        %vm1668 = vcmask 523264
        %v1670 = vsel %vm1668, %v1652, 0
        %1672 = vmatprep.subr.mxu0 0.0
        %1673 = vmatpush1.msra.mxu0 %v1653
        %1674 = vmatprep.subr.mxu0 0.0
        %1675 = vmatpush1.msra.mxu0 %v1654
        %1676 = vmatprep.subr.mxu0 0.0
        %1677 = vmatpush1.msra.mxu0 %v1655
        %1678 = vmatprep.subr.mxu0 0.0
        %1679 = vmatpush1.msra.mxu0 %v1656
        %1680 = vmatprep.subr.mxu0 0.0
        %1681 = vmatpush1.msra.mxu0 %v1657
        %1682 = vmatprep.subr.mxu0 0.0
        %1683 = vmatpush1.msra.mxu0 %v1658
        %1684 = vmatprep.subr.mxu0 0.0
        %1685 = vmatpush1.msra.mxu0 %v1659
        %1686 = vmatprep.subr.mxu0 0.0
        %1687 = vmatpush1.msra.mxu0 %v1660
        %1688 = vmatprep.subr.mxu0 0.0
        %1689 = vmatpush1.msra.mxu0 0.0
        %1690 = vmatprep.subr.mxu0 0.0
        %1691 = vmatpush1.msra.mxu0 0.0
        %1692 = vmatprep.subr.mxu0 0.0
        %1693 = vmatpush1.msra.mxu0 0.0
        %1694 = vmatprep.subr.mxu0 0.0
        %1695 = vmatpush1.msra.mxu0 0.0
        %1696 = vmatprep.subr.mxu0 0.0
        %1697 = vmatpush1.msra.mxu0 0.0
        %1698 = vmatprep.subr.mxu0 0.0
        %1699 = vmatpush1.msra.mxu0 0.0
        %1700 = vmatprep.subr.mxu0 0.0
        %1701 = vmatpush1.msra.mxu0 0.0
        %1702 = vmatprep.subr.mxu0 0.0
        %1703 = vmatpush1.msra.mxu0 0.0
        %1704 = vmatprep.subr.mxu0 0.0
        %1705 = vmatpush1.msra.mxu0 0.0
        %1706 = vmatprep.subr.mxu0 0.0
        %1707 = vmatpush1.msra.mxu0 0.0
        %1708 = vmatprep.subr.mxu0 0.0
        %1709 = vmatpush1.msra.mxu0 0.0
        %1710 = vmatprep.subr.mxu0 0.0
        %1711 = vmatpush1.msra.mxu0 0.0
        %1712 = vmatprep.subr.mxu0 0.0
        %1713 = vmatpush1.msra.mxu0 0.0
        %1714 = vmatprep.subr.mxu0 0.0
        %1715 = vmatpush1.msra.mxu0 0.0
        %1716 = vmatprep.subr.mxu0 0.0
        %1717 = vmatpush1.msra.mxu0 0.0
        %1718 = vmatprep.subr.mxu0 0.0
        %1719 = vmatpush1.msra.mxu0 0.0
        %1720 = vmatprep.subr.mxu0 0.0
        %1721 = vmatpush1.msra.mxu0 0.0
        %1722 = vmatprep.subr.mxu0 0.0
        %1723 = vmatpush1.msra.mxu0 0.0
        %1724 = vmatprep.subr.mxu0 0.0
        %1725 = vmatpush1.msra.mxu0 0.0
        %1726 = vmatprep.subr.mxu0 0.0
        %1727 = vmatpush1.msra.mxu0 0.0
        %1728 = vmatprep.subr.mxu0 0.0
        %1729 = vmatpush1.msra.mxu0 0.0
        %1730 = vmatprep.subr.mxu0 0.0
        %1731 = vmatpush1.msra.mxu0 0.0
        %1732 = vmatprep.subr.mxu0 0.0
        %1733 = vmatpush1.msra.mxu0 0.0
        %1734 = vmatprep.subr.mxu0 0.0
        %1735 = vmatpush1.msra.mxu0 0.0
        %1736 = vmatprep.mubr.f32.mxu0 0.0
        %1737 = vmatmul.mubr.f32.gmra.mrb[0].mxu0 %v1670
        %v1738 = vpop.f32.mrb[0].mxu0
        %v1739 = vadd.f32 %v1666, %v1738
        %v1740 = vpop.f32.mrb[0].mxu0
        %1741 = vdwg.mxu0
        %v1742 = vadd.f32 %v1567, %v1739
        %v1743 = vsel %vm486, %v1742, 0.0
        %1744 = vadd.xlane.f32.xlu0 %v1743
        %v1745 = vpop.xlane.xlu0 %1744
        %v1746 = vmul.f32 %v1745, %v1541
        %v1747 = vsub.f32 %v1742, %v1746
        %v1748 = vmul.f32 %v1747, %v1747
        %v1749 = vsel %vm486, %v1748, 0.0
        %1750 = vadd.xlane.f32.xlu0 %v1749
        %v1751 = vpop.xlane.xlu0 %1750
        %v1752 = vmul.f32 %v1751, %v1541
        %v1753 = vadd.f32 %v1752, 1e-05
        %v1754 = vrsqrt.pop %v1753
        %v1755 = vmul.f32 %v1747, %v1754
        %v1756 = vld [vmem:[%s11] sm:$0x1]
        %v1758 = vlaneseq
        %v1759 = vshrl.u32 %v1758, 7
        %v1760 = vsub.s32 0, %v1759
        %v1761 = vrot.slane %v1756, %v1760
        %v1763 = vmul.f32 %v1755, %v1761
        %v1764 = vld [vmem:[%s12] sm:$0x1]
        %v1766 = vlaneseq
        %v1767 = vshrl.u32 %v1766, 7
        %v1768 = vsub.s32 0, %v1767
        %v1769 = vrot.slane %v1764, %v1768
        %v1771 = vadd.f32 %v1763, %v1769
        %1772 = vst.msk [vmem:[%s462] sm:$0xff] %vm486, %v1771
        %s1773 = sand.u32 %s318, 1
        %s1774 = scalar_lea.sflag [#allocation3], %s1773
        %s1775 = sand.u32 %s318, 1
        %s1776 = smul.addr %s1775, 8
        %s1777 = scalar_lea.vmem [#allocation2], %s1776
        %s1778 = sand.u32 %s344, 1
        %s1779 = scalar_lea.sflag [#allocation5], %s1778
        %s1780 = sand.u32 %s344, 1
        %s1781 = smul.addr %s1780, 32
        %s1782 = scalar_lea.vmem [#allocation4], %s1781
        // Predicated region
        $region73: #{_lambda_.3} parent=71 // pred_check
          %p1783 = pneg %p328
        $region74: #{_lambda_.3} parent=71 // pred_check_branch
          %1785 = sbr.rel (%p1783) target = $region76
        $region75: #{_lambda_.3} parent=71 // pred_region
          %s1787 = ssub.s32 128, 128
          %1788 = vsyncadd %s1774, %s1787
          %s1789 = smul.addr %s32, 128
          %s1790 = scalar_lea.hbm %s13, %s1789
          %s1792 = sshll.u32 %s1777, 4
          %s1793 = int_to_ptr.vmem [resolvable:$true] %s1792
          %1795 = dma.vmem_to_hbm [thread:$0]  %s1793, 128, %s1790, %s1774
        $region76: #{_lambda_.3} parent=71 // pred_fallthru
          _
        // Predicated region
        $region77: #{_lambda_.3} parent=71 // pred_check
          %p1796 = pneg %p354
        $region78: #{_lambda_.3} parent=71 // pred_check_branch
          %1798 = sbr.rel (%p1796) target = $region80
        $region79: #{_lambda_.3} parent=71 // pred_region
          %s1800 = ssub.s32 512, 512
          %1801 = vsyncadd %s1779, %s1800
          %s1802 = smul.addr %s32, 4
          %s1803 = smul.addr %s1802, 128
          %s1804 = scalar_lea.hbm %s14, %s1803
          %s1805 = sshll.u32 %s1782, 4
          %s1806 = int_to_ptr.vmem [resolvable:$true] %s1805
          %1811 = dma.vmem_to_hbm [thread:$0]  %s1806, 512, %s1804, %s1779, 128, 128, 8
        $region80: #{_lambda_.3} parent=71 // pred_fallthru
          _
      $region72: #{_lambda_.3} parent=5 // pred_fallthru
        _
      %p1812 = scmp.le.s32.totalorder 2, %s27
      // Predicated region
      $region81: #{_lambda_.3} parent=5 // pred_check
        %p1813 = pneg %p1812
      $region82: #{_lambda_.3} parent=5 // pred_check_branch
        %1815 = sbr.rel (%p1813) target = $region84
      $region83: #{_lambda_.3} parent=5 // pred_region
        %s1816 = ssub.s32 %s27, 2
        // Predicated region
        $region85: #{_lambda_.3} parent=83 // pred_check
          %p1817 = pneg %p334
        $region86: #{_lambda_.3} parent=83 // pred_check_branch
          %1819 = sbr.rel (%p1817) target = $region88
        $region87: #{_lambda_.3} parent=83 // pred_region
          %s1820 = sand.u32 %s319, 1
          %s1821 = scalar_lea.sflag [#allocation3], %s1820
          %s1822 = sand.u32 %s319, 1
          %s1823 = smul.addr %s1822, 8
          %s1824 = scalar_lea.vmem [#allocation2], %s1823
          %1825 = dma.done %s1821, 128
        $region88: #{_lambda_.3} parent=83 // pred_fallthru
          _
        // Predicated region
        $region89: #{_lambda_.3} parent=83 // pred_check
          %p1826 = pneg %p360
        $region90: #{_lambda_.3} parent=83 // pred_check_branch
          %1828 = sbr.rel (%p1826) target = $region92
        $region91: #{_lambda_.3} parent=83 // pred_region
          %s1829 = sand.u32 %s345, 1
          %s1830 = scalar_lea.sflag [#allocation5], %s1829
          %s1831 = sand.u32 %s345, 1
          %s1832 = smul.addr %s1831, 32
          %s1833 = scalar_lea.vmem [#allocation4], %s1832
          %1834 = dma.done %s1830, 512
        $region92: #{_lambda_.3} parent=83 // pred_fallthru
          _
      $region84: #{_lambda_.3} parent=5 // pred_fallthru
        _
    $region6: #{_lambda_.3} parent=1 // loop_footer
      %s31 = sadd.s32 1, %s27
    $region7: #{_lambda_.3} parent=1 // loop_footer_branch
      %26 = sbr.rel target = $region3
    $region8: #{_lambda_.3} parent=1 // loop_exit
      _
    %1835 = vsyncpa [#allocation3], 1
    %s1836 = scalar_lea.sflag [#allocation3], 1
    %1837 = vsyncpa %s1836, 1
    %1838 = vsyncpa [#allocation5], 1
    %s1839 = scalar_lea.sflag [#allocation5], 1
    %1840 = vsyncpa %s1839, 1

// kernel: _lambda_.2
$region0: #{_lambda_.2}
  #allocation0 [shape = 'u32[]', space=smem, size = 0x4, offset = 0x4, fixed_abs, tag = 'smem constant byte address 0x4 - core index']
  #allocation1 [shape = 'u32[144,128]{1,0:T(1,128)}', space=vmem, size = 0x12000, scoped, tag = 'internal scratch']
  %s0 = inlined_call_operand.vmem [shape: f32[2,8,32], index: 0, kind: input, shape index: {}]
  %s1 = inlined_call_operand.vmem [shape: f32[32,96], index: 1, kind: input, shape index: {}]
  %s2 = inlined_call_operand.vmem [shape: f32[1,96], index: 2, kind: input, shape index: {}]
  %s3 = inlined_call_operand.vmem [shape: f32[32,32], index: 3, kind: input, shape index: {}]
  %s4 = inlined_call_operand.vmem [shape: f32[1,32], index: 4, kind: input, shape index: {}, may-alias: {4,6,10,12}]
  %s5 = inlined_call_operand.vmem [shape: f32[1,32], index: 5, kind: input, shape index: {}, may-alias: {5,11}]
  %s6 = inlined_call_operand.vmem [shape: f32[1,32], index: 6, kind: input, shape index: {}, may-alias: {4,6,10,12}]
  %s7 = inlined_call_operand.vmem [shape: f32[32,64], index: 7, kind: input, shape index: {}]
  %s8 = inlined_call_operand.vmem [shape: f32[1,64], index: 8, kind: input, shape index: {}]
  %s9 = inlined_call_operand.vmem [shape: f32[64,32], index: 9, kind: input, shape index: {}]
  %s10 = inlined_call_operand.vmem [shape: f32[1,32], index: 10, kind: input, shape index: {}, may-alias: {4,6,10,12}]
  %s11 = inlined_call_operand.vmem [shape: f32[1,32], index: 11, kind: input, shape index: {}, may-alias: {5,11}]
  %s12 = inlined_call_operand.vmem [shape: f32[1,32], index: 12, kind: input, shape index: {}, may-alias: {4,6,10,12}]
  %s13 = inlined_call_operand.vmem [shape: f32[2,8,32], index: 13, kind: output, shape index: {}]
  %s14 = sld [smem:[#allocation0]]
  $region85: #{_lambda_.2} parent=0
    _
  %s16 = ssub.s32 1, %s14
  %s17 = scalar_select 0, %s16, %s14
  loop: start=0, step=1, limit=4
  $region2: #{_lambda_.2} parent=0 // loop_pre_header
    _
  $region3: #{_lambda_.2} parent=0 // loop_header
    %s19 = sphi 0, %s23
    %p20 = scmp.ge.s32.totalorder %s19, 4
    %s29 = sphi 0, %s31
    %s32 = sphi 0, %s29
    %s33 = sphi 0, %s32
    %s49 = sphi 0, %s33
    %s53 = sphi 0, %s53
    %s55 = sphi 0, %s53
    %s56 = sphi 0, %s55
    %s70 = sphi 0, %s56
    %s74 = sphi 0, %s74
    %s76 = sphi 0, %s74
    %s77 = sphi 0, %s76
    %s91 = sphi 0, %s77
    %s95 = sphi 0, %s95
    %s97 = sphi 0, %s95
    %s98 = sphi 0, %s97
    %s112 = sphi 0, %s98
    %s116 = sphi 0, %s116
    %s118 = sphi 0, %s116
    %s119 = sphi 0, %s118
    %s133 = sphi 0, %s119
    %s137 = sphi 0, %s137
    %s139 = sphi 0, %s137
    %s140 = sphi 0, %s139
    %s154 = sphi 0, %s140
    %s158 = sphi 0, %s158
    %s160 = sphi 0, %s158
    %s161 = sphi 0, %s160
    %s175 = sphi 0, %s161
    %s179 = sphi 0, %s179
    %s181 = sphi 0, %s179
    %s182 = sphi 0, %s181
    %s196 = sphi 0, %s182
    %s200 = sphi 0, %s200
    %s202 = sphi 0, %s200
    %s203 = sphi 0, %s202
    %s217 = sphi 0, %s203
    %s221 = sphi 0, %s221
    %s223 = sphi 0, %s221
    %s224 = sphi 0, %s223
    %s238 = sphi 0, %s224
    %s242 = sphi 0, %s242
    %s244 = sphi 0, %s242
    %s245 = sphi 0, %s244
    %s259 = sphi 0, %s245
    %s263 = sphi 0, %s263
    %s265 = sphi 0, %s263
    %s266 = sphi 0, %s265
    %s280 = sphi 0, %s266
    %s284 = sphi 0, %s284
    %s286 = sphi 0, %s284
    %s287 = sphi 0, %s286
    %s301 = sphi 0, %s287
    %s307 = sphi 0, %s309
    %s310 = sphi 0, %s307
    %s311 = sphi 0, %s310
    %s327 = sphi 0, %s311
  $region4: #{_lambda_.2} parent=0 // loop_header_branch
    %22 = sbr.rel (%p20) target = $region8
  $region5: #{_lambda_.2} parent=0 // loop_body
    %s24 = ssub.s32 %s19, 1
    %s25 = ssub.s32 %s19, 2
    %s26 = sadd.s32 %s19, 1
    %s27 = ssub.s32 %s19, %s26
    %p28 = scmp.eq.s32.totalorder %s27, 0
    %s30 = sadd.s32 %s29, 1
    %s31 = scalar_select %p28, %s29, %s30
    %p34 = pneg %p28
    %p35 = scmp.eq.s32.totalorder %s19, 1
    %p36 = por %p34, %p35
    %p37 = scmp.ne.s32.totalorder %s29, %s32
    %p38 = scmp.eq.s32.totalorder %s19, 0
    %p39 = por %p37, %p38
    %p40 = scmp.ne.s32.totalorder %s29, %s32
    %p41 = scmp.eq.s32.totalorder %s24, 1
    %p42 = por %p40, %p41
    %p43 = scmp.ne.s32.totalorder %s32, %s33
    %p44 = scmp.eq.s32.totalorder %s24, 0
    %p45 = por %p43, %p44
    %p46 = scmp.ne.s32.totalorder %s32, %s33
    %p47 = scmp.eq.s32.totalorder %s25, 1
    %p48 = por %p46, %p47
    %p50 = scmp.ne.s32.totalorder %s33, %s49
    %p51 = scmp.eq.s32.totalorder %s25, 0
    %p52 = por %p50, %p51
    %s54 = sadd.s32 %s53, 1
    %p57 = scmp.eq.s32.totalorder %s19, 1
    %p58 = scmp.ne.s32.totalorder %s53, %s55
    %p59 = scmp.eq.s32.totalorder %s19, 0
    %p60 = por %p58, %p59
    %p61 = scmp.ne.s32.totalorder %s53, %s55
    %p62 = scmp.eq.s32.totalorder %s24, 1
    %p63 = por %p61, %p62
    %p64 = scmp.ne.s32.totalorder %s55, %s56
    %p65 = scmp.eq.s32.totalorder %s24, 0
    %p66 = por %p64, %p65
    %p67 = scmp.ne.s32.totalorder %s55, %s56
    %p68 = scmp.eq.s32.totalorder %s25, 1
    %p69 = por %p67, %p68
    %p71 = scmp.ne.s32.totalorder %s56, %s70
    %p72 = scmp.eq.s32.totalorder %s25, 0
    %p73 = por %p71, %p72
    %s75 = sadd.s32 %s74, 1
    %p78 = scmp.eq.s32.totalorder %s19, 1
    %p79 = scmp.ne.s32.totalorder %s74, %s76
    %p80 = scmp.eq.s32.totalorder %s19, 0
    %p81 = por %p79, %p80
    %p82 = scmp.ne.s32.totalorder %s74, %s76
    %p83 = scmp.eq.s32.totalorder %s24, 1
    %p84 = por %p82, %p83
    %p85 = scmp.ne.s32.totalorder %s76, %s77
    %p86 = scmp.eq.s32.totalorder %s24, 0
    %p87 = por %p85, %p86
    %p88 = scmp.ne.s32.totalorder %s76, %s77
    %p89 = scmp.eq.s32.totalorder %s25, 1
    %p90 = por %p88, %p89
    %p92 = scmp.ne.s32.totalorder %s77, %s91
    %p93 = scmp.eq.s32.totalorder %s25, 0
    %p94 = por %p92, %p93
    %s96 = sadd.s32 %s95, 1
    %p99 = scmp.eq.s32.totalorder %s19, 1
    %p100 = scmp.ne.s32.totalorder %s95, %s97
    %p101 = scmp.eq.s32.totalorder %s19, 0
    %p102 = por %p100, %p101
    %p103 = scmp.ne.s32.totalorder %s95, %s97
    %p104 = scmp.eq.s32.totalorder %s24, 1
    %p105 = por %p103, %p104
    %p106 = scmp.ne.s32.totalorder %s97, %s98
    %p107 = scmp.eq.s32.totalorder %s24, 0
    %p108 = por %p106, %p107
    %p109 = scmp.ne.s32.totalorder %s97, %s98
    %p110 = scmp.eq.s32.totalorder %s25, 1
    %p111 = por %p109, %p110
    %p113 = scmp.ne.s32.totalorder %s98, %s112
    %p114 = scmp.eq.s32.totalorder %s25, 0
    %p115 = por %p113, %p114
    %s117 = sadd.s32 %s116, 1
    %p120 = scmp.eq.s32.totalorder %s19, 1
    %p121 = scmp.ne.s32.totalorder %s116, %s118
    %p122 = scmp.eq.s32.totalorder %s19, 0
    %p123 = por %p121, %p122
    %p124 = scmp.ne.s32.totalorder %s116, %s118
    %p125 = scmp.eq.s32.totalorder %s24, 1
    %p126 = por %p124, %p125
    %p127 = scmp.ne.s32.totalorder %s118, %s119
    %p128 = scmp.eq.s32.totalorder %s24, 0
    %p129 = por %p127, %p128
    %p130 = scmp.ne.s32.totalorder %s118, %s119
    %p131 = scmp.eq.s32.totalorder %s25, 1
    %p132 = por %p130, %p131
    %p134 = scmp.ne.s32.totalorder %s119, %s133
    %p135 = scmp.eq.s32.totalorder %s25, 0
    %p136 = por %p134, %p135
    %s138 = sadd.s32 %s137, 1
    %p141 = scmp.eq.s32.totalorder %s19, 1
    %p142 = scmp.ne.s32.totalorder %s137, %s139
    %p143 = scmp.eq.s32.totalorder %s19, 0
    %p144 = por %p142, %p143
    %p145 = scmp.ne.s32.totalorder %s137, %s139
    %p146 = scmp.eq.s32.totalorder %s24, 1
    %p147 = por %p145, %p146
    %p148 = scmp.ne.s32.totalorder %s139, %s140
    %p149 = scmp.eq.s32.totalorder %s24, 0
    %p150 = por %p148, %p149
    %p151 = scmp.ne.s32.totalorder %s139, %s140
    %p152 = scmp.eq.s32.totalorder %s25, 1
    %p153 = por %p151, %p152
    %p155 = scmp.ne.s32.totalorder %s140, %s154
    %p156 = scmp.eq.s32.totalorder %s25, 0
    %p157 = por %p155, %p156
    %s159 = sadd.s32 %s158, 1
    %p162 = scmp.eq.s32.totalorder %s19, 1
    %p163 = scmp.ne.s32.totalorder %s158, %s160
    %p164 = scmp.eq.s32.totalorder %s19, 0
    %p165 = por %p163, %p164
    %p166 = scmp.ne.s32.totalorder %s158, %s160
    %p167 = scmp.eq.s32.totalorder %s24, 1
    %p168 = por %p166, %p167
    %p169 = scmp.ne.s32.totalorder %s160, %s161
    %p170 = scmp.eq.s32.totalorder %s24, 0
    %p171 = por %p169, %p170
    %p172 = scmp.ne.s32.totalorder %s160, %s161
    %p173 = scmp.eq.s32.totalorder %s25, 1
    %p174 = por %p172, %p173
    %p176 = scmp.ne.s32.totalorder %s161, %s175
    %p177 = scmp.eq.s32.totalorder %s25, 0
    %p178 = por %p176, %p177
    %s180 = sadd.s32 %s179, 1
    %p183 = scmp.eq.s32.totalorder %s19, 1
    %p184 = scmp.ne.s32.totalorder %s179, %s181
    %p185 = scmp.eq.s32.totalorder %s19, 0
    %p186 = por %p184, %p185
    %p187 = scmp.ne.s32.totalorder %s179, %s181
    %p188 = scmp.eq.s32.totalorder %s24, 1
    %p189 = por %p187, %p188
    %p190 = scmp.ne.s32.totalorder %s181, %s182
    %p191 = scmp.eq.s32.totalorder %s24, 0
    %p192 = por %p190, %p191
    %p193 = scmp.ne.s32.totalorder %s181, %s182
    %p194 = scmp.eq.s32.totalorder %s25, 1
    %p195 = por %p193, %p194
    %p197 = scmp.ne.s32.totalorder %s182, %s196
    %p198 = scmp.eq.s32.totalorder %s25, 0
    %p199 = por %p197, %p198
    %s201 = sadd.s32 %s200, 1
    %p204 = scmp.eq.s32.totalorder %s19, 1
    %p205 = scmp.ne.s32.totalorder %s200, %s202
    %p206 = scmp.eq.s32.totalorder %s19, 0
    %p207 = por %p205, %p206
    %p208 = scmp.ne.s32.totalorder %s200, %s202
    %p209 = scmp.eq.s32.totalorder %s24, 1
    %p210 = por %p208, %p209
    %p211 = scmp.ne.s32.totalorder %s202, %s203
    %p212 = scmp.eq.s32.totalorder %s24, 0
    %p213 = por %p211, %p212
    %p214 = scmp.ne.s32.totalorder %s202, %s203
    %p215 = scmp.eq.s32.totalorder %s25, 1
    %p216 = por %p214, %p215
    %p218 = scmp.ne.s32.totalorder %s203, %s217
    %p219 = scmp.eq.s32.totalorder %s25, 0
    %p220 = por %p218, %p219
    %s222 = sadd.s32 %s221, 1
    %p225 = scmp.eq.s32.totalorder %s19, 1
    %p226 = scmp.ne.s32.totalorder %s221, %s223
    %p227 = scmp.eq.s32.totalorder %s19, 0
    %p228 = por %p226, %p227
    %p229 = scmp.ne.s32.totalorder %s221, %s223
    %p230 = scmp.eq.s32.totalorder %s24, 1
    %p231 = por %p229, %p230
    %p232 = scmp.ne.s32.totalorder %s223, %s224
    %p233 = scmp.eq.s32.totalorder %s24, 0
    %p234 = por %p232, %p233
    %p235 = scmp.ne.s32.totalorder %s223, %s224
    %p236 = scmp.eq.s32.totalorder %s25, 1
    %p237 = por %p235, %p236
    %p239 = scmp.ne.s32.totalorder %s224, %s238
    %p240 = scmp.eq.s32.totalorder %s25, 0
    %p241 = por %p239, %p240
    %s243 = sadd.s32 %s242, 1
    %p246 = scmp.eq.s32.totalorder %s19, 1
    %p247 = scmp.ne.s32.totalorder %s242, %s244
    %p248 = scmp.eq.s32.totalorder %s19, 0
    %p249 = por %p247, %p248
    %p250 = scmp.ne.s32.totalorder %s242, %s244
    %p251 = scmp.eq.s32.totalorder %s24, 1
    %p252 = por %p250, %p251
    %p253 = scmp.ne.s32.totalorder %s244, %s245
    %p254 = scmp.eq.s32.totalorder %s24, 0
    %p255 = por %p253, %p254
    %p256 = scmp.ne.s32.totalorder %s244, %s245
    %p257 = scmp.eq.s32.totalorder %s25, 1
    %p258 = por %p256, %p257
    %p260 = scmp.ne.s32.totalorder %s245, %s259
    %p261 = scmp.eq.s32.totalorder %s25, 0
    %p262 = por %p260, %p261
    %s264 = sadd.s32 %s263, 1
    %p267 = scmp.eq.s32.totalorder %s19, 1
    %p268 = scmp.ne.s32.totalorder %s263, %s265
    %p269 = scmp.eq.s32.totalorder %s19, 0
    %p270 = por %p268, %p269
    %p271 = scmp.ne.s32.totalorder %s263, %s265
    %p272 = scmp.eq.s32.totalorder %s24, 1
    %p273 = por %p271, %p272
    %p274 = scmp.ne.s32.totalorder %s265, %s266
    %p275 = scmp.eq.s32.totalorder %s24, 0
    %p276 = por %p274, %p275
    %p277 = scmp.ne.s32.totalorder %s265, %s266
    %p278 = scmp.eq.s32.totalorder %s25, 1
    %p279 = por %p277, %p278
    %p281 = scmp.ne.s32.totalorder %s266, %s280
    %p282 = scmp.eq.s32.totalorder %s25, 0
    %p283 = por %p281, %p282
    %s285 = sadd.s32 %s284, 1
    %p288 = scmp.eq.s32.totalorder %s19, 1
    %p289 = scmp.ne.s32.totalorder %s284, %s286
    %p290 = scmp.eq.s32.totalorder %s19, 0
    %p291 = por %p289, %p290
    %p292 = scmp.ne.s32.totalorder %s284, %s286
    %p293 = scmp.eq.s32.totalorder %s24, 1
    %p294 = por %p292, %p293
    %p295 = scmp.ne.s32.totalorder %s286, %s287
    %p296 = scmp.eq.s32.totalorder %s24, 0
    %p297 = por %p295, %p296
    %p298 = scmp.ne.s32.totalorder %s286, %s287
    %p299 = scmp.eq.s32.totalorder %s25, 1
    %p300 = por %p298, %p299
    %p302 = scmp.ne.s32.totalorder %s287, %s301
    %p303 = scmp.eq.s32.totalorder %s25, 0
    %p304 = por %p302, %p303
    %s305 = ssub.s32 %s19, %s26
    %p306 = scmp.eq.s32.totalorder %s305, 0
    %s308 = sadd.s32 %s307, 1
    %s309 = scalar_select %p306, %s307, %s308
    %p312 = pneg %p306
    %p313 = scmp.eq.s32.totalorder %s19, 1
    %p314 = por %p312, %p313
    %p315 = scmp.ne.s32.totalorder %s307, %s310
    %p316 = scmp.eq.s32.totalorder %s19, 0
    %p317 = por %p315, %p316
    %p318 = scmp.ne.s32.totalorder %s307, %s310
    %p319 = scmp.eq.s32.totalorder %s24, 1
    %p320 = por %p318, %p319
    %p321 = scmp.ne.s32.totalorder %s310, %s311
    %p322 = scmp.eq.s32.totalorder %s24, 0
    %p323 = por %p321, %p322
    %p324 = scmp.ne.s32.totalorder %s310, %s311
    %p325 = scmp.eq.s32.totalorder %s25, 1
    %p326 = por %p324, %p325
    %p328 = scmp.ne.s32.totalorder %s311, %s327
    %p329 = scmp.eq.s32.totalorder %s25, 0
    %p330 = por %p328, %p329
    %p331 = scmp.le.s32.totalorder 1, %s19
    %p332 = scmp.lt.s32.totalorder %s19, 3
    %p333 = pnand %p331, %p332
    %p334 = pneg %p333
    // Predicated region
    $region9: #{_lambda_.2} parent=5 // pred_check
      _
    $region10: #{_lambda_.2} parent=5 // pred_check_branch
      %336 = sbr.rel (%p333) target = $region12
    $region11: #{_lambda_.2} parent=5 // pred_region
      %s337 = ssub.s32 %s19, 1
      // Predicated region
      $region13: #{_lambda_.2} parent=11 // pred_check
        %p338 = pneg %p66
      $region14: #{_lambda_.2} parent=11 // pred_check_branch
        %340 = sbr.rel (%p338) target = $region16
      $region15: #{_lambda_.2} parent=11 // pred_region
        _
      $region16: #{_lambda_.2} parent=11 // pred_fallthru
        _
      // Predicated region
      $region17: #{_lambda_.2} parent=11 // pred_check
        %p341 = pneg %p87
      $region18: #{_lambda_.2} parent=11 // pred_check_branch
        %343 = sbr.rel (%p341) target = $region20
      $region19: #{_lambda_.2} parent=11 // pred_region
        _
      $region20: #{_lambda_.2} parent=11 // pred_fallthru
        _
      // Predicated region
      $region21: #{_lambda_.2} parent=11 // pred_check
        %p344 = pneg %p108
      $region22: #{_lambda_.2} parent=11 // pred_check_branch
        %346 = sbr.rel (%p344) target = $region24
      $region23: #{_lambda_.2} parent=11 // pred_region
        _
      $region24: #{_lambda_.2} parent=11 // pred_fallthru
        _
      // Predicated region
      $region25: #{_lambda_.2} parent=11 // pred_check
        %p347 = pneg %p129
      $region26: #{_lambda_.2} parent=11 // pred_check_branch
        %349 = sbr.rel (%p347) target = $region28
      $region27: #{_lambda_.2} parent=11 // pred_region
        _
      $region28: #{_lambda_.2} parent=11 // pred_fallthru
        _
      // Predicated region
      $region29: #{_lambda_.2} parent=11 // pred_check
        %p350 = pneg %p150
      $region30: #{_lambda_.2} parent=11 // pred_check_branch
        %352 = sbr.rel (%p350) target = $region32
      $region31: #{_lambda_.2} parent=11 // pred_region
        _
      $region32: #{_lambda_.2} parent=11 // pred_fallthru
        _
      // Predicated region
      $region33: #{_lambda_.2} parent=11 // pred_check
        %p353 = pneg %p171
      $region34: #{_lambda_.2} parent=11 // pred_check_branch
        %355 = sbr.rel (%p353) target = $region36
      $region35: #{_lambda_.2} parent=11 // pred_region
        _
      $region36: #{_lambda_.2} parent=11 // pred_fallthru
        _
      // Predicated region
      $region37: #{_lambda_.2} parent=11 // pred_check
        %p356 = pneg %p192
      $region38: #{_lambda_.2} parent=11 // pred_check_branch
        %358 = sbr.rel (%p356) target = $region40
      $region39: #{_lambda_.2} parent=11 // pred_region
        _
      $region40: #{_lambda_.2} parent=11 // pred_fallthru
        _
      // Predicated region
      $region41: #{_lambda_.2} parent=11 // pred_check
        %p359 = pneg %p213
      $region42: #{_lambda_.2} parent=11 // pred_check_branch
        %361 = sbr.rel (%p359) target = $region44
      $region43: #{_lambda_.2} parent=11 // pred_region
        _
      $region44: #{_lambda_.2} parent=11 // pred_fallthru
        _
      // Predicated region
      $region45: #{_lambda_.2} parent=11 // pred_check
        %p362 = pneg %p234
      $region46: #{_lambda_.2} parent=11 // pred_check_branch
        %364 = sbr.rel (%p362) target = $region48
      $region47: #{_lambda_.2} parent=11 // pred_region
        _
      $region48: #{_lambda_.2} parent=11 // pred_fallthru
        _
      // Predicated region
      $region49: #{_lambda_.2} parent=11 // pred_check
        %p365 = pneg %p255
      $region50: #{_lambda_.2} parent=11 // pred_check_branch
        %367 = sbr.rel (%p365) target = $region52
      $region51: #{_lambda_.2} parent=11 // pred_region
        _
      $region52: #{_lambda_.2} parent=11 // pred_fallthru
        _
      // Predicated region
      $region53: #{_lambda_.2} parent=11 // pred_check
        %p368 = pneg %p276
      $region54: #{_lambda_.2} parent=11 // pred_check_branch
        %370 = sbr.rel (%p368) target = $region56
      $region55: #{_lambda_.2} parent=11 // pred_region
        _
      $region56: #{_lambda_.2} parent=11 // pred_fallthru
        _
      // Predicated region
      $region57: #{_lambda_.2} parent=11 // pred_check
        %p371 = pneg %p297
      $region58: #{_lambda_.2} parent=11 // pred_check_branch
        %373 = sbr.rel (%p371) target = $region60
      $region59: #{_lambda_.2} parent=11 // pred_region
        _
      $region60: #{_lambda_.2} parent=11 // pred_fallthru
        _
    $region12: #{_lambda_.2} parent=5 // pred_fallthru
      _
    %p374 = scmp.lt.s32.totalorder %s19, 2
    // Predicated region
    $region61: #{_lambda_.2} parent=5 // pred_check
      %p375 = pneg %p374
    $region62: #{_lambda_.2} parent=5 // pred_check_branch
      %377 = sbr.rel (%p375) target = $region64
    $region63: #{_lambda_.2} parent=5 // pred_region
      // Predicated region
      $region65: #{_lambda_.2} parent=63 // pred_check
        %p378 = pneg %p39
      $region66: #{_lambda_.2} parent=63 // pred_check_branch
        %380 = sbr.rel (%p378) target = $region68
      $region67: #{_lambda_.2} parent=63 // pred_region
        %p381 = scmp.lt.s32.totalorder %s19, 1
        %s382 = scalar_select %p381, %s19, 1
        %s383 = smul.addr %s382, 8
        %s384 = scalar_lea.vmem %s0, %s383
      $region68: #{_lambda_.2} parent=63 // pred_fallthru
        _
    $region64: #{_lambda_.2} parent=5 // pred_fallthru
      _
    %p385 = scmp.le.s32.totalorder 1, %s19
    %p386 = scmp.lt.s32.totalorder %s19, 3
    %p387 = pnand %p385, %p386
    %p388 = pneg %p387
    // Predicated region
    $region69: #{_lambda_.2} parent=5 // pred_check
      _
    $region70: #{_lambda_.2} parent=5 // pred_check_branch
      %390 = sbr.rel (%p387) target = $region72
    $region71: #{_lambda_.2} parent=5 // pred_region
      %s391 = ssub.s32 %s19, 1
      %p392 = scmp.lt.s32.totalorder %s24, 1
      %s393 = scalar_select %p392, %s24, 1
      %s394 = smul.addr %s393, 8
      %s395 = scalar_lea.vmem %s0, %s394
      %p396 = pneg %p45
      %p397 = pneg %p42
      %p398 = pneg %p66
      %p399 = pneg %p63
      %p400 = pneg %p87
      %p401 = pneg %p84
      %p402 = pneg %p108
      %p403 = pneg %p105
      %p404 = pneg %p129
      %p405 = pneg %p126
      %p406 = pneg %p150
      %p407 = pneg %p147
      %p408 = pneg %p171
      %p409 = pneg %p168
      %p410 = pneg %p192
      %p411 = pneg %p189
      %p412 = pneg %p213
      %p413 = pneg %p210
      %p414 = pneg %p234
      %p415 = pneg %p231
      %p416 = pneg %p255
      %p417 = pneg %p252
      %p418 = pneg %p276
      %p419 = pneg %p273
      %p420 = pneg %p297
      %p421 = pneg %p294
      %p422 = pneg %p323
      %p423 = pneg %p320
      %p424 = scmp.lt.s32.totalorder %s24, 1
      %s425 = scalar_select %p424, %s24, 1
      %s426 = smul.addr %s425, 8
      %s427 = scalar_lea.vmem %s13, %s426
      %p428 = scmp.lt.s32.totalorder %s24, 1
      %s429 = scalar_select %p428, %s24, 1
      %s430 = smul.addr %s429, 8
      %s431 = scalar_lea.vmem %s0, %s430
      %p432 = scmp.lt.s32.totalorder %s24, 1
      %s433 = scalar_select %p432, %s24, 1
      %s434 = smul.addr %s433, 8
      %s435 = scalar_lea.vmem %s13, %s434
      %v436 = vld [vmem:[%s431] sm:$0xff]
      %v437 = vld [vmem:[%s1] sm:$0xff]
      %v438 = vld [vmem:[%s1 + $0x8] sm:$0xff]
      %v439 = vld [vmem:[%s1 + $0x10] sm:$0xff]
      %v440 = vld [vmem:[%s1 + $0x18] sm:$0xff]
      %v441 = vld [vmem:[%s2] sm:$0x1]
      %v443 = vlaneseq
      %v444 = vshrl.u32 %v443, 7
      %v445 = vsub.s32 0, %v444
      %v446 = vrot.slane %v441, %v445
      %vm448 = vcmask 261120
      %v450 = vsel %vm448, %v436, 0
      %452 = vmatprep.subr.mxu0 0.0
      %453 = vmatpush1.msra.mxu0 %v437
      %454 = vmatprep.subr.mxu0 0.0
      %455 = vmatpush1.msra.mxu0 %v438
      %456 = vmatprep.subr.mxu0 0.0
      %457 = vmatpush1.msra.mxu0 %v439
      %458 = vmatprep.subr.mxu0 0.0
      %459 = vmatpush1.msra.mxu0 %v440
      %460 = vmatprep.subr.mxu0 0.0
      %461 = vmatpush1.msra.mxu0 0.0
      %462 = vmatprep.subr.mxu0 0.0
      %463 = vmatpush1.msra.mxu0 0.0
      %464 = vmatprep.subr.mxu0 0.0
      %465 = vmatpush1.msra.mxu0 0.0
      %466 = vmatprep.subr.mxu0 0.0
      %467 = vmatpush1.msra.mxu0 0.0
      %468 = vmatprep.subr.mxu0 0.0
      %469 = vmatpush1.msra.mxu0 0.0
      %470 = vmatprep.subr.mxu0 0.0
      %471 = vmatpush1.msra.mxu0 0.0
      %472 = vmatprep.subr.mxu0 0.0
      %473 = vmatpush1.msra.mxu0 0.0
      %474 = vmatprep.subr.mxu0 0.0
      %475 = vmatpush1.msra.mxu0 0.0
      %476 = vmatprep.subr.mxu0 0.0
      %477 = vmatpush1.msra.mxu0 0.0
      %478 = vmatprep.subr.mxu0 0.0
      %479 = vmatpush1.msra.mxu0 0.0
      %480 = vmatprep.subr.mxu0 0.0
      %481 = vmatpush1.msra.mxu0 0.0
      %482 = vmatprep.subr.mxu0 0.0
      %483 = vmatpush1.msra.mxu0 0.0
      %484 = vmatprep.subr.mxu0 0.0
      %485 = vmatpush1.msra.mxu0 0.0
      %486 = vmatprep.subr.mxu0 0.0
      %487 = vmatpush1.msra.mxu0 0.0
      %488 = vmatprep.subr.mxu0 0.0
      %489 = vmatpush1.msra.mxu0 0.0
      %490 = vmatprep.subr.mxu0 0.0
      %491 = vmatpush1.msra.mxu0 0.0
      %492 = vmatprep.subr.mxu0 0.0
      %493 = vmatpush1.msra.mxu0 0.0
      %494 = vmatprep.subr.mxu0 0.0
      %495 = vmatpush1.msra.mxu0 0.0
      %496 = vmatprep.subr.mxu0 0.0
      %497 = vmatpush1.msra.mxu0 0.0
      %498 = vmatprep.subr.mxu0 0.0
      %499 = vmatpush1.msra.mxu0 0.0
      %500 = vmatprep.subr.mxu0 0.0
      %501 = vmatpush1.msra.mxu0 0.0
      %502 = vmatprep.subr.mxu0 0.0
      %503 = vmatpush1.msra.mxu0 0.0
      %504 = vmatprep.subr.mxu0 0.0
      %505 = vmatpush1.msra.mxu0 0.0
      %506 = vmatprep.subr.mxu0 0.0
      %507 = vmatpush1.msra.mxu0 0.0
      %508 = vmatprep.subr.mxu0 0.0
      %509 = vmatpush1.msra.mxu0 0.0
      %510 = vmatprep.subr.mxu0 0.0
      %511 = vmatpush1.msra.mxu0 0.0
      %512 = vmatprep.subr.mxu0 0.0
      %513 = vmatpush1.msra.mxu0 0.0
      %514 = vmatprep.subr.mxu0 0.0
      %515 = vmatpush1.msra.mxu0 0.0
      %516 = vmatprep.mubr.f32.mxu0 0.0
      %517 = vmatmul.mubr.f32.gmra.mrb[0].mxu0 %v450
      %v518 = vpop.f32.mrb[0].mxu0
      %v519 = vadd.f32 %v446, %v518
      %v520 = vpop.f32.mrb[0].mxu0
      %521 = vdwg.mxu0
      %523 = vrot.lane.b32.xlu0 %v519, 96
      %v524 = vpop.permute.xlu0 %523
      %vm525 = vcmask 64512
      %v526 = vsel %vm525, %v519, 0
      %v528 = vsel %vm525, %v524, 0
      %530 = vmatprep.subr.mxu0 0.0
      %531 = vmatpush1.xpose.msra.mxu0 %v528
      %532 = vmatprep.subr.mxu0 0.0
      %533 = vmatpush1.xpose.msra.mxu0 0.0
      %534 = vmatprep.subr.mxu0 0.0
      %535 = vmatpush1.xpose.msra.mxu0 0.0
      %536 = vmatprep.subr.mxu0 0.0
      %537 = vmatpush1.xpose.msra.mxu0 0.0
      %538 = vmatprep.subr.mxu0 0.0
      %539 = vmatpush1.xpose.msra.mxu0 0.0
      %540 = vmatprep.subr.mxu0 0.0
      %541 = vmatpush1.xpose.msra.mxu0 0.0
      %542 = vmatprep.subr.mxu0 0.0
      %543 = vmatpush1.xpose.msra.mxu0 0.0
      %544 = vmatprep.subr.mxu0 0.0
      %545 = vmatpush1.xpose.msra.mxu0 0.0
      %546 = vmatprep.subr.mxu0 0.0
      %547 = vmatpush1.xpose.msra.mxu0 0.0
      %548 = vmatprep.subr.mxu0 0.0
      %549 = vmatpush1.xpose.msra.mxu0 0.0
      %550 = vmatprep.subr.mxu0 0.0
      %551 = vmatpush1.xpose.msra.mxu0 0.0
      %552 = vmatprep.subr.mxu0 0.0
      %553 = vmatpush1.xpose.msra.mxu0 0.0
      %554 = vmatprep.subr.mxu0 0.0
      %555 = vmatpush1.xpose.msra.mxu0 0.0
      %556 = vmatprep.subr.mxu0 0.0
      %557 = vmatpush1.xpose.msra.mxu0 0.0
      %558 = vmatprep.subr.mxu0 0.0
      %559 = vmatpush1.xpose.msra.mxu0 0.0
      %560 = vmatprep.subr.mxu0 0.0
      %561 = vmatpush1.xpose.msra.mxu0 0.0
      %562 = vmatprep.subr.mxu0 0.0
      %563 = vmatpush1.xpose.msra.mxu0 0.0
      %564 = vmatprep.subr.mxu0 0.0
      %565 = vmatpush1.xpose.msra.mxu0 0.0
      %566 = vmatprep.subr.mxu0 0.0
      %567 = vmatpush1.xpose.msra.mxu0 0.0
      %568 = vmatprep.subr.mxu0 0.0
      %569 = vmatpush1.xpose.msra.mxu0 0.0
      %570 = vmatprep.subr.mxu0 0.0
      %571 = vmatpush1.xpose.msra.mxu0 0.0
      %572 = vmatprep.subr.mxu0 0.0
      %573 = vmatpush1.xpose.msra.mxu0 0.0
      %574 = vmatprep.subr.mxu0 0.0
      %575 = vmatpush1.xpose.msra.mxu0 0.0
      %576 = vmatprep.subr.mxu0 0.0
      %577 = vmatpush1.xpose.msra.mxu0 0.0
      %578 = vmatprep.subr.mxu0 0.0
      %579 = vmatpush1.xpose.msra.mxu0 0.0
      %580 = vmatprep.subr.mxu0 0.0
      %581 = vmatpush1.xpose.msra.mxu0 0.0
      %582 = vmatprep.subr.mxu0 0.0
      %583 = vmatpush1.xpose.msra.mxu0 0.0
      %584 = vmatprep.subr.mxu0 0.0
      %585 = vmatpush1.xpose.msra.mxu0 0.0
      %586 = vmatprep.subr.mxu0 0.0
      %587 = vmatpush1.xpose.msra.mxu0 0.0
      %588 = vmatprep.subr.mxu0 0.0
      %589 = vmatpush1.xpose.msra.mxu0 0.0
      %590 = vmatprep.subr.mxu0 0.0
      %591 = vmatpush1.xpose.msra.mxu0 0.0
      %592 = vmatprep.subr.mxu0 0.0
      %593 = vmatpush1.xpose.msra.mxu0 0.0
      %594 = vmatprep.mubr.f32.mxu0 0.0
      %595 = vmatmul.mubr.f32.gmra.mrb[0].mxu0 %v526
      %v596 = vpop.f32.mrb[0].mxu0
      %v597 = vadd.f32 0.0, %v596
      %v598 = vpop.f32.mrb[0].mxu0
      %599 = vdwg.mxu0
      %v600 = vmul.f32 %v597, 0.35355338
      %v601 = vsel %vm525, %v600, -inf
      %602 = vmax.xlane.f32.xlu0 %v601
      %v603 = vpop.xlane.xlu0 %602
      %v604 = vsub.f32 %v600, %v603
      %v605 = vmul.f32 %v604, 1.442695
      %v606 = vpow.pop %v605
      %v607 = vsel %vm525, %v606, 0.0
      %608 = vadd.xlane.f32.xlu0 %v607
      %v609 = vpop.xlane.xlu0 %608
      %v610 = vrcp.pop %v609
      %v611 = vmul.f32 %v606, %v610
      %612 = vrot.lane.b32.xlu0 %v519, 64
      %v613 = vpop.permute.xlu0 %612
      %v616 = vsel %vm525, %v611, 0
      %618 = vmatprep.subr.mxu0 0.0
      %619 = vmatpush1.msra.mxu0 %v613
      %620 = vmatprep.subr.mxu0 0.0
      %621 = vmatpush1.msra.mxu0 0.0
      %622 = vmatprep.subr.mxu0 0.0
      %623 = vmatpush1.msra.mxu0 0.0
      %624 = vmatprep.subr.mxu0 0.0
      %625 = vmatpush1.msra.mxu0 0.0
      %626 = vmatprep.subr.mxu0 0.0
      %627 = vmatpush1.msra.mxu0 0.0
      %628 = vmatprep.subr.mxu0 0.0
      %629 = vmatpush1.msra.mxu0 0.0
      %630 = vmatprep.subr.mxu0 0.0
      %631 = vmatpush1.msra.mxu0 0.0
      %632 = vmatprep.subr.mxu0 0.0
      %633 = vmatpush1.msra.mxu0 0.0
      %634 = vmatprep.subr.mxu0 0.0
      %635 = vmatpush1.msra.mxu0 0.0
      %636 = vmatprep.subr.mxu0 0.0
      %637 = vmatpush1.msra.mxu0 0.0
      %638 = vmatprep.subr.mxu0 0.0
      %639 = vmatpush1.msra.mxu0 0.0
      %640 = vmatprep.subr.mxu0 0.0
      %641 = vmatpush1.msra.mxu0 0.0
      %642 = vmatprep.subr.mxu0 0.0
      %643 = vmatpush1.msra.mxu0 0.0
      %644 = vmatprep.subr.mxu0 0.0
      %645 = vmatpush1.msra.mxu0 0.0
      %646 = vmatprep.subr.mxu0 0.0
      %647 = vmatpush1.msra.mxu0 0.0
      %648 = vmatprep.subr.mxu0 0.0
      %649 = vmatpush1.msra.mxu0 0.0
      %650 = vmatprep.subr.mxu0 0.0
      %651 = vmatpush1.msra.mxu0 0.0
      %652 = vmatprep.subr.mxu0 0.0
      %653 = vmatpush1.msra.mxu0 0.0
      %654 = vmatprep.subr.mxu0 0.0
      %655 = vmatpush1.msra.mxu0 0.0
      %656 = vmatprep.subr.mxu0 0.0
      %657 = vmatpush1.msra.mxu0 0.0
      %658 = vmatprep.subr.mxu0 0.0
      %659 = vmatpush1.msra.mxu0 0.0
      %660 = vmatprep.subr.mxu0 0.0
      %661 = vmatpush1.msra.mxu0 0.0
      %662 = vmatprep.subr.mxu0 0.0
      %663 = vmatpush1.msra.mxu0 0.0
      %664 = vmatprep.subr.mxu0 0.0
      %665 = vmatpush1.msra.mxu0 0.0
      %666 = vmatprep.subr.mxu0 0.0
      %667 = vmatpush1.msra.mxu0 0.0
      %668 = vmatprep.subr.mxu0 0.0
      %669 = vmatpush1.msra.mxu0 0.0
      %670 = vmatprep.subr.mxu0 0.0
      %671 = vmatpush1.msra.mxu0 0.0
      %672 = vmatprep.subr.mxu0 0.0
      %673 = vmatpush1.msra.mxu0 0.0
      %674 = vmatprep.subr.mxu0 0.0
      %675 = vmatpush1.msra.mxu0 0.0
      %676 = vmatprep.subr.mxu0 0.0
      %677 = vmatpush1.msra.mxu0 0.0
      %678 = vmatprep.subr.mxu0 0.0
      %679 = vmatpush1.msra.mxu0 0.0
      %680 = vmatprep.subr.mxu0 0.0
      %681 = vmatpush1.msra.mxu0 0.0
      %682 = vmatprep.mubr.f32.mxu0 0.0
      %683 = vmatmul.mubr.f32.gmra.mrb[0].mxu0 %v616
      %v684 = vpop.f32.mrb[0].mxu0
      %v685 = vadd.f32 0.0, %v684
      %v686 = vpop.f32.mrb[0].mxu0
      %687 = vdwg.mxu0
      %v688 = vld [vmem:[%s3] sm:$0xff]
      %689 = vrot.lane.b32.xlu0 %v519, 120
      %v690 = vpop.permute.xlu0 %689
      %691 = vrot.lane.b32.xlu0 %v519, 88
      %v692 = vpop.permute.xlu0 %691
      %v693 = vsel %vm525, %v690, 0
      %v695 = vsel %vm525, %v692, 0
      %697 = vmatprep.subr.mxu0 0.0
      %698 = vmatpush1.xpose.msra.mxu0 %v695
      %699 = vmatprep.subr.mxu0 0.0
      %700 = vmatpush1.xpose.msra.mxu0 0.0
      %701 = vmatprep.subr.mxu0 0.0
      %702 = vmatpush1.xpose.msra.mxu0 0.0
      %703 = vmatprep.subr.mxu0 0.0
      %704 = vmatpush1.xpose.msra.mxu0 0.0
      %705 = vmatprep.subr.mxu0 0.0
      %706 = vmatpush1.xpose.msra.mxu0 0.0
      %707 = vmatprep.subr.mxu0 0.0
      %708 = vmatpush1.xpose.msra.mxu0 0.0
      %709 = vmatprep.subr.mxu0 0.0
      %710 = vmatpush1.xpose.msra.mxu0 0.0
      %711 = vmatprep.subr.mxu0 0.0
      %712 = vmatpush1.xpose.msra.mxu0 0.0
      %713 = vmatprep.subr.mxu0 0.0
      %714 = vmatpush1.xpose.msra.mxu0 0.0
      %715 = vmatprep.subr.mxu0 0.0
      %716 = vmatpush1.xpose.msra.mxu0 0.0
      %717 = vmatprep.subr.mxu0 0.0
      %718 = vmatpush1.xpose.msra.mxu0 0.0
      %719 = vmatprep.subr.mxu0 0.0
      %720 = vmatpush1.xpose.msra.mxu0 0.0
      %721 = vmatprep.subr.mxu0 0.0
      %722 = vmatpush1.xpose.msra.mxu0 0.0
      %723 = vmatprep.subr.mxu0 0.0
      %724 = vmatpush1.xpose.msra.mxu0 0.0
      %725 = vmatprep.subr.mxu0 0.0
      %726 = vmatpush1.xpose.msra.mxu0 0.0
      %727 = vmatprep.subr.mxu0 0.0
      %728 = vmatpush1.xpose.msra.mxu0 0.0
      %729 = vmatprep.subr.mxu0 0.0
      %730 = vmatpush1.xpose.msra.mxu0 0.0
      %731 = vmatprep.subr.mxu0 0.0
      %732 = vmatpush1.xpose.msra.mxu0 0.0
      %733 = vmatprep.subr.mxu0 0.0
      %734 = vmatpush1.xpose.msra.mxu0 0.0
      %735 = vmatprep.subr.mxu0 0.0
      %736 = vmatpush1.xpose.msra.mxu0 0.0
      %737 = vmatprep.subr.mxu0 0.0
      %738 = vmatpush1.xpose.msra.mxu0 0.0
      %739 = vmatprep.subr.mxu0 0.0
      %740 = vmatpush1.xpose.msra.mxu0 0.0
      %741 = vmatprep.subr.mxu0 0.0
      %742 = vmatpush1.xpose.msra.mxu0 0.0
      %743 = vmatprep.subr.mxu0 0.0
      %744 = vmatpush1.xpose.msra.mxu0 0.0
      %745 = vmatprep.subr.mxu0 0.0
      %746 = vmatpush1.xpose.msra.mxu0 0.0
      %747 = vmatprep.subr.mxu0 0.0
      %748 = vmatpush1.xpose.msra.mxu0 0.0
      %749 = vmatprep.subr.mxu0 0.0
      %750 = vmatpush1.xpose.msra.mxu0 0.0
      %751 = vmatprep.subr.mxu0 0.0
      %752 = vmatpush1.xpose.msra.mxu0 0.0
      %753 = vmatprep.subr.mxu0 0.0
      %754 = vmatpush1.xpose.msra.mxu0 0.0
      %755 = vmatprep.subr.mxu0 0.0
      %756 = vmatpush1.xpose.msra.mxu0 0.0
      %757 = vmatprep.subr.mxu0 0.0
      %758 = vmatpush1.xpose.msra.mxu0 0.0
      %759 = vmatprep.subr.mxu0 0.0
      %760 = vmatpush1.xpose.msra.mxu0 0.0
      %761 = vmatprep.mubr.f32.mxu0 0.0
      %762 = vmatmul.mubr.f32.gmra.mrb[0].mxu0 %v693
      %v763 = vpop.f32.mrb[0].mxu0
      %v764 = vadd.f32 0.0, %v763
      %v765 = vpop.f32.mrb[0].mxu0
      %766 = vdwg.mxu0
      %v767 = vmul.f32 %v764, 0.35355338
      %v768 = vsel %vm525, %v767, -inf
      %769 = vmax.xlane.f32.xlu0 %v768
      %v770 = vpop.xlane.xlu0 %769
      %v771 = vsub.f32 %v767, %v770
      %v772 = vmul.f32 %v771, 1.442695
      %v773 = vpow.pop %v772
      %v774 = vsel %vm525, %v773, 0.0
      %775 = vadd.xlane.f32.xlu0 %v774
      %v776 = vpop.xlane.xlu0 %775
      %v777 = vrcp.pop %v776
      %v778 = vmul.f32 %v773, %v777
      %779 = vrot.lane.b32.xlu0 %v519, 56
      %v780 = vpop.permute.xlu0 %779
      %v783 = vsel %vm525, %v778, 0
      %785 = vmatprep.subr.mxu0 0.0
      %786 = vmatpush1.msra.mxu0 %v780
      %787 = vmatprep.subr.mxu0 0.0
      %788 = vmatpush1.msra.mxu0 0.0
      %789 = vmatprep.subr.mxu0 0.0
      %790 = vmatpush1.msra.mxu0 0.0
      %791 = vmatprep.subr.mxu0 0.0
      %792 = vmatpush1.msra.mxu0 0.0
      %793 = vmatprep.subr.mxu0 0.0
      %794 = vmatpush1.msra.mxu0 0.0
      %795 = vmatprep.subr.mxu0 0.0
      %796 = vmatpush1.msra.mxu0 0.0
      %797 = vmatprep.subr.mxu0 0.0
      %798 = vmatpush1.msra.mxu0 0.0
      %799 = vmatprep.subr.mxu0 0.0
      %800 = vmatpush1.msra.mxu0 0.0
      %801 = vmatprep.subr.mxu0 0.0
      %802 = vmatpush1.msra.mxu0 0.0
      %803 = vmatprep.subr.mxu0 0.0
      %804 = vmatpush1.msra.mxu0 0.0
      %805 = vmatprep.subr.mxu0 0.0
      %806 = vmatpush1.msra.mxu0 0.0
      %807 = vmatprep.subr.mxu0 0.0
      %808 = vmatpush1.msra.mxu0 0.0
      %809 = vmatprep.subr.mxu0 0.0
      %810 = vmatpush1.msra.mxu0 0.0
      %811 = vmatprep.subr.mxu0 0.0
      %812 = vmatpush1.msra.mxu0 0.0
      %813 = vmatprep.subr.mxu0 0.0
      %814 = vmatpush1.msra.mxu0 0.0
      %815 = vmatprep.subr.mxu0 0.0
      %816 = vmatpush1.msra.mxu0 0.0
      %817 = vmatprep.subr.mxu0 0.0
      %818 = vmatpush1.msra.mxu0 0.0
      %819 = vmatprep.subr.mxu0 0.0
      %820 = vmatpush1.msra.mxu0 0.0
      %821 = vmatprep.subr.mxu0 0.0
      %822 = vmatpush1.msra.mxu0 0.0
      %823 = vmatprep.subr.mxu0 0.0
      %824 = vmatpush1.msra.mxu0 0.0
      %825 = vmatprep.subr.mxu0 0.0
      %826 = vmatpush1.msra.mxu0 0.0
      %827 = vmatprep.subr.mxu0 0.0
      %828 = vmatpush1.msra.mxu0 0.0
      %829 = vmatprep.subr.mxu0 0.0
      %830 = vmatpush1.msra.mxu0 0.0
      %831 = vmatprep.subr.mxu0 0.0
      %832 = vmatpush1.msra.mxu0 0.0
      %833 = vmatprep.subr.mxu0 0.0
      %834 = vmatpush1.msra.mxu0 0.0
      %835 = vmatprep.subr.mxu0 0.0
      %836 = vmatpush1.msra.mxu0 0.0
      %837 = vmatprep.subr.mxu0 0.0
      %838 = vmatpush1.msra.mxu0 0.0
      %839 = vmatprep.subr.mxu0 0.0
      %840 = vmatpush1.msra.mxu0 0.0
      %841 = vmatprep.subr.mxu0 0.0
      %842 = vmatpush1.msra.mxu0 0.0
      %843 = vmatprep.subr.mxu0 0.0
      %844 = vmatpush1.msra.mxu0 0.0
      %845 = vmatprep.subr.mxu0 0.0
      %846 = vmatpush1.msra.mxu0 0.0
      %847 = vmatprep.subr.mxu0 0.0
      %848 = vmatpush1.msra.mxu0 0.0
      %849 = vmatprep.mubr.f32.mxu0 0.0
      %850 = vmatmul.mubr.f32.gmra.mrb[0].mxu0 %v783
      %v851 = vpop.f32.mrb[0].mxu0
      %v852 = vadd.f32 0.0, %v851
      %v853 = vpop.f32.mrb[0].mxu0
      %854 = vdwg.mxu0
      %v855 = vld [vmem:[%s3 + $0x8] sm:$0xff]
      %v857 = vsel %vm525, %v852, 0
      %859 = vmatprep.subr.mxu0 0.0
      %860 = vmatpush1.msra.mxu0 %v855
      %861 = vmatprep.subr.mxu0 0.0
      %862 = vmatpush1.msra.mxu0 0.0
      %863 = vmatprep.subr.mxu0 0.0
      %864 = vmatpush1.msra.mxu0 0.0
      %865 = vmatprep.subr.mxu0 0.0
      %866 = vmatpush1.msra.mxu0 0.0
      %867 = vmatprep.subr.mxu0 0.0
      %868 = vmatpush1.msra.mxu0 0.0
      %869 = vmatprep.subr.mxu0 0.0
      %870 = vmatpush1.msra.mxu0 0.0
      %871 = vmatprep.subr.mxu0 0.0
      %872 = vmatpush1.msra.mxu0 0.0
      %873 = vmatprep.subr.mxu0 0.0
      %874 = vmatpush1.msra.mxu0 0.0
      %875 = vmatprep.subr.mxu0 0.0
      %876 = vmatpush1.msra.mxu0 0.0
      %877 = vmatprep.subr.mxu0 0.0
      %878 = vmatpush1.msra.mxu0 0.0
      %879 = vmatprep.subr.mxu0 0.0
      %880 = vmatpush1.msra.mxu0 0.0
      %881 = vmatprep.subr.mxu0 0.0
      %882 = vmatpush1.msra.mxu0 0.0
      %883 = vmatprep.subr.mxu0 0.0
      %884 = vmatpush1.msra.mxu0 0.0
      %885 = vmatprep.subr.mxu0 0.0
      %886 = vmatpush1.msra.mxu0 0.0
      %887 = vmatprep.subr.mxu0 0.0
      %888 = vmatpush1.msra.mxu0 0.0
      %889 = vmatprep.subr.mxu0 0.0
      %890 = vmatpush1.msra.mxu0 0.0
      %891 = vmatprep.subr.mxu0 0.0
      %892 = vmatpush1.msra.mxu0 0.0
      %893 = vmatprep.subr.mxu0 0.0
      %894 = vmatpush1.msra.mxu0 0.0
      %895 = vmatprep.subr.mxu0 0.0
      %896 = vmatpush1.msra.mxu0 0.0
      %897 = vmatprep.subr.mxu0 0.0
      %898 = vmatpush1.msra.mxu0 0.0
      %899 = vmatprep.subr.mxu0 0.0
      %900 = vmatpush1.msra.mxu0 0.0
      %901 = vmatprep.subr.mxu0 0.0
      %902 = vmatpush1.msra.mxu0 0.0
      %903 = vmatprep.subr.mxu0 0.0
      %904 = vmatpush1.msra.mxu0 0.0
      %905 = vmatprep.subr.mxu0 0.0
      %906 = vmatpush1.msra.mxu0 0.0
      %907 = vmatprep.subr.mxu0 0.0
      %908 = vmatpush1.msra.mxu0 0.0
      %909 = vmatprep.subr.mxu0 0.0
      %910 = vmatpush1.msra.mxu0 0.0
      %911 = vmatprep.subr.mxu0 0.0
      %912 = vmatpush1.msra.mxu0 0.0
      %913 = vmatprep.subr.mxu0 0.0
      %914 = vmatpush1.msra.mxu0 0.0
      %915 = vmatprep.subr.mxu0 0.0
      %916 = vmatpush1.msra.mxu0 0.0
      %917 = vmatprep.subr.mxu0 0.0
      %918 = vmatpush1.msra.mxu0 0.0
      %919 = vmatprep.subr.mxu0 0.0
      %920 = vmatpush1.msra.mxu0 0.0
      %921 = vmatprep.subr.mxu0 0.0
      %922 = vmatpush1.msra.mxu0 0.0
      %923 = vmatprep.mubr.f32.mxu0 0.0
      %924 = vmatmul.mubr.f32.gmra.mrb[0].mxu0 %v857
      %v925 = vpop.f32.mrb[0].mxu0
      %v926 = vadd.f32 0.0, %v925
      %v927 = vpop.f32.mrb[0].mxu0
      %928 = vdwg.mxu0
      %v930 = vsel %vm525, %v685, 0
      %932 = vmatprep.subr.mxu0 0.0
      %933 = vmatpush1.msra.mxu0 %v688
      %934 = vmatprep.subr.mxu0 0.0
      %935 = vmatpush1.msra.mxu0 0.0
      %936 = vmatprep.subr.mxu0 0.0
      %937 = vmatpush1.msra.mxu0 0.0
      %938 = vmatprep.subr.mxu0 0.0
      %939 = vmatpush1.msra.mxu0 0.0
      %940 = vmatprep.subr.mxu0 0.0
      %941 = vmatpush1.msra.mxu0 0.0
      %942 = vmatprep.subr.mxu0 0.0
      %943 = vmatpush1.msra.mxu0 0.0
      %944 = vmatprep.subr.mxu0 0.0
      %945 = vmatpush1.msra.mxu0 0.0
      %946 = vmatprep.subr.mxu0 0.0
      %947 = vmatpush1.msra.mxu0 0.0
      %948 = vmatprep.subr.mxu0 0.0
      %949 = vmatpush1.msra.mxu0 0.0
      %950 = vmatprep.subr.mxu0 0.0
      %951 = vmatpush1.msra.mxu0 0.0
      %952 = vmatprep.subr.mxu0 0.0
      %953 = vmatpush1.msra.mxu0 0.0
      %954 = vmatprep.subr.mxu0 0.0
      %955 = vmatpush1.msra.mxu0 0.0
      %956 = vmatprep.subr.mxu0 0.0
      %957 = vmatpush1.msra.mxu0 0.0
      %958 = vmatprep.subr.mxu0 0.0
      %959 = vmatpush1.msra.mxu0 0.0
      %960 = vmatprep.subr.mxu0 0.0
      %961 = vmatpush1.msra.mxu0 0.0
      %962 = vmatprep.subr.mxu0 0.0
      %963 = vmatpush1.msra.mxu0 0.0
      %964 = vmatprep.subr.mxu0 0.0
      %965 = vmatpush1.msra.mxu0 0.0
      %966 = vmatprep.subr.mxu0 0.0
      %967 = vmatpush1.msra.mxu0 0.0
      %968 = vmatprep.subr.mxu0 0.0
      %969 = vmatpush1.msra.mxu0 0.0
      %970 = vmatprep.subr.mxu0 0.0
      %971 = vmatpush1.msra.mxu0 0.0
      %972 = vmatprep.subr.mxu0 0.0
      %973 = vmatpush1.msra.mxu0 0.0
      %974 = vmatprep.subr.mxu0 0.0
      %975 = vmatpush1.msra.mxu0 0.0
      %976 = vmatprep.subr.mxu0 0.0
      %977 = vmatpush1.msra.mxu0 0.0
      %978 = vmatprep.subr.mxu0 0.0
      %979 = vmatpush1.msra.mxu0 0.0
      %980 = vmatprep.subr.mxu0 0.0
      %981 = vmatpush1.msra.mxu0 0.0
      %982 = vmatprep.subr.mxu0 0.0
      %983 = vmatpush1.msra.mxu0 0.0
      %984 = vmatprep.subr.mxu0 0.0
      %985 = vmatpush1.msra.mxu0 0.0
      %986 = vmatprep.subr.mxu0 0.0
      %987 = vmatpush1.msra.mxu0 0.0
      %988 = vmatprep.subr.mxu0 0.0
      %989 = vmatpush1.msra.mxu0 0.0
      %990 = vmatprep.subr.mxu0 0.0
      %991 = vmatpush1.msra.mxu0 0.0
      %992 = vmatprep.subr.mxu0 0.0
      %993 = vmatpush1.msra.mxu0 0.0
      %994 = vmatprep.subr.mxu0 0.0
      %995 = vmatpush1.msra.mxu0 0.0
      %996 = vmatprep.mubr.f32.mxu0 0.0
      %997 = vmatmul.mubr.f32.gmra.mrb[0].mxu0 %v930
      %v998 = vpop.f32.mrb[0].mxu0
      %v999 = vadd.f32 %v926, %v998
      %v1000 = vpop.f32.mrb[0].mxu0
      %1001 = vdwg.mxu0
      %1002 = vrot.lane.b32.xlu0 %v519, 112
      %v1003 = vpop.permute.xlu0 %1002
      %1004 = vrot.lane.b32.xlu0 %v519, 80
      %v1005 = vpop.permute.xlu0 %1004
      %v1006 = vsel %vm525, %v1003, 0
      %v1008 = vsel %vm525, %v1005, 0
      %1010 = vmatprep.subr.mxu0 0.0
      %1011 = vmatpush1.xpose.msra.mxu0 %v1008
      %1012 = vmatprep.subr.mxu0 0.0
      %1013 = vmatpush1.xpose.msra.mxu0 0.0
      %1014 = vmatprep.subr.mxu0 0.0
      %1015 = vmatpush1.xpose.msra.mxu0 0.0
      %1016 = vmatprep.subr.mxu0 0.0
      %1017 = vmatpush1.xpose.msra.mxu0 0.0
      %1018 = vmatprep.subr.mxu0 0.0
      %1019 = vmatpush1.xpose.msra.mxu0 0.0
      %1020 = vmatprep.subr.mxu0 0.0
      %1021 = vmatpush1.xpose.msra.mxu0 0.0
      %1022 = vmatprep.subr.mxu0 0.0
      %1023 = vmatpush1.xpose.msra.mxu0 0.0
      %1024 = vmatprep.subr.mxu0 0.0
      %1025 = vmatpush1.xpose.msra.mxu0 0.0
      %1026 = vmatprep.subr.mxu0 0.0
      %1027 = vmatpush1.xpose.msra.mxu0 0.0
      %1028 = vmatprep.subr.mxu0 0.0
      %1029 = vmatpush1.xpose.msra.mxu0 0.0
      %1030 = vmatprep.subr.mxu0 0.0
      %1031 = vmatpush1.xpose.msra.mxu0 0.0
      %1032 = vmatprep.subr.mxu0 0.0
      %1033 = vmatpush1.xpose.msra.mxu0 0.0
      %1034 = vmatprep.subr.mxu0 0.0
      %1035 = vmatpush1.xpose.msra.mxu0 0.0
      %1036 = vmatprep.subr.mxu0 0.0
      %1037 = vmatpush1.xpose.msra.mxu0 0.0
      %1038 = vmatprep.subr.mxu0 0.0
      %1039 = vmatpush1.xpose.msra.mxu0 0.0
      %1040 = vmatprep.subr.mxu0 0.0
      %1041 = vmatpush1.xpose.msra.mxu0 0.0
      %1042 = vmatprep.subr.mxu0 0.0
      %1043 = vmatpush1.xpose.msra.mxu0 0.0
      %1044 = vmatprep.subr.mxu0 0.0
      %1045 = vmatpush1.xpose.msra.mxu0 0.0
      %1046 = vmatprep.subr.mxu0 0.0
      %1047 = vmatpush1.xpose.msra.mxu0 0.0
      %1048 = vmatprep.subr.mxu0 0.0
      %1049 = vmatpush1.xpose.msra.mxu0 0.0
      %1050 = vmatprep.subr.mxu0 0.0
      %1051 = vmatpush1.xpose.msra.mxu0 0.0
      %1052 = vmatprep.subr.mxu0 0.0
      %1053 = vmatpush1.xpose.msra.mxu0 0.0
      %1054 = vmatprep.subr.mxu0 0.0
      %1055 = vmatpush1.xpose.msra.mxu0 0.0
      %1056 = vmatprep.subr.mxu0 0.0
      %1057 = vmatpush1.xpose.msra.mxu0 0.0
      %1058 = vmatprep.subr.mxu0 0.0
      %1059 = vmatpush1.xpose.msra.mxu0 0.0
      %1060 = vmatprep.subr.mxu0 0.0
      %1061 = vmatpush1.xpose.msra.mxu0 0.0
      %1062 = vmatprep.subr.mxu0 0.0
      %1063 = vmatpush1.xpose.msra.mxu0 0.0
      %1064 = vmatprep.subr.mxu0 0.0
      %1065 = vmatpush1.xpose.msra.mxu0 0.0
      %1066 = vmatprep.subr.mxu0 0.0
      %1067 = vmatpush1.xpose.msra.mxu0 0.0
      %1068 = vmatprep.subr.mxu0 0.0
      %1069 = vmatpush1.xpose.msra.mxu0 0.0
      %1070 = vmatprep.subr.mxu0 0.0
      %1071 = vmatpush1.xpose.msra.mxu0 0.0
      %1072 = vmatprep.subr.mxu0 0.0
      %1073 = vmatpush1.xpose.msra.mxu0 0.0
      %1074 = vmatprep.mubr.f32.mxu0 0.0
      %1075 = vmatmul.mubr.f32.gmra.mrb[0].mxu0 %v1006
      %v1076 = vpop.f32.mrb[0].mxu0
      %v1077 = vadd.f32 0.0, %v1076
      %v1078 = vpop.f32.mrb[0].mxu0
      %1079 = vdwg.mxu0
      %v1080 = vmul.f32 %v1077, 0.35355338
      %v1081 = vsel %vm525, %v1080, -inf
      %1082 = vmax.xlane.f32.xlu0 %v1081
      %v1083 = vpop.xlane.xlu0 %1082
      %v1084 = vsub.f32 %v1080, %v1083
      %v1085 = vmul.f32 %v1084, 1.442695
      %v1086 = vpow.pop %v1085
      %v1087 = vsel %vm525, %v1086, 0.0
      %1088 = vadd.xlane.f32.xlu0 %v1087
      %v1089 = vpop.xlane.xlu0 %1088
      %v1090 = vrcp.pop %v1089
      %v1091 = vmul.f32 %v1086, %v1090
      %1092 = vrot.lane.b32.xlu0 %v519, 48
      %v1093 = vpop.permute.xlu0 %1092
      %v1096 = vsel %vm525, %v1091, 0
      %1098 = vmatprep.subr.mxu0 0.0
      %1099 = vmatpush1.msra.mxu0 %v1093
      %1100 = vmatprep.subr.mxu0 0.0
      %1101 = vmatpush1.msra.mxu0 0.0
      %1102 = vmatprep.subr.mxu0 0.0
      %1103 = vmatpush1.msra.mxu0 0.0
      %1104 = vmatprep.subr.mxu0 0.0
      %1105 = vmatpush1.msra.mxu0 0.0
      %1106 = vmatprep.subr.mxu0 0.0
      %1107 = vmatpush1.msra.mxu0 0.0
      %1108 = vmatprep.subr.mxu0 0.0
      %1109 = vmatpush1.msra.mxu0 0.0
      %1110 = vmatprep.subr.mxu0 0.0
      %1111 = vmatpush1.msra.mxu0 0.0
      %1112 = vmatprep.subr.mxu0 0.0
      %1113 = vmatpush1.msra.mxu0 0.0
      %1114 = vmatprep.subr.mxu0 0.0
      %1115 = vmatpush1.msra.mxu0 0.0
      %1116 = vmatprep.subr.mxu0 0.0
      %1117 = vmatpush1.msra.mxu0 0.0
      %1118 = vmatprep.subr.mxu0 0.0
      %1119 = vmatpush1.msra.mxu0 0.0
      %1120 = vmatprep.subr.mxu0 0.0
      %1121 = vmatpush1.msra.mxu0 0.0
      %1122 = vmatprep.subr.mxu0 0.0
      %1123 = vmatpush1.msra.mxu0 0.0
      %1124 = vmatprep.subr.mxu0 0.0
      %1125 = vmatpush1.msra.mxu0 0.0
      %1126 = vmatprep.subr.mxu0 0.0
      %1127 = vmatpush1.msra.mxu0 0.0
      %1128 = vmatprep.subr.mxu0 0.0
      %1129 = vmatpush1.msra.mxu0 0.0
      %1130 = vmatprep.subr.mxu0 0.0
      %1131 = vmatpush1.msra.mxu0 0.0
      %1132 = vmatprep.subr.mxu0 0.0
      %1133 = vmatpush1.msra.mxu0 0.0
      %1134 = vmatprep.subr.mxu0 0.0
      %1135 = vmatpush1.msra.mxu0 0.0
      %1136 = vmatprep.subr.mxu0 0.0
      %1137 = vmatpush1.msra.mxu0 0.0
      %1138 = vmatprep.subr.mxu0 0.0
      %1139 = vmatpush1.msra.mxu0 0.0
      %1140 = vmatprep.subr.mxu0 0.0
      %1141 = vmatpush1.msra.mxu0 0.0
      %1142 = vmatprep.subr.mxu0 0.0
      %1143 = vmatpush1.msra.mxu0 0.0
      %1144 = vmatprep.subr.mxu0 0.0
      %1145 = vmatpush1.msra.mxu0 0.0
      %1146 = vmatprep.subr.mxu0 0.0
      %1147 = vmatpush1.msra.mxu0 0.0
      %1148 = vmatprep.subr.mxu0 0.0
      %1149 = vmatpush1.msra.mxu0 0.0
      %1150 = vmatprep.subr.mxu0 0.0
      %1151 = vmatpush1.msra.mxu0 0.0
      %1152 = vmatprep.subr.mxu0 0.0
      %1153 = vmatpush1.msra.mxu0 0.0
      %1154 = vmatprep.subr.mxu0 0.0
      %1155 = vmatpush1.msra.mxu0 0.0
      %1156 = vmatprep.subr.mxu0 0.0
      %1157 = vmatpush1.msra.mxu0 0.0
      %1158 = vmatprep.subr.mxu0 0.0
      %1159 = vmatpush1.msra.mxu0 0.0
      %1160 = vmatprep.subr.mxu0 0.0
      %1161 = vmatpush1.msra.mxu0 0.0
      %1162 = vmatprep.mubr.f32.mxu0 0.0
      %1163 = vmatmul.mubr.f32.gmra.mrb[0].mxu0 %v1096
      %v1164 = vpop.f32.mrb[0].mxu0
      %v1165 = vadd.f32 0.0, %v1164
      %v1166 = vpop.f32.mrb[0].mxu0
      %1167 = vdwg.mxu0
      %v1168 = vld [vmem:[%s3 + $0x10] sm:$0xff]
      %v1170 = vsel %vm525, %v1165, 0
      %1172 = vmatprep.subr.mxu0 0.0
      %1173 = vmatpush1.msra.mxu0 %v1168
      %1174 = vmatprep.subr.mxu0 0.0
      %1175 = vmatpush1.msra.mxu0 0.0
      %1176 = vmatprep.subr.mxu0 0.0
      %1177 = vmatpush1.msra.mxu0 0.0
      %1178 = vmatprep.subr.mxu0 0.0
      %1179 = vmatpush1.msra.mxu0 0.0
      %1180 = vmatprep.subr.mxu0 0.0
      %1181 = vmatpush1.msra.mxu0 0.0
      %1182 = vmatprep.subr.mxu0 0.0
      %1183 = vmatpush1.msra.mxu0 0.0
      %1184 = vmatprep.subr.mxu0 0.0
      %1185 = vmatpush1.msra.mxu0 0.0
      %1186 = vmatprep.subr.mxu0 0.0
      %1187 = vmatpush1.msra.mxu0 0.0
      %1188 = vmatprep.subr.mxu0 0.0
      %1189 = vmatpush1.msra.mxu0 0.0
      %1190 = vmatprep.subr.mxu0 0.0
      %1191 = vmatpush1.msra.mxu0 0.0
      %1192 = vmatprep.subr.mxu0 0.0
      %1193 = vmatpush1.msra.mxu0 0.0
      %1194 = vmatprep.subr.mxu0 0.0
      %1195 = vmatpush1.msra.mxu0 0.0
      %1196 = vmatprep.subr.mxu0 0.0
      %1197 = vmatpush1.msra.mxu0 0.0
      %1198 = vmatprep.subr.mxu0 0.0
      %1199 = vmatpush1.msra.mxu0 0.0
      %1200 = vmatprep.subr.mxu0 0.0
      %1201 = vmatpush1.msra.mxu0 0.0
      %1202 = vmatprep.subr.mxu0 0.0
      %1203 = vmatpush1.msra.mxu0 0.0
      %1204 = vmatprep.subr.mxu0 0.0
      %1205 = vmatpush1.msra.mxu0 0.0
      %1206 = vmatprep.subr.mxu0 0.0
      %1207 = vmatpush1.msra.mxu0 0.0
      %1208 = vmatprep.subr.mxu0 0.0
      %1209 = vmatpush1.msra.mxu0 0.0
      %1210 = vmatprep.subr.mxu0 0.0
      %1211 = vmatpush1.msra.mxu0 0.0
      %1212 = vmatprep.subr.mxu0 0.0
      %1213 = vmatpush1.msra.mxu0 0.0
      %1214 = vmatprep.subr.mxu0 0.0
      %1215 = vmatpush1.msra.mxu0 0.0
      %1216 = vmatprep.subr.mxu0 0.0
      %1217 = vmatpush1.msra.mxu0 0.0
      %1218 = vmatprep.subr.mxu0 0.0
      %1219 = vmatpush1.msra.mxu0 0.0
      %1220 = vmatprep.subr.mxu0 0.0
      %1221 = vmatpush1.msra.mxu0 0.0
      %1222 = vmatprep.subr.mxu0 0.0
      %1223 = vmatpush1.msra.mxu0 0.0
      %1224 = vmatprep.subr.mxu0 0.0
      %1225 = vmatpush1.msra.mxu0 0.0
      %1226 = vmatprep.subr.mxu0 0.0
      %1227 = vmatpush1.msra.mxu0 0.0
      %1228 = vmatprep.subr.mxu0 0.0
      %1229 = vmatpush1.msra.mxu0 0.0
      %1230 = vmatprep.subr.mxu0 0.0
      %1231 = vmatpush1.msra.mxu0 0.0
      %1232 = vmatprep.subr.mxu0 0.0
      %1233 = vmatpush1.msra.mxu0 0.0
      %1234 = vmatprep.subr.mxu0 0.0
      %1235 = vmatpush1.msra.mxu0 0.0
      %1236 = vmatprep.mubr.f32.mxu0 0.0
      %1237 = vmatmul.mubr.f32.gmra.mrb[0].mxu0 %v1170
      %v1238 = vpop.f32.mrb[0].mxu0
      %v1239 = vadd.f32 0.0, %v1238
      %v1240 = vpop.f32.mrb[0].mxu0
      %1241 = vdwg.mxu0
      %v1242 = vadd.f32 %v999, %v1239
      %1243 = vrot.lane.b32.xlu0 %v519, 104
      %v1244 = vpop.permute.xlu0 %1243
      %1245 = vrot.lane.b32.xlu0 %v519, 72
      %v1246 = vpop.permute.xlu0 %1245
      %v1247 = vsel %vm525, %v1244, 0
      %v1249 = vsel %vm525, %v1246, 0
      %1251 = vmatprep.subr.mxu0 0.0
      %1252 = vmatpush1.xpose.msra.mxu0 %v1249
      %1253 = vmatprep.subr.mxu0 0.0
      %1254 = vmatpush1.xpose.msra.mxu0 0.0
      %1255 = vmatprep.subr.mxu0 0.0
      %1256 = vmatpush1.xpose.msra.mxu0 0.0
      %1257 = vmatprep.subr.mxu0 0.0
      %1258 = vmatpush1.xpose.msra.mxu0 0.0
      %1259 = vmatprep.subr.mxu0 0.0
      %1260 = vmatpush1.xpose.msra.mxu0 0.0
      %1261 = vmatprep.subr.mxu0 0.0
      %1262 = vmatpush1.xpose.msra.mxu0 0.0
      %1263 = vmatprep.subr.mxu0 0.0
      %1264 = vmatpush1.xpose.msra.mxu0 0.0
      %1265 = vmatprep.subr.mxu0 0.0
      %1266 = vmatpush1.xpose.msra.mxu0 0.0
      %1267 = vmatprep.subr.mxu0 0.0
      %1268 = vmatpush1.xpose.msra.mxu0 0.0
      %1269 = vmatprep.subr.mxu0 0.0
      %1270 = vmatpush1.xpose.msra.mxu0 0.0
      %1271 = vmatprep.subr.mxu0 0.0
      %1272 = vmatpush1.xpose.msra.mxu0 0.0
      %1273 = vmatprep.subr.mxu0 0.0
      %1274 = vmatpush1.xpose.msra.mxu0 0.0
      %1275 = vmatprep.subr.mxu0 0.0
      %1276 = vmatpush1.xpose.msra.mxu0 0.0
      %1277 = vmatprep.subr.mxu0 0.0
      %1278 = vmatpush1.xpose.msra.mxu0 0.0
      %1279 = vmatprep.subr.mxu0 0.0
      %1280 = vmatpush1.xpose.msra.mxu0 0.0
      %1281 = vmatprep.subr.mxu0 0.0
      %1282 = vmatpush1.xpose.msra.mxu0 0.0
      %1283 = vmatprep.subr.mxu0 0.0
      %1284 = vmatpush1.xpose.msra.mxu0 0.0
      %1285 = vmatprep.subr.mxu0 0.0
      %1286 = vmatpush1.xpose.msra.mxu0 0.0
      %1287 = vmatprep.subr.mxu0 0.0
      %1288 = vmatpush1.xpose.msra.mxu0 0.0
      %1289 = vmatprep.subr.mxu0 0.0
      %1290 = vmatpush1.xpose.msra.mxu0 0.0
      %1291 = vmatprep.subr.mxu0 0.0
      %1292 = vmatpush1.xpose.msra.mxu0 0.0
      %1293 = vmatprep.subr.mxu0 0.0
      %1294 = vmatpush1.xpose.msra.mxu0 0.0
      %1295 = vmatprep.subr.mxu0 0.0
      %1296 = vmatpush1.xpose.msra.mxu0 0.0
      %1297 = vmatprep.subr.mxu0 0.0
      %1298 = vmatpush1.xpose.msra.mxu0 0.0
      %1299 = vmatprep.subr.mxu0 0.0
      %1300 = vmatpush1.xpose.msra.mxu0 0.0
      %1301 = vmatprep.subr.mxu0 0.0
      %1302 = vmatpush1.xpose.msra.mxu0 0.0
      %1303 = vmatprep.subr.mxu0 0.0
      %1304 = vmatpush1.xpose.msra.mxu0 0.0
      %1305 = vmatprep.subr.mxu0 0.0
      %1306 = vmatpush1.xpose.msra.mxu0 0.0
      %1307 = vmatprep.subr.mxu0 0.0
      %1308 = vmatpush1.xpose.msra.mxu0 0.0
      %1309 = vmatprep.subr.mxu0 0.0
      %1310 = vmatpush1.xpose.msra.mxu0 0.0
      %1311 = vmatprep.subr.mxu0 0.0
      %1312 = vmatpush1.xpose.msra.mxu0 0.0
      %1313 = vmatprep.subr.mxu0 0.0
      %1314 = vmatpush1.xpose.msra.mxu0 0.0
      %1315 = vmatprep.mubr.f32.mxu0 0.0
      %1316 = vmatmul.mubr.f32.gmra.mrb[0].mxu0 %v1247
      %v1317 = vpop.f32.mrb[0].mxu0
      %v1318 = vadd.f32 0.0, %v1317
      %v1319 = vpop.f32.mrb[0].mxu0
      %1320 = vdwg.mxu0
      %v1321 = vmul.f32 %v1318, 0.35355338
      %v1322 = vsel %vm525, %v1321, -inf
      %1323 = vmax.xlane.f32.xlu0 %v1322
      %v1324 = vpop.xlane.xlu0 %1323
      %v1325 = vsub.f32 %v1321, %v1324
      %v1326 = vmul.f32 %v1325, 1.442695
      %v1327 = vpow.pop %v1326
      %v1328 = vsel %vm525, %v1327, 0.0
      %1329 = vadd.xlane.f32.xlu0 %v1328
      %v1330 = vpop.xlane.xlu0 %1329
      %v1331 = vrcp.pop %v1330
      %v1332 = vmul.f32 %v1327, %v1331
      %1333 = vrot.lane.b32.xlu0 %v519, 40
      %v1334 = vpop.permute.xlu0 %1333
      %v1337 = vsel %vm525, %v1332, 0
      %1339 = vmatprep.subr.mxu0 0.0
      %1340 = vmatpush1.msra.mxu0 %v1334
      %1341 = vmatprep.subr.mxu0 0.0
      %1342 = vmatpush1.msra.mxu0 0.0
      %1343 = vmatprep.subr.mxu0 0.0
      %1344 = vmatpush1.msra.mxu0 0.0
      %1345 = vmatprep.subr.mxu0 0.0
      %1346 = vmatpush1.msra.mxu0 0.0
      %1347 = vmatprep.subr.mxu0 0.0
      %1348 = vmatpush1.msra.mxu0 0.0
      %1349 = vmatprep.subr.mxu0 0.0
      %1350 = vmatpush1.msra.mxu0 0.0
      %1351 = vmatprep.subr.mxu0 0.0
      %1352 = vmatpush1.msra.mxu0 0.0
      %1353 = vmatprep.subr.mxu0 0.0
      %1354 = vmatpush1.msra.mxu0 0.0
      %1355 = vmatprep.subr.mxu0 0.0
      %1356 = vmatpush1.msra.mxu0 0.0
      %1357 = vmatprep.subr.mxu0 0.0
      %1358 = vmatpush1.msra.mxu0 0.0
      %1359 = vmatprep.subr.mxu0 0.0
      %1360 = vmatpush1.msra.mxu0 0.0
      %1361 = vmatprep.subr.mxu0 0.0
      %1362 = vmatpush1.msra.mxu0 0.0
      %1363 = vmatprep.subr.mxu0 0.0
      %1364 = vmatpush1.msra.mxu0 0.0
      %1365 = vmatprep.subr.mxu0 0.0
      %1366 = vmatpush1.msra.mxu0 0.0
      %1367 = vmatprep.subr.mxu0 0.0
      %1368 = vmatpush1.msra.mxu0 0.0
      %1369 = vmatprep.subr.mxu0 0.0
      %1370 = vmatpush1.msra.mxu0 0.0
      %1371 = vmatprep.subr.mxu0 0.0
      %1372 = vmatpush1.msra.mxu0 0.0
      %1373 = vmatprep.subr.mxu0 0.0
      %1374 = vmatpush1.msra.mxu0 0.0
      %1375 = vmatprep.subr.mxu0 0.0
      %1376 = vmatpush1.msra.mxu0 0.0
      %1377 = vmatprep.subr.mxu0 0.0
      %1378 = vmatpush1.msra.mxu0 0.0
      %1379 = vmatprep.subr.mxu0 0.0
      %1380 = vmatpush1.msra.mxu0 0.0
      %1381 = vmatprep.subr.mxu0 0.0
      %1382 = vmatpush1.msra.mxu0 0.0
      %1383 = vmatprep.subr.mxu0 0.0
      %1384 = vmatpush1.msra.mxu0 0.0
      %1385 = vmatprep.subr.mxu0 0.0
      %1386 = vmatpush1.msra.mxu0 0.0
      %1387 = vmatprep.subr.mxu0 0.0
      %1388 = vmatpush1.msra.mxu0 0.0
      %1389 = vmatprep.subr.mxu0 0.0
      %1390 = vmatpush1.msra.mxu0 0.0
      %1391 = vmatprep.subr.mxu0 0.0
      %1392 = vmatpush1.msra.mxu0 0.0
      %1393 = vmatprep.subr.mxu0 0.0
      %1394 = vmatpush1.msra.mxu0 0.0
      %1395 = vmatprep.subr.mxu0 0.0
      %1396 = vmatpush1.msra.mxu0 0.0
      %1397 = vmatprep.subr.mxu0 0.0
      %1398 = vmatpush1.msra.mxu0 0.0
      %1399 = vmatprep.subr.mxu0 0.0
      %1400 = vmatpush1.msra.mxu0 0.0
      %1401 = vmatprep.subr.mxu0 0.0
      %1402 = vmatpush1.msra.mxu0 0.0
      %1403 = vmatprep.mubr.f32.mxu0 0.0
      %1404 = vmatmul.mubr.f32.gmra.mrb[0].mxu0 %v1337
      %v1405 = vpop.f32.mrb[0].mxu0
      %v1406 = vadd.f32 0.0, %v1405
      %v1407 = vpop.f32.mrb[0].mxu0
      %1408 = vdwg.mxu0
      %v1409 = vld [vmem:[%s3 + $0x18] sm:$0xff]
      %v1411 = vsel %vm525, %v1406, 0
      %1413 = vmatprep.subr.mxu0 0.0
      %1414 = vmatpush1.msra.mxu0 %v1409
      %1415 = vmatprep.subr.mxu0 0.0
      %1416 = vmatpush1.msra.mxu0 0.0
      %1417 = vmatprep.subr.mxu0 0.0
      %1418 = vmatpush1.msra.mxu0 0.0
      %1419 = vmatprep.subr.mxu0 0.0
      %1420 = vmatpush1.msra.mxu0 0.0
      %1421 = vmatprep.subr.mxu0 0.0
      %1422 = vmatpush1.msra.mxu0 0.0
      %1423 = vmatprep.subr.mxu0 0.0
      %1424 = vmatpush1.msra.mxu0 0.0
      %1425 = vmatprep.subr.mxu0 0.0
      %1426 = vmatpush1.msra.mxu0 0.0
      %1427 = vmatprep.subr.mxu0 0.0
      %1428 = vmatpush1.msra.mxu0 0.0
      %1429 = vmatprep.subr.mxu0 0.0
      %1430 = vmatpush1.msra.mxu0 0.0
      %1431 = vmatprep.subr.mxu0 0.0
      %1432 = vmatpush1.msra.mxu0 0.0
      %1433 = vmatprep.subr.mxu0 0.0
      %1434 = vmatpush1.msra.mxu0 0.0
      %1435 = vmatprep.subr.mxu0 0.0
      %1436 = vmatpush1.msra.mxu0 0.0
      %1437 = vmatprep.subr.mxu0 0.0
      %1438 = vmatpush1.msra.mxu0 0.0
      %1439 = vmatprep.subr.mxu0 0.0
      %1440 = vmatpush1.msra.mxu0 0.0
      %1441 = vmatprep.subr.mxu0 0.0
      %1442 = vmatpush1.msra.mxu0 0.0
      %1443 = vmatprep.subr.mxu0 0.0
      %1444 = vmatpush1.msra.mxu0 0.0
      %1445 = vmatprep.subr.mxu0 0.0
      %1446 = vmatpush1.msra.mxu0 0.0
      %1447 = vmatprep.subr.mxu0 0.0
      %1448 = vmatpush1.msra.mxu0 0.0
      %1449 = vmatprep.subr.mxu0 0.0
      %1450 = vmatpush1.msra.mxu0 0.0
      %1451 = vmatprep.subr.mxu0 0.0
      %1452 = vmatpush1.msra.mxu0 0.0
      %1453 = vmatprep.subr.mxu0 0.0
      %1454 = vmatpush1.msra.mxu0 0.0
      %1455 = vmatprep.subr.mxu0 0.0
      %1456 = vmatpush1.msra.mxu0 0.0
      %1457 = vmatprep.subr.mxu0 0.0
      %1458 = vmatpush1.msra.mxu0 0.0
      %1459 = vmatprep.subr.mxu0 0.0
      %1460 = vmatpush1.msra.mxu0 0.0
      %1461 = vmatprep.subr.mxu0 0.0
      %1462 = vmatpush1.msra.mxu0 0.0
      %1463 = vmatprep.subr.mxu0 0.0
      %1464 = vmatpush1.msra.mxu0 0.0
      %1465 = vmatprep.subr.mxu0 0.0
      %1466 = vmatpush1.msra.mxu0 0.0
      %1467 = vmatprep.subr.mxu0 0.0
      %1468 = vmatpush1.msra.mxu0 0.0
      %1469 = vmatprep.subr.mxu0 0.0
      %1470 = vmatpush1.msra.mxu0 0.0
      %1471 = vmatprep.subr.mxu0 0.0
      %1472 = vmatpush1.msra.mxu0 0.0
      %1473 = vmatprep.subr.mxu0 0.0
      %1474 = vmatpush1.msra.mxu0 0.0
      %1475 = vmatprep.subr.mxu0 0.0
      %1476 = vmatpush1.msra.mxu0 0.0
      %1477 = vmatprep.mubr.f32.mxu0 0.0
      %1478 = vmatmul.mubr.f32.gmra.mrb[0].mxu0 %v1411
      %v1479 = vpop.f32.mrb[0].mxu0
      %v1480 = vadd.f32 0.0, %v1479
      %v1481 = vpop.f32.mrb[0].mxu0
      %1482 = vdwg.mxu0
      %v1483 = vadd.f32 %v1242, %v1480
      %v1484 = vld [vmem:[%s4] sm:$0x1]
      %v1486 = vlaneseq
      %v1487 = vshrl.u32 %v1486, 7
      %v1488 = vsub.s32 0, %v1487
      %v1489 = vrot.slane %v1484, %v1488
      %v1491 = vadd.f32 %v1483, %v1489
      %v1492 = vadd.f32 %v436, %v1491
      %v1493 = vsel %vm448, %v1492, 0.0
      %1494 = vadd.xlane.f32.xlu0 %v1493
      %v1495 = vpop.xlane.xlu0 %1494
      %v1496 = vrcp.pop 32.0
      %v1497 = vmul.f32 %v1495, %v1496
      %v1498 = vsub.f32 %v1492, %v1497
      %v1499 = vmul.f32 %v1498, %v1498
      %v1500 = vsel %vm448, %v1499, 0.0
      %1501 = vadd.xlane.f32.xlu0 %v1500
      %v1502 = vpop.xlane.xlu0 %1501
      %v1503 = vmul.f32 %v1502, %v1496
      %v1504 = vadd.f32 %v1503, 1e-05
      %v1505 = vrsqrt.pop %v1504
      %v1506 = vmul.f32 %v1498, %v1505
      %v1507 = vld [vmem:[%s5] sm:$0x1]
      %v1509 = vlaneseq
      %v1510 = vshrl.u32 %v1509, 7
      %v1511 = vsub.s32 0, %v1510
      %v1512 = vrot.slane %v1507, %v1511
      %v1514 = vmul.f32 %v1506, %v1512
      %v1515 = vld [vmem:[%s6] sm:$0x1]
      %v1517 = vlaneseq
      %v1518 = vshrl.u32 %v1517, 7
      %v1519 = vsub.s32 0, %v1518
      %v1520 = vrot.slane %v1515, %v1519
      %v1522 = vadd.f32 %v1514, %v1520
      %v1523 = vld [vmem:[%s7] sm:$0xff]
      %v1524 = vld [vmem:[%s7 + $0x8] sm:$0xff]
      %v1525 = vld [vmem:[%s7 + $0x10] sm:$0xff]
      %v1526 = vld [vmem:[%s7 + $0x18] sm:$0xff]
      %v1527 = vld [vmem:[%s8] sm:$0x1]
      %v1529 = vlaneseq
      %v1530 = vshrl.u32 %v1529, 7
      %v1531 = vsub.s32 0, %v1530
      %v1532 = vrot.slane %v1527, %v1531
      %v1535 = vsel %vm448, %v1522, 0
      %1537 = vmatprep.subr.mxu0 0.0
      %1538 = vmatpush1.msra.mxu0 %v1523
      %1539 = vmatprep.subr.mxu0 0.0
      %1540 = vmatpush1.msra.mxu0 %v1524
      %1541 = vmatprep.subr.mxu0 0.0
      %1542 = vmatpush1.msra.mxu0 %v1525
      %1543 = vmatprep.subr.mxu0 0.0
      %1544 = vmatpush1.msra.mxu0 %v1526
      %1545 = vmatprep.subr.mxu0 0.0
      %1546 = vmatpush1.msra.mxu0 0.0
      %1547 = vmatprep.subr.mxu0 0.0
      %1548 = vmatpush1.msra.mxu0 0.0
      %1549 = vmatprep.subr.mxu0 0.0
      %1550 = vmatpush1.msra.mxu0 0.0
      %1551 = vmatprep.subr.mxu0 0.0
      %1552 = vmatpush1.msra.mxu0 0.0
      %1553 = vmatprep.subr.mxu0 0.0
      %1554 = vmatpush1.msra.mxu0 0.0
      %1555 = vmatprep.subr.mxu0 0.0
      %1556 = vmatpush1.msra.mxu0 0.0
      %1557 = vmatprep.subr.mxu0 0.0
      %1558 = vmatpush1.msra.mxu0 0.0
      %1559 = vmatprep.subr.mxu0 0.0
      %1560 = vmatpush1.msra.mxu0 0.0
      %1561 = vmatprep.subr.mxu0 0.0
      %1562 = vmatpush1.msra.mxu0 0.0
      %1563 = vmatprep.subr.mxu0 0.0
      %1564 = vmatpush1.msra.mxu0 0.0
      %1565 = vmatprep.subr.mxu0 0.0
      %1566 = vmatpush1.msra.mxu0 0.0
      %1567 = vmatprep.subr.mxu0 0.0
      %1568 = vmatpush1.msra.mxu0 0.0
      %1569 = vmatprep.subr.mxu0 0.0
      %1570 = vmatpush1.msra.mxu0 0.0
      %1571 = vmatprep.subr.mxu0 0.0
      %1572 = vmatpush1.msra.mxu0 0.0
      %1573 = vmatprep.subr.mxu0 0.0
      %1574 = vmatpush1.msra.mxu0 0.0
      %1575 = vmatprep.subr.mxu0 0.0
      %1576 = vmatpush1.msra.mxu0 0.0
      %1577 = vmatprep.subr.mxu0 0.0
      %1578 = vmatpush1.msra.mxu0 0.0
      %1579 = vmatprep.subr.mxu0 0.0
      %1580 = vmatpush1.msra.mxu0 0.0
      %1581 = vmatprep.subr.mxu0 0.0
      %1582 = vmatpush1.msra.mxu0 0.0
      %1583 = vmatprep.subr.mxu0 0.0
      %1584 = vmatpush1.msra.mxu0 0.0
      %1585 = vmatprep.subr.mxu0 0.0
      %1586 = vmatpush1.msra.mxu0 0.0
      %1587 = vmatprep.subr.mxu0 0.0
      %1588 = vmatpush1.msra.mxu0 0.0
      %1589 = vmatprep.subr.mxu0 0.0
      %1590 = vmatpush1.msra.mxu0 0.0
      %1591 = vmatprep.subr.mxu0 0.0
      %1592 = vmatpush1.msra.mxu0 0.0
      %1593 = vmatprep.subr.mxu0 0.0
      %1594 = vmatpush1.msra.mxu0 0.0
      %1595 = vmatprep.subr.mxu0 0.0
      %1596 = vmatpush1.msra.mxu0 0.0
      %1597 = vmatprep.subr.mxu0 0.0
      %1598 = vmatpush1.msra.mxu0 0.0
      %1599 = vmatprep.subr.mxu0 0.0
      %1600 = vmatpush1.msra.mxu0 0.0
      %1601 = vmatprep.mubr.f32.mxu0 0.0
      %1602 = vmatmul.mubr.f32.gmra.mrb[0].mxu0 %v1535
      %v1603 = vpop.f32.mrb[0].mxu0
      %v1604 = vadd.f32 %v1532, %v1603
      %v1605 = vpop.f32.mrb[0].mxu0
      %1606 = vdwg.mxu0
      %v1607 = vmax.f32 %v1604, 0.0
      %v1608 = vld [vmem:[%s9] sm:$0xff]
      %v1609 = vld [vmem:[%s9 + $0x8] sm:$0xff]
      %v1610 = vld [vmem:[%s9 + $0x10] sm:$0xff]
      %v1611 = vld [vmem:[%s9 + $0x18] sm:$0xff]
      %v1612 = vld [vmem:[%s9 + $0x20] sm:$0xff]
      %v1613 = vld [vmem:[%s9 + $0x28] sm:$0xff]
      %v1614 = vld [vmem:[%s9 + $0x30] sm:$0xff]
      %v1615 = vld [vmem:[%s9 + $0x38] sm:$0xff]
      %v1616 = vld [vmem:[%s10] sm:$0x1]
      %v1618 = vlaneseq
      %v1619 = vshrl.u32 %v1618, 7
      %v1620 = vsub.s32 0, %v1619
      %v1621 = vrot.slane %v1616, %v1620
      %vm1623 = vcmask 523264
      %v1625 = vsel %vm1623, %v1607, 0
      %1627 = vmatprep.subr.mxu0 0.0
      %1628 = vmatpush1.msra.mxu0 %v1608
      %1629 = vmatprep.subr.mxu0 0.0
      %1630 = vmatpush1.msra.mxu0 %v1609
      %1631 = vmatprep.subr.mxu0 0.0
      %1632 = vmatpush1.msra.mxu0 %v1610
      %1633 = vmatprep.subr.mxu0 0.0
      %1634 = vmatpush1.msra.mxu0 %v1611
      %1635 = vmatprep.subr.mxu0 0.0
      %1636 = vmatpush1.msra.mxu0 %v1612
      %1637 = vmatprep.subr.mxu0 0.0
      %1638 = vmatpush1.msra.mxu0 %v1613
      %1639 = vmatprep.subr.mxu0 0.0
      %1640 = vmatpush1.msra.mxu0 %v1614
      %1641 = vmatprep.subr.mxu0 0.0
      %1642 = vmatpush1.msra.mxu0 %v1615
      %1643 = vmatprep.subr.mxu0 0.0
      %1644 = vmatpush1.msra.mxu0 0.0
      %1645 = vmatprep.subr.mxu0 0.0
      %1646 = vmatpush1.msra.mxu0 0.0
      %1647 = vmatprep.subr.mxu0 0.0
      %1648 = vmatpush1.msra.mxu0 0.0
      %1649 = vmatprep.subr.mxu0 0.0
      %1650 = vmatpush1.msra.mxu0 0.0
      %1651 = vmatprep.subr.mxu0 0.0
      %1652 = vmatpush1.msra.mxu0 0.0
      %1653 = vmatprep.subr.mxu0 0.0
      %1654 = vmatpush1.msra.mxu0 0.0
      %1655 = vmatprep.subr.mxu0 0.0
      %1656 = vmatpush1.msra.mxu0 0.0
      %1657 = vmatprep.subr.mxu0 0.0
      %1658 = vmatpush1.msra.mxu0 0.0
      %1659 = vmatprep.subr.mxu0 0.0
      %1660 = vmatpush1.msra.mxu0 0.0
      %1661 = vmatprep.subr.mxu0 0.0
      %1662 = vmatpush1.msra.mxu0 0.0
      %1663 = vmatprep.subr.mxu0 0.0
      %1664 = vmatpush1.msra.mxu0 0.0
      %1665 = vmatprep.subr.mxu0 0.0
      %1666 = vmatpush1.msra.mxu0 0.0
      %1667 = vmatprep.subr.mxu0 0.0
      %1668 = vmatpush1.msra.mxu0 0.0
      %1669 = vmatprep.subr.mxu0 0.0
      %1670 = vmatpush1.msra.mxu0 0.0
      %1671 = vmatprep.subr.mxu0 0.0
      %1672 = vmatpush1.msra.mxu0 0.0
      %1673 = vmatprep.subr.mxu0 0.0
      %1674 = vmatpush1.msra.mxu0 0.0
      %1675 = vmatprep.subr.mxu0 0.0
      %1676 = vmatpush1.msra.mxu0 0.0
      %1677 = vmatprep.subr.mxu0 0.0
      %1678 = vmatpush1.msra.mxu0 0.0
      %1679 = vmatprep.subr.mxu0 0.0
      %1680 = vmatpush1.msra.mxu0 0.0
      %1681 = vmatprep.subr.mxu0 0.0
      %1682 = vmatpush1.msra.mxu0 0.0
      %1683 = vmatprep.subr.mxu0 0.0
      %1684 = vmatpush1.msra.mxu0 0.0
      %1685 = vmatprep.subr.mxu0 0.0
      %1686 = vmatpush1.msra.mxu0 0.0
      %1687 = vmatprep.subr.mxu0 0.0
      %1688 = vmatpush1.msra.mxu0 0.0
      %1689 = vmatprep.subr.mxu0 0.0
      %1690 = vmatpush1.msra.mxu0 0.0
      %1691 = vmatprep.mubr.f32.mxu0 0.0
      %1692 = vmatmul.mubr.f32.gmra.mrb[0].mxu0 %v1625
      %v1693 = vpop.f32.mrb[0].mxu0
      %v1694 = vadd.f32 %v1621, %v1693
      %v1695 = vpop.f32.mrb[0].mxu0
      %1696 = vdwg.mxu0
      %v1697 = vadd.f32 %v1522, %v1694
      %v1698 = vsel %vm448, %v1697, 0.0
      %1699 = vadd.xlane.f32.xlu0 %v1698
      %v1700 = vpop.xlane.xlu0 %1699
      %v1701 = vmul.f32 %v1700, %v1496
      %v1702 = vsub.f32 %v1697, %v1701
      %v1703 = vmul.f32 %v1702, %v1702
      %v1704 = vsel %vm448, %v1703, 0.0
      %1705 = vadd.xlane.f32.xlu0 %v1704
      %v1706 = vpop.xlane.xlu0 %1705
      %v1707 = vmul.f32 %v1706, %v1496
      %v1708 = vadd.f32 %v1707, 1e-05
      %v1709 = vrsqrt.pop %v1708
      %v1710 = vmul.f32 %v1702, %v1709
      %v1711 = vld [vmem:[%s11] sm:$0x1]
      %v1713 = vlaneseq
      %v1714 = vshrl.u32 %v1713, 7
      %v1715 = vsub.s32 0, %v1714
      %v1716 = vrot.slane %v1711, %v1715
      %v1718 = vmul.f32 %v1710, %v1716
      %v1719 = vld [vmem:[%s12] sm:$0x1]
      %v1721 = vlaneseq
      %v1722 = vshrl.u32 %v1721, 7
      %v1723 = vsub.s32 0, %v1722
      %v1724 = vrot.slane %v1719, %v1723
      %v1726 = vadd.f32 %v1718, %v1724
      %1727 = vst.msk [vmem:[%s435] sm:$0xff] %vm448, %v1726
      %p1728 = scmp.lt.s32.totalorder %s24, 1
      %s1729 = scalar_select %p1728, %s24, 1
      %s1730 = smul.addr %s1729, 8
      %s1731 = scalar_lea.vmem %s13, %s1730
      // Predicated region
      $region73: #{_lambda_.2} parent=71 // pred_check
        %p1732 = pneg %p320
      $region74: #{_lambda_.2} parent=71 // pred_check_branch
        %1734 = sbr.rel (%p1732) target = $region76
      $region75: #{_lambda_.2} parent=71 // pred_region
        _
      $region76: #{_lambda_.2} parent=71 // pred_fallthru
        _
    $region72: #{_lambda_.2} parent=5 // pred_fallthru
      _
    %p1735 = scmp.le.s32.totalorder 2, %s19
    // Predicated region
    $region77: #{_lambda_.2} parent=5 // pred_check
      %p1736 = pneg %p1735
    $region78: #{_lambda_.2} parent=5 // pred_check_branch
      %1738 = sbr.rel (%p1736) target = $region80
    $region79: #{_lambda_.2} parent=5 // pred_region
      %s1739 = ssub.s32 %s19, 2
      // Predicated region
      $region81: #{_lambda_.2} parent=79 // pred_check
        %p1740 = pneg %p326
      $region82: #{_lambda_.2} parent=79 // pred_check_branch
        %1742 = sbr.rel (%p1740) target = $region84
      $region83: #{_lambda_.2} parent=79 // pred_region
        %p1743 = scmp.lt.s32.totalorder %s25, 1
        %s1744 = scalar_select %p1743, %s25, 1
        %s1745 = smul.addr %s1744, 8
        %s1746 = scalar_lea.vmem %s13, %s1745
      $region84: #{_lambda_.2} parent=79 // pred_fallthru
        _
    $region80: #{_lambda_.2} parent=5 // pred_fallthru
      _
  $region6: #{_lambda_.2} parent=0 // loop_footer
    %s23 = sadd.s32 1, %s19
  $region7: #{_lambda_.2} parent=0 // loop_footer_branch
    %18 = sbr.rel target = $region3
  $region8: #{_lambda_.2} parent=0 // loop_exit
    _

</llo_original>
